<compile_context>
chip_gen: v7x
topology: tpu7x:2x2x1
jax: 0.10.0
libtpu: 0.0.40
codegen_flags: <defaults>
</compile_context>

<pallas_src>
import functools

import jax
import jax.numpy as jnp
from jax import lax
from jax.experimental import pallas as pl
from jax.experimental.pallas import tpu as pltpu

BN_EPS = 1e-5


def _round_up(x, m):
    return (x + m - 1) // m * m


# ------------------------------ fused kernel ---------------------------------

def _up_fused_kernel(x1_ref, x2_ref, w1_ref, w2_ref,
                     s1_ref, b1_ref, s2_ref, b2_ref,
                     o_ref,
                     cat_ref, ypad_ref,
                     *, py0, px0):
    """One image per grid step: upsample + F.pad + concat (one padded VMEM
    scratch) -> conv1+BN+ReLU -> conv2+BN+ReLU, all in VMEM."""
    _, H1, W1, C1 = x1_ref.shape
    _, H2, W2, C2 = x2_ref.shape
    Co = o_ref.shape[-1]
    Hpp, Wp, Ccat = cat_ref.shape            # Hpp = H2 + 3, Wp = round_up(W2 + 2, 8)
    L = H2 * Wp                              # flat conv-output rows (incl. wrap cols)
    cd = cat_ref.dtype

    # ---- zero only what is read as conv padding (interiors are overwritten) --
    cat_ref[0:1] = jnp.zeros((1, Wp, Ccat), cd)                          # top row
    cat_ref[1 + H2:2 + H2] = jnp.zeros((1, Wp, Ccat), cd)                # bottom row
    cat_ref[1:1 + H2, 0:1, :] = jnp.zeros((H2, 1, Ccat), cd)             # left col
    cat_ref[1:1 + H2, W2 + 1:W2 + 2, :] = jnp.zeros((H2, 1, Ccat), cd)   # right col

    # F.pad strips of the upsampled-x1 channels (static sizes, usually empty).
    bot = H2 - 2 * H1 - py0
    rgt = W2 - 2 * W1 - px0
    if py0 > 0:
        cat_ref[1:1 + py0, 1:1 + W2, C2:] = jnp.zeros((py0, W2, C1), cd)
    if bot > 0:
        cat_ref[1 + py0 + 2 * H1:1 + H2, 1:1 + W2, C2:] = jnp.zeros((bot, W2, C1), cd)
    if px0 > 0:
        cat_ref[1 + py0:1 + py0 + 2 * H1, 1:1 + px0, C2:] = jnp.zeros((2 * H1, px0, C1), cd)
    if rgt > 0:
        cat_ref[1 + py0:1 + py0 + 2 * H1, 1 + px0 + 2 * W1:1 + W2, C2:] = (
            jnp.zeros((2 * H1, rgt, C1), cd))

    # ypad: zero padded row 0 (+ row 1 col 0) and padded row H2+1; every other
    # position conv2 reads is produced by the masked flat store of conv1 below.
    ypad_ref[0:Wp + 1, :] = jnp.zeros((Wp + 1, Co), cd)
    ypad_ref[(H2 + 1) * Wp:(H2 + 2) * Wp, :] = jnp.zeros((Wp, Co), cd)

    # ---- skip connection straight into the concat scratch (channels [:C2]) ---
    cat_ref[1:1 + H2, 1:1 + W2, :C2] = x2_ref[0]

    # ---- nearest-2x upsample of x1: in-register repeat + ONE contiguous store -
    x1v = x1_ref[0]                                                   # (H1, W1, C1)
    rows = jnp.broadcast_to(x1v[:, None, :, :],
                            (H1, 2, W1, C1)).reshape(2 * H1, W1, C1)
    up = jnp.broadcast_to(rows[:, :, None, :],
                          (2 * H1, W1, 2, C1)).reshape(2 * H1, 2 * W1, C1)
    cat_ref[1 + py0:1 + py0 + 2 * H1, 1 + px0:1 + px0 + 2 * W1, C2:] = up

    # valid-column mask over the flat conv output (wrap / alignment cols -> 0)
    col = lax.broadcasted_iota(jnp.int32, (H2, Wp, 1), 1).reshape(L, 1)
    valid = col < W2

    def conv3x3(load, w_ref, s_ref, b_ref):
        """3x3 'same' conv as 3 MXU matmuls (K = 3*Cin): per-dy slabs built from
        flat row-offset windows, fused with the folded conv-bias+BN affine,
        ReLU and the valid-column mask (f32 epilogue)."""
        acc = jnp.zeros((L, Co), jnp.float32)
        for dy in range(3):
            base = dy * Wp
            slab = jnp.concatenate(
                [load(base), load(base + 1), load(base + 2)], axis=-1)
            acc = acc + jnp.dot(slab, w_ref[dy],
                                preferred_element_type=jnp.float32)
        y = jnp.maximum(acc * s_ref[...] + b_ref[...], 0.0)
        return jnp.where(valid, y, 0.0)

    # ---- conv1 (+BN+ReLU) on the concatenated padded image -------------------
    cat_flat = cat_ref[...].reshape(Hpp * Wp, Ccat)        # layout-free (Wp % 8 == 0)
    y1 = conv3x3(lambda off: cat_flat[off:off + L, :], w1_ref, s1_ref, b1_ref)

    # Shifted flat store: conv output (r, c) lands exactly at padded (r+1, c+1);
    # the masked wrap columns land on padded cols 0 / >= W2+1 and write the
    # padding zeros conv2 needs -- no reshape/slice relayout between the convs.
    ypad_ref[Wp + 1:Wp + 1 + L, :] = y1.astype(cd)

    # ---- conv2 (+BN+ReLU) straight off the flat padded scratch ---------------
    y2 = conv3x3(lambda off: ypad_ref[off:off + L, :], w2_ref, s2_ref, b2_ref)

    # TODO(synk): for Co < 128 a fully lane-dense (H2, W2*Co) output store would
    # further reduce masked vst traffic; kept flat (L, Co) here to avoid an
    # in-kernel lane relayout (wrap cols are dropped in the wrapper).
    o_ref[0] = y2.astype(o_ref.dtype)


# ------------------------------ module forward -------------------------------

def up_forward(params, x1, x2, *, compute_dtype=jnp.float32):
    """PyTorch Up.forward. NCHW in / NCHW out.
    TODO(synk): BatchNorm is inference-mode only (running stats folded into a
    per-channel affine); training-mode batch statistics are not computed."""
    x1 = jnp.transpose(x1, (0, 2, 3, 1))     # -> NHWC
    x2 = jnp.transpose(x2, (0, 2, 3, 1))
    B, H1, W1, C1 = x1.shape
    _, H2, W2, C2 = x2.shape
    Co = params['conv1_w'].shape[0]
    Ccat = C1 + C2

    dY, dX = H2 - 2 * H1, W2 - 2 * W1
    if dY < 0 or dX < 0:
        # TODO(synk): F.pad with negative amounts (cropping) is not implemented.
        raise NotImplementedError("x2 spatial size must be >= 2x x1 spatial size")
    py0, px0 = dY // 2, dX // 2

    # Conv weights OIHW -> HWIO, then fold the 3 dx taps into K: (3, 3*Cin, Co).
    w1 = jnp.transpose(params['conv1_w'], (2, 3, 1, 0)).reshape(3, 3 * Ccat, Co)
    w2 = jnp.transpose(params['conv2_w'], (2, 3, 1, 0)).reshape(3, 3 * Co, Co)

    # Fold conv bias + BatchNorm (eval mode) into one per-channel scale/bias.
    s1 = params['bn1_gamma'] / jnp.sqrt(params['bn1_var'] + BN_EPS)
    b1 = (params['conv1_b'] - params['bn1_mean']) * s1 + params['bn1_beta']
    s2 = params['bn2_gamma'] / jnp.sqrt(params['bn2_var'] + BN_EPS)
    b2 = (params['conv2_b'] - params['bn2_mean']) * s2 + params['bn2_beta']

    cd = compute_dtype
    Wp = _round_up(W2 + 2, 8)      # 8-aligned padded width -> layout-free flat reshape
    Hpp = H2 + 3                   # 1px conv border + safety row for the flat windows
    L = H2 * Wp

    # Per-generation VMEM budget (scratch + double-buffered blocks + transients).
    isz = jnp.dtype(cd).itemsize
    scratch_bytes = Hpp * Wp * (Ccat + Co) * isz
    block_bytes = (H1 * W1 * C1 + H2 * W2 * C2) * isz + L * Co * 4
    weight_bytes = 3 * (3 * Ccat * Co + 3 * Co * Co) * isz
    transient_bytes = (Hpp * Wp * Ccat + L * (3 * max(Ccat, Co) + 2 * Co)) * 4
    est = scratch_bytes + 2 * (block_bytes + weight_bytes) + transient_bytes
    try:
        vmem_cap = int(pltpu.get_tpu_info().vmem_capacity_bytes)
    except Exception:
        vmem_cap = 64 * 1024 * 1024
    vmem_limit = int(min(max(2 * est, 16 * 1024 * 1024), int(0.75 * vmem_cap)))

    kernel = functools.partial(_up_fused_kernel, py0=py0, px0=px0)
    # TODO(synk): at production spatial sizes add an H row-strip grid axis (with a
    # 1-row halo) so the padded scratches + f32 accumulator fit v7x's 64 MiB VMEM,
    # and mark both batch and strip axes "parallel".
    # TODO(synk): pad Cin/Co to 128/256 multiples for production channel counts.
    out = pl.pallas_call(
        kernel,
        out_shape=jax.ShapeDtypeStruct((B, L, Co), jnp.float32),
        grid=(B,),
        in_specs=[
            pl.BlockSpec((1, H1, W1, C1), lambda b: (b, 0, 0, 0)),
            pl.BlockSpec((1, H2, W2, C2), lambda b: (b, 0, 0, 0)),
            pl.BlockSpec((3, 3 * Ccat, Co), lambda b: (0, 0, 0)),
            pl.BlockSpec((3, 3 * Co, Co), lambda b: (0, 0, 0)),
            pl.BlockSpec((1, Co), lambda b: (0, 0)),
            pl.BlockSpec((1, Co), lambda b: (0, 0)),
            pl.BlockSpec((1, Co), lambda b: (0, 0)),
            pl.BlockSpec((1, Co), lambda b: (0, 0)),
        ],
        out_specs=pl.BlockSpec((1, L, Co), lambda b: (b, 0, 0)),
        scratch_shapes=[
            pltpu.VMEM((Hpp, Wp, Ccat), cd),     # padded [x2 | up(x1)] concat image
            pltpu.VMEM((Hpp * Wp, Co), cd),      # padded conv1 output (flat)
        ],
        compiler_params=pltpu.CompilerParams(
            dimension_semantics=("parallel",),   # shards batch on v7x's 2 TCs
            vmem_limit_bytes=vmem_limit,
        ),
    )(x1.astype(cd), x2.astype(cd), w1.astype(cd), w2.astype(cd),
      s1[None, :], b1[None, :], s2[None, :], b2[None, :])

    # Drop the alignment / wrap columns; fuses with the NHWC->NCHW transpose.
    out = out.reshape(B, H2, Wp, Co)[:, :, :W2, :]
    return jnp.transpose(out, (0, 3, 1, 2))                 # back to NCHW


# ------------------------------ pure-JAX reference ---------------------------

def reference_forward(params, x1, x2):
    """Pure-JAX/XLA reference of Up.forward (NCHW, full f32 precision)."""
    x1u = jnp.repeat(jnp.repeat(x1, 2, axis=2), 2, axis=3)        # nearest 2x
    dY = x2.shape[2] - x1u.shape[2]
    dX = x2.shape[3] - x1u.shape[3]
    x1u = jnp.pad(x1u, ((0, 0), (0, 0),
                        (dY // 2, dY - dY // 2), (dX // 2, dX - dX // 2)))
    x = jnp.concatenate([x2, x1u], axis=1)
    for i in (1, 2):
        x = lax.conv_general_dilated(
            x, params[f'conv{i}_w'], (1, 1), 'SAME',
            dimension_numbers=('NCHW', 'OIHW', 'NCHW'),
            precision=lax.Precision.HIGHEST)
        x = x + params[f'conv{i}_b'][None, :, None, None]
        x = (x - params[f'bn{i}_mean'][None, :, None, None]) / jnp.sqrt(
            params[f'bn{i}_var'][None, :, None, None] + BN_EPS)
        x = x * params[f'bn{i}_gamma'][None, :, None, None] + \
            params[f'bn{i}_beta'][None, :, None, None]
        x = jnp.maximum(x, 0.0)
    return x


# ------------------------------ synthetic params ------------------------------

def init_params(key, c1, c2, out_ch):
    """Deterministic synthetic params for Up(in_ch=c1+c2, out_ch)."""
    in_ch = c1 + c2
    ks = jax.random.split(key, 12)

    def n(k, shape):
        return 0.1 * jax.random.normal(k, shape, jnp.float32)

    return {
        'conv1_w': n(ks[0], (out_ch, in_ch, 3, 3)),
        'conv1_b': n(ks[1], (out_ch,)),
        'bn1_gamma': 1.0 + n(ks[2], (out_ch,)),
        'bn1_beta': n(ks[3], (out_ch,)),
        'bn1_mean': n(ks[4], (out_ch,)),
        'bn1_var': 1.0 + jnp.abs(n(ks[5], (out_ch,))),
        'conv2_w': n(ks[6], (out_ch, out_ch, 3, 3)),
        'conv2_b': n(ks[7], (out_ch,)),
        'bn2_gamma': 1.0 + n(ks[8], (out_ch,)),
        'bn2_beta': n(ks[9], (out_ch,)),
        'bn2_mean': n(ks[10], (out_ch,)),
        'bn2_var': 1.0 + jnp.abs(n(ks[11], (out_ch,))),
    }


# --------------------------------- main ---------------------------------------

if __name__ == "__main__":
    key = jax.random.PRNGKey(0)
    kp, k1, k2, kq, k3, k4 = jax.random.split(key, 6)
    B = 2

    # Test 1: standard UNet shapes (diff = 0), f32 path, tight tolerance.
    C1, C2, Co = 8, 8, 8
    params = init_params(kp, C1, C2, Co)
    x1 = jax.random.normal(k1, (B, C1, 8, 8), jnp.float32)      # deep feature
    x2 = jax.random.normal(k2, (B, C2, 16, 16), jnp.float32)    # skip connection
    out = jax.block_until_ready(up_forward(params, x1, x2))
    ref = jax.block_until_ready(reference_forward(params, x1, x2))
    assert out.shape == (B, Co, 16, 16), out.shape
    err = float(jnp.max(jnp.abs(out - ref)))
    assert err < 2e-4, f"f32 max abs err {err}"

    # Test 2: odd upsampled size -> nonzero F.pad offsets, f32 path.
    C1b, C2b, Cob = 4, 8, 8
    params_b = init_params(kq, C1b, C2b, Cob)
    x1b = jax.random.normal(k3, (B, C1b, 7, 7), jnp.float32)    # 7 -> 14, pad to 16
    x2b = jax.random.normal(k4, (B, C2b, 16, 16), jnp.float32)
    outb = jax.block_until_ready(up_forward(params_b, x1b, x2b))
    refb = jax.block_until_ready(reference_forward(params_b, x1b, x2b))
    assert outb.shape == (B, Cob, 16, 16), outb.shape
    errb = float(jnp.max(jnp.abs(outb - refb)))
    assert errb < 2e-4, f"f32 (padded) max abs err {errb}"

    # Test 3: bfloat16 compute path (MXU-native on v5e/v6e/v7x, f32 accumulation).
    out_bf = jax.block_until_ready(
        up_forward(params, x1, x2, compute_dtype=jnp.bfloat16))
    err_bf = float(jnp.max(jnp.abs(out_bf - ref)))
    assert err_bf < 2e-1, f"bf16 max abs err {err_bf}"

    print("KERNEL_OK")
</pallas_src>

<mosaic_0001>
module attributes {stable_mosaic.version = 11 : i64} {
  func.func @_up_fused_kernel(%arg0: i32, %arg1: memref<1x8x8x8xf32, #tpu.memory_space<vmem>>, %arg2: memref<1x16x16x8xf32, #tpu.memory_space<vmem>>, %arg3: memref<3x48x8xf32, #tpu.memory_space<vmem>>, %arg4: memref<3x24x8xf32, #tpu.memory_space<vmem>>, %arg5: memref<1x8xf32, #tpu.memory_space<vmem>>, %arg6: memref<1x8xf32, #tpu.memory_space<vmem>>, %arg7: memref<1x8xf32, #tpu.memory_space<vmem>>, %arg8: memref<1x8xf32, #tpu.memory_space<vmem>>, %arg9: memref<1x384x8xf32, #tpu.memory_space<vmem>>, %arg10: memref<19x24x16xf32, #tpu.memory_space<vmem>>, %arg11: memref<456x8xf32, #tpu.memory_space<vmem>>) attributes {dimension_semantics = [#tpu.dimension_semantics<parallel>], iteration_bounds = array<i64: 2>, scalar_prefetch = 0 : i64, scratch_operands = 2 : i64, tpu.core_type = #tpu.core_type<tc>, window_params = [{transform_indices = @transform_0, window_bounds = array<i64: 1, 8, 8, 8>}, {transform_indices = @transform_1, window_bounds = array<i64: 1, 16, 16, 8>}, {pipeline_mode = #tpu.pipeline_mode<synchronous>, transform_indices = @transform_2, window_bounds = array<i64: 3, 48, 8>}, {pipeline_mode = #tpu.pipeline_mode<synchronous>, transform_indices = @transform_3, window_bounds = array<i64: 3, 24, 8>}, {pipeline_mode = #tpu.pipeline_mode<synchronous>, transform_indices = @transform_4, window_bounds = array<i64: 1, 8>}, {pipeline_mode = #tpu.pipeline_mode<synchronous>, transform_indices = @transform_5, window_bounds = array<i64: 1, 8>}, {pipeline_mode = #tpu.pipeline_mode<synchronous>, transform_indices = @transform_6, window_bounds = array<i64: 1, 8>}, {pipeline_mode = #tpu.pipeline_mode<synchronous>, transform_indices = @transform_7, window_bounds = array<i64: 1, 8>}, {transform_indices = @transform_8, window_bounds = array<i64: 1, 384, 8>}]} {
    %cst = arith.constant 0.000000e+00 : f32
    %0 = vector.broadcast %cst : f32 to vector<1x24x16xf32>
    %c0 = arith.constant 0 : index
    %c0_0 = arith.constant 0 : index
    %c0_1 = arith.constant 0 : index
    %1 = vector.load %arg10[%c0, %c0_0, %c0_1] : memref<19x24x16xf32, #tpu.memory_space<vmem>>, vector<1x24x16xf32>
    tpu.vector_store %arg10[%c0, %c0_0, %c0_1], %0 {strides = array<i32>} : memref<19x24x16xf32, #tpu.memory_space<vmem>>, vector<1x24x16xf32>,
    %cst_2 = arith.constant 0.000000e+00 : f32
    %2 = vector.broadcast %cst_2 : f32 to vector<1x24x16xf32>
    %c17 = arith.constant 17 : index
    %c0_3 = arith.constant 0 : index
    %c0_4 = arith.constant 0 : index
    %3 = vector.load %arg10[%c17, %c0_3, %c0_4] : memref<19x24x16xf32, #tpu.memory_space<vmem>>, vector<1x24x16xf32>
    tpu.vector_store %arg10[%c17, %c0_3, %c0_4], %2 {strides = array<i32>} : memref<19x24x16xf32, #tpu.memory_space<vmem>>, vector<1x24x16xf32>,
    %cst_5 = arith.constant 0.000000e+00 : f32
    %4 = vector.broadcast %cst_5 : f32 to vector<16x1x16xf32>
    %c1 = arith.constant 1 : index
    %c0_6 = arith.constant 0 : index
    %c0_7 = arith.constant 0 : index
    %5 = vector.load %arg10[%c1, %c0_6, %c0_7] : memref<19x24x16xf32, #tpu.memory_space<vmem>>, vector<16x1x16xf32>
    tpu.vector_store %arg10[%c1, %c0_6, %c0_7], %4 {strides = array<i32>} : memref<19x24x16xf32, #tpu.memory_space<vmem>>, vector<16x1x16xf32>,
    %cst_8 = arith.constant 0.000000e+00 : f32
    %6 = vector.broadcast %cst_8 : f32 to vector<16x1x16xf32>
    %c1_9 = arith.constant 1 : index
    %c17_10 = arith.constant 17 : index
    %c0_11 = arith.constant 0 : index
    %7 = vector.load %arg10[%c1_9, %c17_10, %c0_11] : memref<19x24x16xf32, #tpu.memory_space<vmem>>, vector<16x1x16xf32>
    tpu.vector_store %arg10[%c1_9, %c17_10, %c0_11], %6 {strides = array<i32>} : memref<19x24x16xf32, #tpu.memory_space<vmem>>, vector<16x1x16xf32>,
    %cst_12 = arith.constant 0.000000e+00 : f32
    %8 = vector.broadcast %cst_12 : f32 to vector<25x8xf32>
    %c0_13 = arith.constant 0 : index
    %c0_14 = arith.constant 0 : index
    %9 = vector.load %arg11[%c0_13, %c0_14] : memref<456x8xf32, #tpu.memory_space<vmem>>, vector<25x8xf32>
    tpu.vector_store %arg11[%c0_13, %c0_14], %8 {strides = array<i32>} : memref<456x8xf32, #tpu.memory_space<vmem>>, vector<25x8xf32>,
    %cst_15 = arith.constant 0.000000e+00 : f32
    %10 = vector.broadcast %cst_15 : f32 to vector<24x8xf32>
    %c408 = arith.constant 408 : index
    %c0_16 = arith.constant 0 : index
    %11 = vector.load %arg11[%c408, %c0_16] : memref<456x8xf32, #tpu.memory_space<vmem>>, vector<24x8xf32>
    tpu.vector_store %arg11[%c408, %c0_16], %10 {strides = array<i32>} : memref<456x8xf32, #tpu.memory_space<vmem>>, vector<24x8xf32>,
    %c0_17 = arith.constant 0 : index
    %c0_18 = arith.constant 0 : index
    %c0_19 = arith.constant 0 : index
    %c0_20 = arith.constant 0 : index
    %12 = vector.load %arg2[%c0_17, %c0_18, %c0_19, %c0_20] : memref<1x16x16x8xf32, #tpu.memory_space<vmem>>, vector<1x16x16x8xf32>
    %13 = vector.shape_cast %12 : vector<1x16x16x8xf32> to vector<16x16x8xf32>
    %c1_21 = arith.constant 1 : index
    %c1_22 = arith.constant 1 : index
    %c0_23 = arith.constant 0 : index
    %14 = vector.load %arg10[%c1_21, %c1_22, %c0_23] : memref<19x24x16xf32, #tpu.memory_space<vmem>>, vector<16x16x8xf32>
    tpu.vector_store %arg10[%c1_21, %c1_22, %c0_23], %13 {strides = array<i32>} : memref<19x24x16xf32, #tpu.memory_space<vmem>>, vector<16x16x8xf32>,
    %c0_24 = arith.constant 0 : index
    %c0_25 = arith.constant 0 : index
    %c0_26 = arith.constant 0 : index
    %c0_27 = arith.constant 0 : index
    %15 = vector.load %arg1[%c0_24, %c0_25, %c0_26, %c0_27] : memref<1x8x8x8xf32, #tpu.memory_space<vmem>>, vector<1x8x8x8xf32>
    %16 = vector.shape_cast %15 : vector<1x8x8x8xf32> to vector<8x8x8xf32>
    %17 = vector.shape_cast %16 : vector<8x8x8xf32> to vector<8x1x8x8xf32>
    %18 = vector.shape_cast %17 : vector<8x1x8x8xf32> to vector<8x1x8x8xf32>
    %19 = vector.broadcast %18 : vector<8x1x8x8xf32> to vector<8x2x8x8xf32>
    %20 = vector.shape_cast %19 : vector<8x2x8x8xf32> to vector<16x8x8xf32>
    %21 = vector.shape_cast %20 : vector<16x8x8xf32> to vector<16x8x1x8xf32>
    %22 = vector.shape_cast %21 : vector<16x8x1x8xf32> to vector<16x8x1x8xf32>
    %23 = vector.broadcast %22 : vector<16x8x1x8xf32> to vector<16x8x2x8xf32>
    %24 = vector.shape_cast %23 : vector<16x8x2x8xf32> to vector<16x16x8xf32>
    %c1_28 = arith.constant 1 : index
    %c1_29 = arith.constant 1 : index
    %c8 = arith.constant 8 : index
    %25 = vector.load %arg10[%c1_28, %c1_29, %c8] : memref<19x24x16xf32, #tpu.memory_space<vmem>>, vector<16x16x8xf32>
    tpu.vector_store %arg10[%c1_28, %c1_29, %c8], %24 {strides = array<i32>} : memref<19x24x16xf32, #tpu.memory_space<vmem>>, vector<16x16x8xf32>,
    %26 = tpu.iota {dimensions = array<i32: 1>} : vector<16x24x1xi32>
    %27 = vector.shape_cast %26 : vector<16x24x1xi32> to vector<384x1xi32>
    %c16_i32 = arith.constant 16 : i32
    %28 = vector.broadcast %c16_i32 : i32 to vector<384x1xi32>
    %29 = arith.cmpi slt, %27, %28 : vector<384x1xi32>
    %c0_30 = arith.constant 0 : index
    %c0_31 = arith.constant 0 : index
    %c0_32 = arith.constant 0 : index
    %30 = vector.load %arg10[%c0_30, %c0_31, %c0_32] : memref<19x24x16xf32, #tpu.memory_space<vmem>>, vector<19x24x16xf32>
    %31 = vector.shape_cast %30 : vector<19x24x16xf32> to vector<456x16xf32>
    %cst_33 = arith.constant 0.000000e+00 : f32
    %32 = vector.broadcast %cst_33 : f32 to vector<384x8xf32>
    %33 = vector.extract_strided_slice %31 {offsets = [0, 0], sizes = [384, 16], strides = [1, 1]} : vector<456x16xf32> to vector<384x16xf32>
    %34 = vector.extract_strided_slice %31 {offsets = [1, 0], sizes = [384, 16], strides = [1, 1]} : vector<456x16xf32> to vector<384x16xf32>
    %35 = vector.extract_strided_slice %31 {offsets = [2, 0], sizes = [384, 16], strides = [1, 1]} : vector<456x16xf32> to vector<384x16xf32>
    %36 = tpu.concatenate %33, %34, %35 in 1 : vector<384x16xf32>, vector<384x16xf32>, vector<384x16xf32> -> vector<384x48xf32>
    %c0_34 = arith.constant 0 : index
    %c0_35 = arith.constant 0 : index
    %c0_36 = arith.constant 0 : index
    %37 = vector.load %arg3[%c0_34, %c0_35, %c0_36] : memref<3x48x8xf32, #tpu.memory_space<vmem>>, vector<1x48x8xf32>
    %38 = vector.shape_cast %37 : vector<1x48x8xf32> to vector<48x8xf32>
    %cst_37 = arith.constant dense<0.000000e+00> : vector<384x8xf32>
    %39 = tpu.matmul %36, %38, %cst_37 {dimension_numbers = #tpu.dot_dimension_numbers<[1], [0], [0], [1], [0, 0, 1, 1], [], []>} : vector<384x48xf32>, vector<48x8xf32>, vector<384x8xf32> -> vector<384x8xf32>
    %40 = arith.addf %32, %39 : vector<384x8xf32>
    %41 = vector.extract_strided_slice %31 {offsets = [24, 0], sizes = [384, 16], strides = [1, 1]} : vector<456x16xf32> to vector<384x16xf32>
    %42 = vector.extract_strided_slice %31 {offsets = [25, 0], sizes = [384, 16], strides = [1, 1]} : vector<456x16xf32> to vector<384x16xf32>
    %43 = vector.extract_strided_slice %31 {offsets = [26, 0], sizes = [384, 16], strides = [1, 1]} : vector<456x16xf32> to vector<384x16xf32>
    %44 = tpu.concatenate %41, %42, %43 in 1 : vector<384x16xf32>, vector<384x16xf32>, vector<384x16xf32> -> vector<384x48xf32>
    %c1_38 = arith.constant 1 : index
    %c0_39 = arith.constant 0 : index
    %c0_40 = arith.constant 0 : index
    %45 = vector.load %arg3[%c1_38, %c0_39, %c0_40] : memref<3x48x8xf32, #tpu.memory_space<vmem>>, vector<1x48x8xf32>
    %46 = vector.shape_cast %45 : vector<1x48x8xf32> to vector<48x8xf32>
    %cst_41 = arith.constant dense<0.000000e+00> : vector<384x8xf32>
    %47 = tpu.matmul %44, %46, %cst_41 {dimension_numbers = #tpu.dot_dimension_numbers<[1], [0], [0], [1], [0, 0, 1, 1], [], []>} : vector<384x48xf32>, vector<48x8xf32>, vector<384x8xf32> -> vector<384x8xf32>
    %48 = arith.addf %40, %47 : vector<384x8xf32>
    %49 = vector.extract_strided_slice %31 {offsets = [48, 0], sizes = [384, 16], strides = [1, 1]} : vector<456x16xf32> to vector<384x16xf32>
    %50 = vector.extract_strided_slice %31 {offsets = [49, 0], sizes = [384, 16], strides = [1, 1]} : vector<456x16xf32> to vector<384x16xf32>
    %51 = vector.extract_strided_slice %31 {offsets = [50, 0], sizes = [384, 16], strides = [1, 1]} : vector<456x16xf32> to vector<384x16xf32>
    %52 = tpu.concatenate %49, %50, %51 in 1 : vector<384x16xf32>, vector<384x16xf32>, vector<384x16xf32> -> vector<384x48xf32>
    %c2 = arith.constant 2 : index
    %c0_42 = arith.constant 0 : index
    %c0_43 = arith.constant 0 : index
    %53 = vector.load %arg3[%c2, %c0_42, %c0_43] : memref<3x48x8xf32, #tpu.memory_space<vmem>>, vector<1x48x8xf32>
    %54 = vector.shape_cast %53 : vector<1x48x8xf32> to vector<48x8xf32>
    %cst_44 = arith.constant dense<0.000000e+00> : vector<384x8xf32>
    %55 = tpu.matmul %52, %54, %cst_44 {dimension_numbers = #tpu.dot_dimension_numbers<[1], [0], [0], [1], [0, 0, 1, 1], [], []>} : vector<384x48xf32>, vector<48x8xf32>, vector<384x8xf32> -> vector<384x8xf32>
    %56 = arith.addf %48, %55 : vector<384x8xf32>
    %c0_45 = arith.constant 0 : index
    %c0_46 = arith.constant 0 : index
    %57 = vector.load %arg5[%c0_45, %c0_46] : memref<1x8xf32, #tpu.memory_space<vmem>>, vector<1x8xf32>
    %58 = vector.broadcast %57 : vector<1x8xf32> to vector<384x8xf32>
    %59 = arith.mulf %56, %58 : vector<384x8xf32>
    %c0_47 = arith.constant 0 : index
    %c0_48 = arith.constant 0 : index
    %60 = vector.load %arg6[%c0_47, %c0_48] : memref<1x8xf32, #tpu.memory_space<vmem>>, vector<1x8xf32>
    %61 = vector.broadcast %60 : vector<1x8xf32> to vector<384x8xf32>
    %62 = arith.addf %59, %61 : vector<384x8xf32>
    %cst_49 = arith.constant 0.000000e+00 : f32
    %63 = vector.broadcast %cst_49 : f32 to vector<384x8xf32>
    %64 = arith.maximumf %62, %63 : vector<384x8xf32>
    %cst_50 = arith.constant 0.000000e+00 : f32
    %65 = vector.shape_cast %29 : vector<384x1xi1> to vector<384x1xi1>
    %66 = vector.broadcast %65 : vector<384x1xi1> to vector<384x8xi1>
    %67 = vector.broadcast %cst_50 : f32 to vector<384x8xf32>
    %68 = arith.select %66, %64, %67 : vector<384x8xi1>, vector<384x8xf32>
    %c25 = arith.constant 25 : index
    %c0_51 = arith.constant 0 : index
    %69 = vector.load %arg11[%c25, %c0_51] : memref<456x8xf32, #tpu.memory_space<vmem>>, vector<384x8xf32>
    tpu.vector_store %arg11[%c25, %c0_51], %68 {strides = array<i32>} : memref<456x8xf32, #tpu.memory_space<vmem>>, vector<384x8xf32>,
    %cst_52 = arith.constant 0.000000e+00 : f32
    %70 = vector.broadcast %cst_52 : f32 to vector<384x8xf32>
    %c0_53 = arith.constant 0 : index
    %c0_54 = arith.constant 0 : index
    %71 = vector.load %arg11[%c0_53, %c0_54] : memref<456x8xf32, #tpu.memory_space<vmem>>, vector<384x8xf32>
    %c1_55 = arith.constant 1 : index
    %c0_56 = arith.constant 0 : index
    %72 = vector.load %arg11[%c1_55, %c0_56] : memref<456x8xf32, #tpu.memory_space<vmem>>, vector<384x8xf32>
    %c2_57 = arith.constant 2 : index
    %c0_58 = arith.constant 0 : index
    %73 = vector.load %arg11[%c2_57, %c0_58] : memref<456x8xf32, #tpu.memory_space<vmem>>, vector<384x8xf32>
    %74 = tpu.concatenate %71, %72, %73 in 1 : vector<384x8xf32>, vector<384x8xf32>, vector<384x8xf32> -> vector<384x24xf32>
    %c0_59 = arith.constant 0 : index
    %c0_60 = arith.constant 0 : index
    %c0_61 = arith.constant 0 : index
    %75 = vector.load %arg4[%c0_59, %c0_60, %c0_61] : memref<3x24x8xf32, #tpu.memory_space<vmem>>, vector<1x24x8xf32>
    %76 = vector.shape_cast %75 : vector<1x24x8xf32> to vector<24x8xf32>
    %cst_62 = arith.constant dense<0.000000e+00> : vector<384x8xf32>
    %77 = tpu.matmul %74, %76, %cst_62 {dimension_numbers = #tpu.dot_dimension_numbers<[1], [0], [0], [1], [0, 0, 1, 1], [], []>} : vector<384x24xf32>, vector<24x8xf32>, vector<384x8xf32> -> vector<384x8xf32>
    %78 = arith.addf %70, %77 : vector<384x8xf32>
    %c24 = arith.constant 24 : index
    %c0_63 = arith.constant 0 : index
    %79 = vector.load %arg11[%c24, %c0_63] : memref<456x8xf32, #tpu.memory_space<vmem>>, vector<384x8xf32>
    %c25_64 = arith.constant 25 : index
    %c0_65 = arith.constant 0 : index
    %80 = vector.load %arg11[%c25_64, %c0_65] : memref<456x8xf32, #tpu.memory_space<vmem>>, vector<384x8xf32>
    %c26 = arith.constant 26 : index
    %c0_66 = arith.constant 0 : index
    %81 = vector.load %arg11[%c26, %c0_66] : memref<456x8xf32, #tpu.memory_space<vmem>>, vector<384x8xf32>
    %82 = tpu.concatenate %79, %80, %81 in 1 : vector<384x8xf32>, vector<384x8xf32>, vector<384x8xf32> -> vector<384x24xf32>
    %c1_67 = arith.constant 1 : index
    %c0_68 = arith.constant 0 : index
    %c0_69 = arith.constant 0 : index
    %83 = vector.load %arg4[%c1_67, %c0_68, %c0_69] : memref<3x24x8xf32, #tpu.memory_space<vmem>>, vector<1x24x8xf32>
    %84 = vector.shape_cast %83 : vector<1x24x8xf32> to vector<24x8xf32>
    %cst_70 = arith.constant dense<0.000000e+00> : vector<384x8xf32>
    %85 = tpu.matmul %82, %84, %cst_70 {dimension_numbers = #tpu.dot_dimension_numbers<[1], [0], [0], [1], [0, 0, 1, 1], [], []>} : vector<384x24xf32>, vector<24x8xf32>, vector<384x8xf32> -> vector<384x8xf32>
    %86 = arith.addf %78, %85 : vector<384x8xf32>
    %c48 = arith.constant 48 : index
    %c0_71 = arith.constant 0 : index
    %87 = vector.load %arg11[%c48, %c0_71] : memref<456x8xf32, #tpu.memory_space<vmem>>, vector<384x8xf32>
    %c49 = arith.constant 49 : index
    %c0_72 = arith.constant 0 : index
    %88 = vector.load %arg11[%c49, %c0_72] : memref<456x8xf32, #tpu.memory_space<vmem>>, vector<384x8xf32>
    %c50 = arith.constant 50 : index
    %c0_73 = arith.constant 0 : index
    %89 = vector.load %arg11[%c50, %c0_73] : memref<456x8xf32, #tpu.memory_space<vmem>>, vector<384x8xf32>
    %90 = tpu.concatenate %87, %88, %89 in 1 : vector<384x8xf32>, vector<384x8xf32>, vector<384x8xf32> -> vector<384x24xf32>
    %c2_74 = arith.constant 2 : index
    %c0_75 = arith.constant 0 : index
    %c0_76 = arith.constant 0 : index
    %91 = vector.load %arg4[%c2_74, %c0_75, %c0_76] : memref<3x24x8xf32, #tpu.memory_space<vmem>>, vector<1x24x8xf32>
    %92 = vector.shape_cast %91 : vector<1x24x8xf32> to vector<24x8xf32>
    %cst_77 = arith.constant dense<0.000000e+00> : vector<384x8xf32>
    %93 = tpu.matmul %90, %92, %cst_77 {dimension_numbers = #tpu.dot_dimension_numbers<[1], [0], [0], [1], [0, 0, 1, 1], [], []>} : vector<384x24xf32>, vector<24x8xf32>, vector<384x8xf32> -> vector<384x8xf32>
    %94 = arith.addf %86, %93 : vector<384x8xf32>
    %c0_78 = arith.constant 0 : index
    %c0_79 = arith.constant 0 : index
    %95 = vector.load %arg7[%c0_78, %c0_79] : memref<1x8xf32, #tpu.memory_space<vmem>>, vector<1x8xf32>
    %96 = vector.broadcast %95 : vector<1x8xf32> to vector<384x8xf32>
    %97 = arith.mulf %94, %96 : vector<384x8xf32>
    %c0_80 = arith.constant 0 : index
    %c0_81 = arith.constant 0 : index
    %98 = vector.load %arg8[%c0_80, %c0_81] : memref<1x8xf32, #tpu.memory_space<vmem>>, vector<1x8xf32>
    %99 = vector.broadcast %98 : vector<1x8xf32> to vector<384x8xf32>
    %100 = arith.addf %97, %99 : vector<384x8xf32>
    %cst_82 = arith.constant 0.000000e+00 : f32
    %101 = vector.broadcast %cst_82 : f32 to vector<384x8xf32>
    %102 = arith.maximumf %100, %101 : vector<384x8xf32>
    %cst_83 = arith.constant 0.000000e+00 : f32
    %103 = vector.shape_cast %29 : vector<384x1xi1> to vector<384x1xi1>
    %104 = vector.broadcast %103 : vector<384x1xi1> to vector<384x8xi1>
    %105 = vector.broadcast %cst_83 : f32 to vector<384x8xf32>
    %106 = arith.select %104, %102, %105 : vector<384x8xi1>, vector<384x8xf32>
    %c0_84 = arith.constant 0 : index
    %c0_85 = arith.constant 0 : index
    %c0_86 = arith.constant 0 : index
    %107 = vector.load %arg9[%c0_84, %c0_85, %c0_86] : memref<1x384x8xf32, #tpu.memory_space<vmem>>, vector<1x384x8xf32>
    %108 = vector.shape_cast %107 : vector<1x384x8xf32> to vector<384x8xf32>
    %109 = vector.shape_cast %106 : vector<384x8xf32> to vector<1x384x8xf32>
    tpu.vector_store %arg9[%c0_84, %c0_85, %c0_86], %109 {strides = array<i32>} : memref<1x384x8xf32, #tpu.memory_space<vmem>>, vector<1x384x8xf32>,
    return
  }
  func.func @transform_0(%arg0: i32) -> (i32, i32, i32, i32) {
    %c0_i32 = arith.constant 0 : i32
    %c0_i32_0 = arith.constant 0 : i32
    %c0_i32_1 = arith.constant 0 : i32
    %c0_i32_2 = arith.constant 0 : i32
    return %arg0, %c0_i32, %c0_i32_0, %c0_i32_1 : i32, i32, i32, i32
  }
  func.func @transform_1(%arg0: i32) -> (i32, i32, i32, i32) {
    %c0_i32 = arith.constant 0 : i32
    %c0_i32_0 = arith.constant 0 : i32
    %c0_i32_1 = arith.constant 0 : i32
    %c0_i32_2 = arith.constant 0 : i32
    return %arg0, %c0_i32, %c0_i32_0, %c0_i32_1 : i32, i32, i32, i32
  }
  func.func @transform_2(%arg0: i32) -> (i32, i32, i32) {
    %c0_i32 = arith.constant 0 : i32
    %c0_i32_0 = arith.constant 0 : i32
    %c0_i32_1 = arith.constant 0 : i32
    %c0_i32_2 = arith.constant 0 : i32
    return %c0_i32, %c0_i32_0, %c0_i32_1 : i32, i32, i32
  }
  func.func @transform_3(%arg0: i32) -> (i32, i32, i32) {
    %c0_i32 = arith.constant 0 : i32
    %c0_i32_0 = arith.constant 0 : i32
    %c0_i32_1 = arith.constant 0 : i32
    %c0_i32_2 = arith.constant 0 : i32
    return %c0_i32, %c0_i32_0, %c0_i32_1 : i32, i32, i32
  }
  func.func @transform_4(%arg0: i32) -> (i32, i32) {
    %c0_i32 = arith.constant 0 : i32
    %c0_i32_0 = arith.constant 0 : i32
    %c0_i32_1 = arith.constant 0 : i32
    return %c0_i32, %c0_i32_0 : i32, i32
  }
  func.func @transform_5(%arg0: i32) -> (i32, i32) {
    %c0_i32 = arith.constant 0 : i32
    %c0_i32_0 = arith.constant 0 : i32
    %c0_i32_1 = arith.constant 0 : i32
    return %c0_i32, %c0_i32_0 : i32, i32
  }
  func.func @transform_6(%arg0: i32) -> (i32, i32) {
    %c0_i32 = arith.constant 0 : i32
    %c0_i32_0 = arith.constant 0 : i32
    %c0_i32_1 = arith.constant 0 : i32
    return %c0_i32, %c0_i32_0 : i32, i32
  }
  func.func @transform_7(%arg0: i32) -> (i32, i32) {
    %c0_i32 = arith.constant 0 : i32
    %c0_i32_0 = arith.constant 0 : i32
    %c0_i32_1 = arith.constant 0 : i32
    return %c0_i32, %c0_i32_0 : i32, i32
  }
  func.func @transform_8(%arg0: i32) -> (i32, i32, i32) {
    %c0_i32 = arith.constant 0 : i32
    %c0_i32_0 = arith.constant 0 : i32
    %c0_i32_1 = arith.constant 0 : i32
    return %arg0, %c0_i32, %c0_i32_0 : i32, i32, i32
  }
}

</mosaic_0001>

<llo_original>
// kernel: tpu_custom_call.1
$region0: #{tpu_custom_call.1}
  #allocation0 [shape = 'u32[]', space=smem, size = 0x4, offset = 0x4, fixed_abs, tag = 'smem constant byte address 0x4 - core index']
  #allocation1 [shape = 'u32[144,128]{1,0:T(1,128)}', space=vmem, size = 0x12000, scoped, tag = 'internal scratch']
  #allocation2 [shape = 'f32[19,24,16]{2,1,0:T(8,128)}', space=vmem, size = 0x39000, scoped, tag = 'scratch operand']
  #allocation3 [shape = 'f32[456,8]{1,0:T(8,128)}', space=vmem, size = 0x39000, scoped, tag = 'scratch operand']
  %s0 = inlined_call_operand.vmem [shape: f32[2,8,8,8], index: 0, kind: input, shape index: {}]
  %s1 = inlined_call_operand.vmem [shape: f32[2,16,16,8], index: 1, kind: input, shape index: {}]
  %s2 = inlined_call_operand.vmem [shape: f32[3,48,8], index: 2, kind: input, shape index: {}]
  %s3 = inlined_call_operand.vmem [shape: f32[3,24,8], index: 3, kind: input, shape index: {}]
  %s4 = inlined_call_operand.vmem [shape: f32[1,8], index: 4, kind: input, shape index: {}]
  %s5 = inlined_call_operand.vmem [shape: f32[1,8], index: 5, kind: input, shape index: {}]
  %s6 = inlined_call_operand.vmem [shape: f32[1,8], index: 6, kind: input, shape index: {}]
  %s7 = inlined_call_operand.vmem [shape: f32[1,8], index: 7, kind: input, shape index: {}]
  %s8 = inlined_call_operand.vmem [shape: f32[2,384,8], index: 8, kind: output, shape index: {}]
  %s9 = sld [smem:[#allocation0]]
  $region65: #{tpu_custom_call.1} parent=0
    _
  %s11 = ssub.s32 1, %s9
  %s12 = scalar_select 0, %s11, %s9
  loop: start=0, step=1, limit=4
  $region2: #{tpu_custom_call.1} parent=0 // loop_pre_header
    _
  $region3: #{tpu_custom_call.1} parent=0 // loop_header
    %s14 = sphi 0, %s18
    %p15 = scmp.ge.s32.totalorder %s14, 4
    %s24 = sphi 0, %s26
    %s27 = sphi 0, %s24
    %s28 = sphi 0, %s27
    %s44 = sphi 0, %s28
    %s50 = sphi 0, %s52
    %s53 = sphi 0, %s50
    %s54 = sphi 0, %s53
    %s70 = sphi 0, %s54
    %s74 = sphi 0, %s74
    %s76 = sphi 0, %s74
    %s77 = sphi 0, %s76
    %s91 = sphi 0, %s77
    %s95 = sphi 0, %s95
    %s97 = sphi 0, %s95
    %s98 = sphi 0, %s97
    %s112 = sphi 0, %s98
    %s116 = sphi 0, %s116
    %s118 = sphi 0, %s116
    %s119 = sphi 0, %s118
    %s133 = sphi 0, %s119
    %s137 = sphi 0, %s137
    %s139 = sphi 0, %s137
    %s140 = sphi 0, %s139
    %s154 = sphi 0, %s140
    %s158 = sphi 0, %s158
    %s160 = sphi 0, %s158
    %s161 = sphi 0, %s160
    %s175 = sphi 0, %s161
    %s179 = sphi 0, %s179
    %s181 = sphi 0, %s179
    %s182 = sphi 0, %s181
    %s196 = sphi 0, %s182
    %s202 = sphi 0, %s204
    %s205 = sphi 0, %s202
    %s206 = sphi 0, %s205
    %s222 = sphi 0, %s206
  $region4: #{tpu_custom_call.1} parent=0 // loop_header_branch
    %17 = sbr.rel (%p15) target = $region8
  $region5: #{tpu_custom_call.1} parent=0 // loop_body
    %s19 = ssub.s32 %s14, 1
    %s20 = ssub.s32 %s14, 2
    %s21 = sadd.s32 %s14, 1
    %s22 = ssub.s32 %s14, %s21
    %p23 = scmp.eq.s32.totalorder %s22, 0
    %s25 = sadd.s32 %s24, 1
    %s26 = scalar_select %p23, %s24, %s25
    %p29 = pneg %p23
    %p30 = scmp.eq.s32.totalorder %s14, 1
    %p31 = por %p29, %p30
    %p32 = scmp.ne.s32.totalorder %s24, %s27
    %p33 = scmp.eq.s32.totalorder %s14, 0
    %p34 = por %p32, %p33
    %p35 = scmp.ne.s32.totalorder %s24, %s27
    %p36 = scmp.eq.s32.totalorder %s19, 1
    %p37 = por %p35, %p36
    %p38 = scmp.ne.s32.totalorder %s27, %s28
    %p39 = scmp.eq.s32.totalorder %s19, 0
    %p40 = por %p38, %p39
    %p41 = scmp.ne.s32.totalorder %s27, %s28
    %p42 = scmp.eq.s32.totalorder %s20, 1
    %p43 = por %p41, %p42
    %p45 = scmp.ne.s32.totalorder %s28, %s44
    %p46 = scmp.eq.s32.totalorder %s20, 0
    %p47 = por %p45, %p46
    %s48 = ssub.s32 %s14, %s21
    %p49 = scmp.eq.s32.totalorder %s48, 0
    %s51 = sadd.s32 %s50, 1
    %s52 = scalar_select %p49, %s50, %s51
    %p55 = pneg %p49
    %p56 = scmp.eq.s32.totalorder %s14, 1
    %p57 = por %p55, %p56
    %p58 = scmp.ne.s32.totalorder %s50, %s53
    %p59 = scmp.eq.s32.totalorder %s14, 0
    %p60 = por %p58, %p59
    %p61 = scmp.ne.s32.totalorder %s50, %s53
    %p62 = scmp.eq.s32.totalorder %s19, 1
    %p63 = por %p61, %p62
    %p64 = scmp.ne.s32.totalorder %s53, %s54
    %p65 = scmp.eq.s32.totalorder %s19, 0
    %p66 = por %p64, %p65
    %p67 = scmp.ne.s32.totalorder %s53, %s54
    %p68 = scmp.eq.s32.totalorder %s20, 1
    %p69 = por %p67, %p68
    %p71 = scmp.ne.s32.totalorder %s54, %s70
    %p72 = scmp.eq.s32.totalorder %s20, 0
    %p73 = por %p71, %p72
    %s75 = sadd.s32 %s74, 1
    %p78 = scmp.eq.s32.totalorder %s14, 1
    %p79 = scmp.ne.s32.totalorder %s74, %s76
    %p80 = scmp.eq.s32.totalorder %s14, 0
    %p81 = por %p79, %p80
    %p82 = scmp.ne.s32.totalorder %s74, %s76
    %p83 = scmp.eq.s32.totalorder %s19, 1
    %p84 = por %p82, %p83
    %p85 = scmp.ne.s32.totalorder %s76, %s77
    %p86 = scmp.eq.s32.totalorder %s19, 0
    %p87 = por %p85, %p86
    %p88 = scmp.ne.s32.totalorder %s76, %s77
    %p89 = scmp.eq.s32.totalorder %s20, 1
    %p90 = por %p88, %p89
    %p92 = scmp.ne.s32.totalorder %s77, %s91
    %p93 = scmp.eq.s32.totalorder %s20, 0
    %p94 = por %p92, %p93
    %s96 = sadd.s32 %s95, 1
    %p99 = scmp.eq.s32.totalorder %s14, 1
    %p100 = scmp.ne.s32.totalorder %s95, %s97
    %p101 = scmp.eq.s32.totalorder %s14, 0
    %p102 = por %p100, %p101
    %p103 = scmp.ne.s32.totalorder %s95, %s97
    %p104 = scmp.eq.s32.totalorder %s19, 1
    %p105 = por %p103, %p104
    %p106 = scmp.ne.s32.totalorder %s97, %s98
    %p107 = scmp.eq.s32.totalorder %s19, 0
    %p108 = por %p106, %p107
    %p109 = scmp.ne.s32.totalorder %s97, %s98
    %p110 = scmp.eq.s32.totalorder %s20, 1
    %p111 = por %p109, %p110
    %p113 = scmp.ne.s32.totalorder %s98, %s112
    %p114 = scmp.eq.s32.totalorder %s20, 0
    %p115 = por %p113, %p114
    %s117 = sadd.s32 %s116, 1
    %p120 = scmp.eq.s32.totalorder %s14, 1
    %p121 = scmp.ne.s32.totalorder %s116, %s118
    %p122 = scmp.eq.s32.totalorder %s14, 0
    %p123 = por %p121, %p122
    %p124 = scmp.ne.s32.totalorder %s116, %s118
    %p125 = scmp.eq.s32.totalorder %s19, 1
    %p126 = por %p124, %p125
    %p127 = scmp.ne.s32.totalorder %s118, %s119
    %p128 = scmp.eq.s32.totalorder %s19, 0
    %p129 = por %p127, %p128
    %p130 = scmp.ne.s32.totalorder %s118, %s119
    %p131 = scmp.eq.s32.totalorder %s20, 1
    %p132 = por %p130, %p131
    %p134 = scmp.ne.s32.totalorder %s119, %s133
    %p135 = scmp.eq.s32.totalorder %s20, 0
    %p136 = por %p134, %p135
    %s138 = sadd.s32 %s137, 1
    %p141 = scmp.eq.s32.totalorder %s14, 1
    %p142 = scmp.ne.s32.totalorder %s137, %s139
    %p143 = scmp.eq.s32.totalorder %s14, 0
    %p144 = por %p142, %p143
    %p145 = scmp.ne.s32.totalorder %s137, %s139
    %p146 = scmp.eq.s32.totalorder %s19, 1
    %p147 = por %p145, %p146
    %p148 = scmp.ne.s32.totalorder %s139, %s140
    %p149 = scmp.eq.s32.totalorder %s19, 0
    %p150 = por %p148, %p149
    %p151 = scmp.ne.s32.totalorder %s139, %s140
    %p152 = scmp.eq.s32.totalorder %s20, 1
    %p153 = por %p151, %p152
    %p155 = scmp.ne.s32.totalorder %s140, %s154
    %p156 = scmp.eq.s32.totalorder %s20, 0
    %p157 = por %p155, %p156
    %s159 = sadd.s32 %s158, 1
    %p162 = scmp.eq.s32.totalorder %s14, 1
    %p163 = scmp.ne.s32.totalorder %s158, %s160
    %p164 = scmp.eq.s32.totalorder %s14, 0
    %p165 = por %p163, %p164
    %p166 = scmp.ne.s32.totalorder %s158, %s160
    %p167 = scmp.eq.s32.totalorder %s19, 1
    %p168 = por %p166, %p167
    %p169 = scmp.ne.s32.totalorder %s160, %s161
    %p170 = scmp.eq.s32.totalorder %s19, 0
    %p171 = por %p169, %p170
    %p172 = scmp.ne.s32.totalorder %s160, %s161
    %p173 = scmp.eq.s32.totalorder %s20, 1
    %p174 = por %p172, %p173
    %p176 = scmp.ne.s32.totalorder %s161, %s175
    %p177 = scmp.eq.s32.totalorder %s20, 0
    %p178 = por %p176, %p177
    %s180 = sadd.s32 %s179, 1
    %p183 = scmp.eq.s32.totalorder %s14, 1
    %p184 = scmp.ne.s32.totalorder %s179, %s181
    %p185 = scmp.eq.s32.totalorder %s14, 0
    %p186 = por %p184, %p185
    %p187 = scmp.ne.s32.totalorder %s179, %s181
    %p188 = scmp.eq.s32.totalorder %s19, 1
    %p189 = por %p187, %p188
    %p190 = scmp.ne.s32.totalorder %s181, %s182
    %p191 = scmp.eq.s32.totalorder %s19, 0
    %p192 = por %p190, %p191
    %p193 = scmp.ne.s32.totalorder %s181, %s182
    %p194 = scmp.eq.s32.totalorder %s20, 1
    %p195 = por %p193, %p194
    %p197 = scmp.ne.s32.totalorder %s182, %s196
    %p198 = scmp.eq.s32.totalorder %s20, 0
    %p199 = por %p197, %p198
    %s200 = ssub.s32 %s14, %s21
    %p201 = scmp.eq.s32.totalorder %s200, 0
    %s203 = sadd.s32 %s202, 1
    %s204 = scalar_select %p201, %s202, %s203
    %p207 = pneg %p201
    %p208 = scmp.eq.s32.totalorder %s14, 1
    %p209 = por %p207, %p208
    %p210 = scmp.ne.s32.totalorder %s202, %s205
    %p211 = scmp.eq.s32.totalorder %s14, 0
    %p212 = por %p210, %p211
    %p213 = scmp.ne.s32.totalorder %s202, %s205
    %p214 = scmp.eq.s32.totalorder %s19, 1
    %p215 = por %p213, %p214
    %p216 = scmp.ne.s32.totalorder %s205, %s206
    %p217 = scmp.eq.s32.totalorder %s19, 0
    %p218 = por %p216, %p217
    %p219 = scmp.ne.s32.totalorder %s205, %s206
    %p220 = scmp.eq.s32.totalorder %s20, 1
    %p221 = por %p219, %p220
    %p223 = scmp.ne.s32.totalorder %s206, %s222
    %p224 = scmp.eq.s32.totalorder %s20, 0
    %p225 = por %p223, %p224
    %p226 = scmp.le.s32.totalorder 1, %s14
    %p227 = scmp.lt.s32.totalorder %s14, 3
    %p228 = pnand %p226, %p227
    %p229 = pneg %p228
    // Predicated region
    $region9: #{tpu_custom_call.1} parent=5 // pred_check
      _
    $region10: #{tpu_custom_call.1} parent=5 // pred_check_branch
      %231 = sbr.rel (%p228) target = $region12
    $region11: #{tpu_custom_call.1} parent=5 // pred_region
      %s232 = ssub.s32 %s14, 1
      // Predicated region
      $region13: #{tpu_custom_call.1} parent=11 // pred_check
        %p233 = pneg %p87
      $region14: #{tpu_custom_call.1} parent=11 // pred_check_branch
        %235 = sbr.rel (%p233) target = $region16
      $region15: #{tpu_custom_call.1} parent=11 // pred_region
        _
      $region16: #{tpu_custom_call.1} parent=11 // pred_fallthru
        _
      // Predicated region
      $region17: #{tpu_custom_call.1} parent=11 // pred_check
        %p236 = pneg %p108
      $region18: #{tpu_custom_call.1} parent=11 // pred_check_branch
        %238 = sbr.rel (%p236) target = $region20
      $region19: #{tpu_custom_call.1} parent=11 // pred_region
        _
      $region20: #{tpu_custom_call.1} parent=11 // pred_fallthru
        _
      // Predicated region
      $region21: #{tpu_custom_call.1} parent=11 // pred_check
        %p239 = pneg %p129
      $region22: #{tpu_custom_call.1} parent=11 // pred_check_branch
        %241 = sbr.rel (%p239) target = $region24
      $region23: #{tpu_custom_call.1} parent=11 // pred_region
        _
      $region24: #{tpu_custom_call.1} parent=11 // pred_fallthru
        _
      // Predicated region
      $region25: #{tpu_custom_call.1} parent=11 // pred_check
        %p242 = pneg %p150
      $region26: #{tpu_custom_call.1} parent=11 // pred_check_branch
        %244 = sbr.rel (%p242) target = $region28
      $region27: #{tpu_custom_call.1} parent=11 // pred_region
        _
      $region28: #{tpu_custom_call.1} parent=11 // pred_fallthru
        _
      // Predicated region
      $region29: #{tpu_custom_call.1} parent=11 // pred_check
        %p245 = pneg %p171
      $region30: #{tpu_custom_call.1} parent=11 // pred_check_branch
        %247 = sbr.rel (%p245) target = $region32
      $region31: #{tpu_custom_call.1} parent=11 // pred_region
        _
      $region32: #{tpu_custom_call.1} parent=11 // pred_fallthru
        _
      // Predicated region
      $region33: #{tpu_custom_call.1} parent=11 // pred_check
        %p248 = pneg %p192
      $region34: #{tpu_custom_call.1} parent=11 // pred_check_branch
        %250 = sbr.rel (%p248) target = $region36
      $region35: #{tpu_custom_call.1} parent=11 // pred_region
        _
      $region36: #{tpu_custom_call.1} parent=11 // pred_fallthru
        _
    $region12: #{tpu_custom_call.1} parent=5 // pred_fallthru
      _
    %p251 = scmp.lt.s32.totalorder %s14, 2
    // Predicated region
    $region37: #{tpu_custom_call.1} parent=5 // pred_check
      %p252 = pneg %p251
    $region38: #{tpu_custom_call.1} parent=5 // pred_check_branch
      %254 = sbr.rel (%p252) target = $region40
    $region39: #{tpu_custom_call.1} parent=5 // pred_region
      // Predicated region
      $region41: #{tpu_custom_call.1} parent=39 // pred_check
        %p255 = pneg %p34
      $region42: #{tpu_custom_call.1} parent=39 // pred_check_branch
        %257 = sbr.rel (%p255) target = $region44
      $region43: #{tpu_custom_call.1} parent=39 // pred_region
        %p258 = scmp.lt.s32.totalorder %s14, 1
        %s259 = scalar_select %p258, %s14, 1
        %s260 = smul.addr %s259, 8
        %s261 = smul.addr %s260, 8
        %s262 = scalar_lea.vmem %s0, %s261
      $region44: #{tpu_custom_call.1} parent=39 // pred_fallthru
        _
      // Predicated region
      $region45: #{tpu_custom_call.1} parent=39 // pred_check
        %p263 = pneg %p60
      $region46: #{tpu_custom_call.1} parent=39 // pred_check_branch
        %265 = sbr.rel (%p263) target = $region48
      $region47: #{tpu_custom_call.1} parent=39 // pred_region
        %p266 = scmp.lt.s32.totalorder %s14, 1
        %s267 = scalar_select %p266, %s14, 1
        %s268 = smul.addr %s267, 32
        %s269 = smul.addr %s268, 8
        %s270 = scalar_lea.vmem %s1, %s269
      $region48: #{tpu_custom_call.1} parent=39 // pred_fallthru
        _
    $region40: #{tpu_custom_call.1} parent=5 // pred_fallthru
      _
    %p271 = scmp.le.s32.totalorder 1, %s14
    %p272 = scmp.lt.s32.totalorder %s14, 3
    %p273 = pnand %p271, %p272
    %p274 = pneg %p273
    // Predicated region
    $region49: #{tpu_custom_call.1} parent=5 // pred_check
      _
    $region50: #{tpu_custom_call.1} parent=5 // pred_check_branch
      %276 = sbr.rel (%p273) target = $region52
    $region51: #{tpu_custom_call.1} parent=5 // pred_region
      %s277 = ssub.s32 %s14, 1
      %p278 = scmp.lt.s32.totalorder %s19, 1
      %s279 = scalar_select %p278, %s19, 1
      %s280 = smul.addr %s279, 8
      %s281 = smul.addr %s280, 8
      %s282 = scalar_lea.vmem %s0, %s281
      %p283 = pneg %p40
      %p284 = pneg %p37
      %p285 = scmp.lt.s32.totalorder %s19, 1
      %s286 = scalar_select %p285, %s19, 1
      %s287 = smul.addr %s286, 32
      %s288 = smul.addr %s287, 8
      %s289 = scalar_lea.vmem %s1, %s288
      %p290 = pneg %p66
      %p291 = pneg %p63
      %p292 = pneg %p87
      %p293 = pneg %p84
      %p294 = pneg %p108
      %p295 = pneg %p105
      %p296 = pneg %p129
      %p297 = pneg %p126
      %p298 = pneg %p150
      %p299 = pneg %p147
      %p300 = pneg %p171
      %p301 = pneg %p168
      %p302 = pneg %p192
      %p303 = pneg %p189
      %p304 = pneg %p218
      %p305 = pneg %p215
      %p306 = scmp.lt.s32.totalorder %s19, 1
      %s307 = scalar_select %p306, %s19, 1
      %s308 = smul.addr %s307, 48
      %s309 = smul.addr %s308, 8
      %s310 = scalar_lea.vmem %s8, %s309
      %p311 = scmp.lt.s32.totalorder %s19, 1
      %s312 = scalar_select %p311, %s19, 1
      %s313 = smul.addr %s312, 8
      %s314 = smul.addr %s313, 8
      %s315 = scalar_lea.vmem %s0, %s314
      %p316 = scmp.lt.s32.totalorder %s19, 1
      %s317 = scalar_select %p316, %s19, 1
      %s318 = smul.addr %s317, 32
      %s319 = smul.addr %s318, 8
      %s320 = scalar_lea.vmem %s1, %s319
      %p321 = scmp.lt.s32.totalorder %s19, 1
      %s322 = scalar_select %p321, %s19, 1
      %s323 = smul.addr %s322, 48
      %s324 = smul.addr %s323, 8
      %s325 = scalar_lea.vmem %s8, %s324
      %vm326 = vcmask 130048
      %327 = vst.msk [vmem:[#allocation2] sm:$0xff] %vm326, 0.0
      %328 = vst.msk [vmem:[#allocation2 + $0x8] sm:$0xff] %vm326, 0.0
      %329 = vst.msk [vmem:[#allocation2 + $0x10] sm:$0xff] %vm326, 0.0
      %s330 = scalar_lea.vmem [#allocation2], 408
      %331 = vst.msk [vmem:[%s330] sm:$0xff] %vm326, 0.0
      %332 = vst.msk [vmem:[%s330 + $0x8] sm:$0xff] %vm326, 0.0
      %333 = vst.msk [vmem:[%s330 + $0x10] sm:$0xff] %vm326, 0.0
      %s334 = scalar_lea.vmem [#allocation2], 24
      %vm335 = vcmask 122880
      %336 = vst.msk [vmem:[%s334] sm:$0x1] %vm335, 0.0
      %337 = vst.msk [vmem:[%s334 + $0x18] sm:$0x1] %vm335, 0.0
      %338 = vst.msk [vmem:[%s334 + $0x30] sm:$0x1] %vm335, 0.0
      %339 = vst.msk [vmem:[%s334 + $0x48] sm:$0x1] %vm335, 0.0
      %340 = vst.msk [vmem:[%s334 + $0x60] sm:$0x1] %vm335, 0.0
      %341 = vst.msk [vmem:[%s334 + $0x78] sm:$0x1] %vm335, 0.0
      %342 = vst.msk [vmem:[%s334 + $0x90] sm:$0x1] %vm335, 0.0
      %343 = vst.msk [vmem:[%s334 + $0xa8] sm:$0x1] %vm335, 0.0
      %344 = vst.msk [vmem:[%s334 + $0xc0] sm:$0x1] %vm335, 0.0
      %345 = vst.msk [vmem:[%s334 + $0xd8] sm:$0x1] %vm335, 0.0
      %346 = vst.msk [vmem:[%s334 + $0xf0] sm:$0x1] %vm335, 0.0
      %347 = vst.msk [vmem:[%s334 + $0x108] sm:$0x1] %vm335, 0.0
      %348 = vst.msk [vmem:[%s334 + $0x120] sm:$0x1] %vm335, 0.0
      %349 = vst.msk [vmem:[%s334 + $0x138] sm:$0x1] %vm335, 0.0
      %350 = vst.msk [vmem:[%s334 + $0x150] sm:$0x1] %vm335, 0.0
      %351 = vst.msk [vmem:[%s334 + $0x168] sm:$0x1] %vm335, 0.0
      %352 = vst.msk [vmem:[%s334 + $0x11] sm:$0x1] %vm335, 0.0
      %353 = vst.msk [vmem:[%s334 + $0x29] sm:$0x1] %vm335, 0.0
      %354 = vst.msk [vmem:[%s334 + $0x41] sm:$0x1] %vm335, 0.0
      %355 = vst.msk [vmem:[%s334 + $0x59] sm:$0x1] %vm335, 0.0
      %356 = vst.msk [vmem:[%s334 + $0x71] sm:$0x1] %vm335, 0.0
      %357 = vst.msk [vmem:[%s334 + $0x89] sm:$0x1] %vm335, 0.0
      %358 = vst.msk [vmem:[%s334 + $0xa1] sm:$0x1] %vm335, 0.0
      %359 = vst.msk [vmem:[%s334 + $0xb9] sm:$0x1] %vm335, 0.0
      %360 = vst.msk [vmem:[%s334 + $0xd1] sm:$0x1] %vm335, 0.0
      %361 = vst.msk [vmem:[%s334 + $0xe9] sm:$0x1] %vm335, 0.0
      %362 = vst.msk [vmem:[%s334 + $0x101] sm:$0x1] %vm335, 0.0
      %363 = vst.msk [vmem:[%s334 + $0x119] sm:$0x1] %vm335, 0.0
      %364 = vst.msk [vmem:[%s334 + $0x131] sm:$0x1] %vm335, 0.0
      %365 = vst.msk [vmem:[%s334 + $0x149] sm:$0x1] %vm335, 0.0
      %366 = vst.msk [vmem:[%s334 + $0x161] sm:$0x1] %vm335, 0.0
      %367 = vst.msk [vmem:[%s334 + $0x179] sm:$0x1] %vm335, 0.0
      %vm368 = vcmask 64512
      %369 = vst.msk [vmem:[#allocation3] sm:$0xff] %vm368, 0.0
      %370 = vst.msk [vmem:[#allocation3 + $0x8] sm:$0xff] %vm368, 0.0
      %371 = vst.msk [vmem:[#allocation3 + $0x10] sm:$0xff] %vm368, 0.0
      %vm372 = vcmask 57344
      %373 = vst.msk [vmem:[#allocation3 + $0x18] sm:$0x1] %vm372, 0.0
      %374 = vst.msk [vmem:[#allocation3 + $0x198] sm:$0xff] %vm368, 0.0
      %375 = vst.msk [vmem:[#allocation3 + $0x1a0] sm:$0xff] %vm368, 0.0
      %376 = vst.msk [vmem:[#allocation3 + $0x1a8] sm:$0xff] %vm368, 0.0
      %v377 = vld [vmem:[%s320] sm:$0xff]
      %v378 = vld [vmem:[%s320 + $0x8] sm:$0xff]
      %v379 = vld [vmem:[%s320 + $0x10] sm:$0xff]
      %v380 = vld [vmem:[%s320 + $0x18] sm:$0xff]
      %v381 = vld [vmem:[%s320 + $0x20] sm:$0xff]
      %v382 = vld [vmem:[%s320 + $0x28] sm:$0xff]
      %v383 = vld [vmem:[%s320 + $0x30] sm:$0xff]
      %v384 = vld [vmem:[%s320 + $0x38] sm:$0xff]
      %v385 = vld [vmem:[%s320 + $0x40] sm:$0xff]
      %v386 = vld [vmem:[%s320 + $0x48] sm:$0xff]
      %v387 = vld [vmem:[%s320 + $0x50] sm:$0xff]
      %v388 = vld [vmem:[%s320 + $0x58] sm:$0xff]
      %v389 = vld [vmem:[%s320 + $0x60] sm:$0xff]
      %v390 = vld [vmem:[%s320 + $0x68] sm:$0xff]
      %v391 = vld [vmem:[%s320 + $0x70] sm:$0xff]
      %v392 = vld [vmem:[%s320 + $0x78] sm:$0xff]
      %v393 = vld [vmem:[%s320 + $0x80] sm:$0xff]
      %v394 = vld [vmem:[%s320 + $0x88] sm:$0xff]
      %v395 = vld [vmem:[%s320 + $0x90] sm:$0xff]
      %v396 = vld [vmem:[%s320 + $0x98] sm:$0xff]
      %v397 = vld [vmem:[%s320 + $0xa0] sm:$0xff]
      %v398 = vld [vmem:[%s320 + $0xa8] sm:$0xff]
      %v399 = vld [vmem:[%s320 + $0xb0] sm:$0xff]
      %v400 = vld [vmem:[%s320 + $0xb8] sm:$0xff]
      %v401 = vld [vmem:[%s320 + $0xc0] sm:$0xff]
      %v402 = vld [vmem:[%s320 + $0xc8] sm:$0xff]
      %v403 = vld [vmem:[%s320 + $0xd0] sm:$0xff]
      %v404 = vld [vmem:[%s320 + $0xd8] sm:$0xff]
      %v405 = vld [vmem:[%s320 + $0xe0] sm:$0xff]
      %v406 = vld [vmem:[%s320 + $0xe8] sm:$0xff]
      %v407 = vld [vmem:[%s320 + $0xf0] sm:$0xff]
      %v408 = vld [vmem:[%s320 + $0xf8] sm:$0xff]
      %409 = vst.msk [vmem:[%s334 + $0x1] sm:$0xff] %vm368, %v377
      %410 = vst.msk [vmem:[%s334 + $0x9] sm:$0xff] %vm368, %v378
      %411 = vst.msk [vmem:[%s334 + $0x19] sm:$0xff] %vm368, %v379
      %412 = vst.msk [vmem:[%s334 + $0x21] sm:$0xff] %vm368, %v380
      %413 = vst.msk [vmem:[%s334 + $0x31] sm:$0xff] %vm368, %v381
      %414 = vst.msk [vmem:[%s334 + $0x39] sm:$0xff] %vm368, %v382
      %415 = vst.msk [vmem:[%s334 + $0x49] sm:$0xff] %vm368, %v383
      %416 = vst.msk [vmem:[%s334 + $0x51] sm:$0xff] %vm368, %v384
      %417 = vst.msk [vmem:[%s334 + $0x61] sm:$0xff] %vm368, %v385
      %418 = vst.msk [vmem:[%s334 + $0x69] sm:$0xff] %vm368, %v386
      %419 = vst.msk [vmem:[%s334 + $0x79] sm:$0xff] %vm368, %v387
      %420 = vst.msk [vmem:[%s334 + $0x81] sm:$0xff] %vm368, %v388
      %421 = vst.msk [vmem:[%s334 + $0x91] sm:$0xff] %vm368, %v389
      %422 = vst.msk [vmem:[%s334 + $0x99] sm:$0xff] %vm368, %v390
      %423 = vst.msk [vmem:[%s334 + $0xa9] sm:$0xff] %vm368, %v391
      %424 = vst.msk [vmem:[%s334 + $0xb1] sm:$0xff] %vm368, %v392
      %425 = vst.msk [vmem:[%s334 + $0xc1] sm:$0xff] %vm368, %v393
      %426 = vst.msk [vmem:[%s334 + $0xc9] sm:$0xff] %vm368, %v394
      %427 = vst.msk [vmem:[%s334 + $0xd9] sm:$0xff] %vm368, %v395
      %428 = vst.msk [vmem:[%s334 + $0xe1] sm:$0xff] %vm368, %v396
      %429 = vst.msk [vmem:[%s334 + $0xf1] sm:$0xff] %vm368, %v397
      %430 = vst.msk [vmem:[%s334 + $0xf9] sm:$0xff] %vm368, %v398
      %431 = vst.msk [vmem:[%s334 + $0x109] sm:$0xff] %vm368, %v399
      %432 = vst.msk [vmem:[%s334 + $0x111] sm:$0xff] %vm368, %v400
      %433 = vst.msk [vmem:[%s334 + $0x121] sm:$0xff] %vm368, %v401
      %434 = vst.msk [vmem:[%s334 + $0x129] sm:$0xff] %vm368, %v402
      %435 = vst.msk [vmem:[%s334 + $0x139] sm:$0xff] %vm368, %v403
      %436 = vst.msk [vmem:[%s334 + $0x141] sm:$0xff] %vm368, %v404
      %437 = vst.msk [vmem:[%s334 + $0x151] sm:$0xff] %vm368, %v405
      %438 = vst.msk [vmem:[%s334 + $0x159] sm:$0xff] %vm368, %v406
      %439 = vst.msk [vmem:[%s334 + $0x169] sm:$0xff] %vm368, %v407
      %440 = vst.msk [vmem:[%s334 + $0x171] sm:$0xff] %vm368, %v408
      %v441 = vld [vmem:[%s315] sm:$0xff]
      %v442 = vld [vmem:[%s315 + $0x8] sm:$0xff]
      %v443 = vld [vmem:[%s315 + $0x10] sm:$0xff]
      %v444 = vld [vmem:[%s315 + $0x18] sm:$0xff]
      %v445 = vld [vmem:[%s315 + $0x20] sm:$0xff]
      %v446 = vld [vmem:[%s315 + $0x28] sm:$0xff]
      %v447 = vld [vmem:[%s315 + $0x30] sm:$0xff]
      %v448 = vld [vmem:[%s315 + $0x38] sm:$0xff]
      %v457 = vcombine.high %v441, %v441
      %v459 = vunpack.c.l.s4 1966171168
      %v460 = vunpack.c.0.s8 %v459
      %v461 = vlaneseq
      %v462 = vshrl.u32 %v461, 7
      %v463 = vsub.s32 %v460, %v462
      %v464 = vrot.slane %v441, %v463
      %v466 = vunpack.c.l.s4 1966171168
      %v467 = vunpack.c.0.s8 %v466
      %v468 = vlaneseq
      %v469 = vshrl.u32 %v468, 7
      %v470 = vsub.s32 %v467, %v469
      %v471 = vrot.slane %v457, %v470
      %v472 = vcombine.high %v464, %v464
      %v473 = vcombine.high %v471, %v471
      %v475 = vunpack.c.l.s4 1966171168
      %v476 = vunpack.c.0.s8 %v475
      %v477 = vlaneseq
      %v478 = vshrl.u32 %v477, 7
      %v479 = vsub.s32 %v476, %v478
      %v480 = vrot.slane %v464, %v479
      %v482 = vunpack.c.l.s4 1966171168
      %v483 = vunpack.c.0.s8 %v482
      %v484 = vlaneseq
      %v485 = vshrl.u32 %v484, 7
      %v486 = vsub.s32 %v483, %v485
      %v487 = vrot.slane %v471, %v486
      %v489 = vunpack.c.l.s4 1966171168
      %v490 = vunpack.c.0.s8 %v489
      %v491 = vlaneseq
      %v492 = vshrl.u32 %v491, 7
      %v493 = vsub.s32 %v490, %v492
      %v494 = vrot.slane %v472, %v493
      %v496 = vunpack.c.l.s4 1966171168
      %v497 = vunpack.c.0.s8 %v496
      %v498 = vlaneseq
      %v499 = vshrl.u32 %v498, 7
      %v500 = vsub.s32 %v497, %v499
      %v501 = vrot.slane %v473, %v500
      %v502 = vcombine.high %v480, %v480
      %v503 = vcombine.high %v487, %v487
      %v504 = vcombine.high %v494, %v494
      %v505 = vcombine.high %v501, %v501
      %v506 = vcombine.high %v442, %v442
      %v508 = vunpack.c.l.s4 1966171168
      %v509 = vunpack.c.0.s8 %v508
      %v510 = vlaneseq
      %v511 = vshrl.u32 %v510, 7
      %v512 = vsub.s32 %v509, %v511
      %v513 = vrot.slane %v442, %v512
      %v515 = vunpack.c.l.s4 1966171168
      %v516 = vunpack.c.0.s8 %v515
      %v517 = vlaneseq
      %v518 = vshrl.u32 %v517, 7
      %v519 = vsub.s32 %v516, %v518
      %v520 = vrot.slane %v506, %v519
      %v521 = vcombine.high %v513, %v513
      %v522 = vcombine.high %v520, %v520
      %v524 = vunpack.c.l.s4 1966171168
      %v525 = vunpack.c.0.s8 %v524
      %v526 = vlaneseq
      %v527 = vshrl.u32 %v526, 7
      %v528 = vsub.s32 %v525, %v527
      %v529 = vrot.slane %v513, %v528
      %v531 = vunpack.c.l.s4 1966171168
      %v532 = vunpack.c.0.s8 %v531
      %v533 = vlaneseq
      %v534 = vshrl.u32 %v533, 7
      %v535 = vsub.s32 %v532, %v534
      %v536 = vrot.slane %v520, %v535
      %v538 = vunpack.c.l.s4 1966171168
      %v539 = vunpack.c.0.s8 %v538
      %v540 = vlaneseq
      %v541 = vshrl.u32 %v540, 7
      %v542 = vsub.s32 %v539, %v541
      %v543 = vrot.slane %v521, %v542
      %v545 = vunpack.c.l.s4 1966171168
      %v546 = vunpack.c.0.s8 %v545
      %v547 = vlaneseq
      %v548 = vshrl.u32 %v547, 7
      %v549 = vsub.s32 %v546, %v548
      %v550 = vrot.slane %v522, %v549
      %v551 = vcombine.high %v529, %v529
      %v552 = vcombine.high %v536, %v536
      %v553 = vcombine.high %v543, %v543
      %v554 = vcombine.high %v550, %v550
      %v555 = vcombine.high %v443, %v443
      %v557 = vunpack.c.l.s4 1966171168
      %v558 = vunpack.c.0.s8 %v557
      %v559 = vlaneseq
      %v560 = vshrl.u32 %v559, 7
      %v561 = vsub.s32 %v558, %v560
      %v562 = vrot.slane %v443, %v561
      %v564 = vunpack.c.l.s4 1966171168
      %v565 = vunpack.c.0.s8 %v564
      %v566 = vlaneseq
      %v567 = vshrl.u32 %v566, 7
      %v568 = vsub.s32 %v565, %v567
      %v569 = vrot.slane %v555, %v568
      %v570 = vcombine.high %v562, %v562
      %v571 = vcombine.high %v569, %v569
      %v573 = vunpack.c.l.s4 1966171168
      %v574 = vunpack.c.0.s8 %v573
      %v575 = vlaneseq
      %v576 = vshrl.u32 %v575, 7
      %v577 = vsub.s32 %v574, %v576
      %v578 = vrot.slane %v562, %v577
      %v580 = vunpack.c.l.s4 1966171168
      %v581 = vunpack.c.0.s8 %v580
      %v582 = vlaneseq
      %v583 = vshrl.u32 %v582, 7
      %v584 = vsub.s32 %v581, %v583
      %v585 = vrot.slane %v569, %v584
      %v587 = vunpack.c.l.s4 1966171168
      %v588 = vunpack.c.0.s8 %v587
      %v589 = vlaneseq
      %v590 = vshrl.u32 %v589, 7
      %v591 = vsub.s32 %v588, %v590
      %v592 = vrot.slane %v570, %v591
      %v594 = vunpack.c.l.s4 1966171168
      %v595 = vunpack.c.0.s8 %v594
      %v596 = vlaneseq
      %v597 = vshrl.u32 %v596, 7
      %v598 = vsub.s32 %v595, %v597
      %v599 = vrot.slane %v571, %v598
      %v600 = vcombine.high %v578, %v578
      %v601 = vcombine.high %v585, %v585
      %v602 = vcombine.high %v592, %v592
      %v603 = vcombine.high %v599, %v599
      %v604 = vcombine.high %v444, %v444
      %v606 = vunpack.c.l.s4 1966171168
      %v607 = vunpack.c.0.s8 %v606
      %v608 = vlaneseq
      %v609 = vshrl.u32 %v608, 7
      %v610 = vsub.s32 %v607, %v609
      %v611 = vrot.slane %v444, %v610
      %v613 = vunpack.c.l.s4 1966171168
      %v614 = vunpack.c.0.s8 %v613
      %v615 = vlaneseq
      %v616 = vshrl.u32 %v615, 7
      %v617 = vsub.s32 %v614, %v616
      %v618 = vrot.slane %v604, %v617
      %v619 = vcombine.high %v611, %v611
      %v620 = vcombine.high %v618, %v618
      %v622 = vunpack.c.l.s4 1966171168
      %v623 = vunpack.c.0.s8 %v622
      %v624 = vlaneseq
      %v625 = vshrl.u32 %v624, 7
      %v626 = vsub.s32 %v623, %v625
      %v627 = vrot.slane %v611, %v626
      %v629 = vunpack.c.l.s4 1966171168
      %v630 = vunpack.c.0.s8 %v629
      %v631 = vlaneseq
      %v632 = vshrl.u32 %v631, 7
      %v633 = vsub.s32 %v630, %v632
      %v634 = vrot.slane %v618, %v633
      %v636 = vunpack.c.l.s4 1966171168
      %v637 = vunpack.c.0.s8 %v636
      %v638 = vlaneseq
      %v639 = vshrl.u32 %v638, 7
      %v640 = vsub.s32 %v637, %v639
      %v641 = vrot.slane %v619, %v640
      %v643 = vunpack.c.l.s4 1966171168
      %v644 = vunpack.c.0.s8 %v643
      %v645 = vlaneseq
      %v646 = vshrl.u32 %v645, 7
      %v647 = vsub.s32 %v644, %v646
      %v648 = vrot.slane %v620, %v647
      %v649 = vcombine.high %v627, %v627
      %v650 = vcombine.high %v634, %v634
      %v651 = vcombine.high %v641, %v641
      %v652 = vcombine.high %v648, %v648
      %v653 = vcombine.high %v445, %v445
      %v655 = vunpack.c.l.s4 1966171168
      %v656 = vunpack.c.0.s8 %v655
      %v657 = vlaneseq
      %v658 = vshrl.u32 %v657, 7
      %v659 = vsub.s32 %v656, %v658
      %v660 = vrot.slane %v445, %v659
      %v662 = vunpack.c.l.s4 1966171168
      %v663 = vunpack.c.0.s8 %v662
      %v664 = vlaneseq
      %v665 = vshrl.u32 %v664, 7
      %v666 = vsub.s32 %v663, %v665
      %v667 = vrot.slane %v653, %v666
      %v668 = vcombine.high %v660, %v660
      %v669 = vcombine.high %v667, %v667
      %v671 = vunpack.c.l.s4 1966171168
      %v672 = vunpack.c.0.s8 %v671
      %v673 = vlaneseq
      %v674 = vshrl.u32 %v673, 7
      %v675 = vsub.s32 %v672, %v674
      %v676 = vrot.slane %v660, %v675
      %v678 = vunpack.c.l.s4 1966171168
      %v679 = vunpack.c.0.s8 %v678
      %v680 = vlaneseq
      %v681 = vshrl.u32 %v680, 7
      %v682 = vsub.s32 %v679, %v681
      %v683 = vrot.slane %v667, %v682
      %v685 = vunpack.c.l.s4 1966171168
      %v686 = vunpack.c.0.s8 %v685
      %v687 = vlaneseq
      %v688 = vshrl.u32 %v687, 7
      %v689 = vsub.s32 %v686, %v688
      %v690 = vrot.slane %v668, %v689
      %v692 = vunpack.c.l.s4 1966171168
      %v693 = vunpack.c.0.s8 %v692
      %v694 = vlaneseq
      %v695 = vshrl.u32 %v694, 7
      %v696 = vsub.s32 %v693, %v695
      %v697 = vrot.slane %v669, %v696
      %v698 = vcombine.high %v676, %v676
      %v699 = vcombine.high %v683, %v683
      %v700 = vcombine.high %v690, %v690
      %v701 = vcombine.high %v697, %v697
      %v702 = vcombine.high %v446, %v446
      %v704 = vunpack.c.l.s4 1966171168
      %v705 = vunpack.c.0.s8 %v704
      %v706 = vlaneseq
      %v707 = vshrl.u32 %v706, 7
      %v708 = vsub.s32 %v705, %v707
      %v709 = vrot.slane %v446, %v708
      %v711 = vunpack.c.l.s4 1966171168
      %v712 = vunpack.c.0.s8 %v711
      %v713 = vlaneseq
      %v714 = vshrl.u32 %v713, 7
      %v715 = vsub.s32 %v712, %v714
      %v716 = vrot.slane %v702, %v715
      %v717 = vcombine.high %v709, %v709
      %v718 = vcombine.high %v716, %v716
      %v720 = vunpack.c.l.s4 1966171168
      %v721 = vunpack.c.0.s8 %v720
      %v722 = vlaneseq
      %v723 = vshrl.u32 %v722, 7
      %v724 = vsub.s32 %v721, %v723
      %v725 = vrot.slane %v709, %v724
      %v727 = vunpack.c.l.s4 1966171168
      %v728 = vunpack.c.0.s8 %v727
      %v729 = vlaneseq
      %v730 = vshrl.u32 %v729, 7
      %v731 = vsub.s32 %v728, %v730
      %v732 = vrot.slane %v716, %v731
      %v734 = vunpack.c.l.s4 1966171168
      %v735 = vunpack.c.0.s8 %v734
      %v736 = vlaneseq
      %v737 = vshrl.u32 %v736, 7
      %v738 = vsub.s32 %v735, %v737
      %v739 = vrot.slane %v717, %v738
      %v741 = vunpack.c.l.s4 1966171168
      %v742 = vunpack.c.0.s8 %v741
      %v743 = vlaneseq
      %v744 = vshrl.u32 %v743, 7
      %v745 = vsub.s32 %v742, %v744
      %v746 = vrot.slane %v718, %v745
      %v747 = vcombine.high %v725, %v725
      %v748 = vcombine.high %v732, %v732
      %v749 = vcombine.high %v739, %v739
      %v750 = vcombine.high %v746, %v746
      %v751 = vcombine.high %v447, %v447
      %v753 = vunpack.c.l.s4 1966171168
      %v754 = vunpack.c.0.s8 %v753
      %v755 = vlaneseq
      %v756 = vshrl.u32 %v755, 7
      %v757 = vsub.s32 %v754, %v756
      %v758 = vrot.slane %v447, %v757
      %v760 = vunpack.c.l.s4 1966171168
      %v761 = vunpack.c.0.s8 %v760
      %v762 = vlaneseq
      %v763 = vshrl.u32 %v762, 7
      %v764 = vsub.s32 %v761, %v763
      %v765 = vrot.slane %v751, %v764
      %v766 = vcombine.high %v758, %v758
      %v767 = vcombine.high %v765, %v765
      %v769 = vunpack.c.l.s4 1966171168
      %v770 = vunpack.c.0.s8 %v769
      %v771 = vlaneseq
      %v772 = vshrl.u32 %v771, 7
      %v773 = vsub.s32 %v770, %v772
      %v774 = vrot.slane %v758, %v773
      %v776 = vunpack.c.l.s4 1966171168
      %v777 = vunpack.c.0.s8 %v776
      %v778 = vlaneseq
      %v779 = vshrl.u32 %v778, 7
      %v780 = vsub.s32 %v777, %v779
      %v781 = vrot.slane %v765, %v780
      %v783 = vunpack.c.l.s4 1966171168
      %v784 = vunpack.c.0.s8 %v783
      %v785 = vlaneseq
      %v786 = vshrl.u32 %v785, 7
      %v787 = vsub.s32 %v784, %v786
      %v788 = vrot.slane %v766, %v787
      %v790 = vunpack.c.l.s4 1966171168
      %v791 = vunpack.c.0.s8 %v790
      %v792 = vlaneseq
      %v793 = vshrl.u32 %v792, 7
      %v794 = vsub.s32 %v791, %v793
      %v795 = vrot.slane %v767, %v794
      %v796 = vcombine.high %v774, %v774
      %v797 = vcombine.high %v781, %v781
      %v798 = vcombine.high %v788, %v788
      %v799 = vcombine.high %v795, %v795
      %v800 = vcombine.high %v448, %v448
      %v802 = vunpack.c.l.s4 1966171168
      %v803 = vunpack.c.0.s8 %v802
      %v804 = vlaneseq
      %v805 = vshrl.u32 %v804, 7
      %v806 = vsub.s32 %v803, %v805
      %v807 = vrot.slane %v448, %v806
      %v809 = vunpack.c.l.s4 1966171168
      %v810 = vunpack.c.0.s8 %v809
      %v811 = vlaneseq
      %v812 = vshrl.u32 %v811, 7
      %v813 = vsub.s32 %v810, %v812
      %v814 = vrot.slane %v800, %v813
      %v815 = vcombine.high %v807, %v807
      %v816 = vcombine.high %v814, %v814
      %v818 = vunpack.c.l.s4 1966171168
      %v819 = vunpack.c.0.s8 %v818
      %v820 = vlaneseq
      %v821 = vshrl.u32 %v820, 7
      %v822 = vsub.s32 %v819, %v821
      %v823 = vrot.slane %v807, %v822
      %v825 = vunpack.c.l.s4 1966171168
      %v826 = vunpack.c.0.s8 %v825
      %v827 = vlaneseq
      %v828 = vshrl.u32 %v827, 7
      %v829 = vsub.s32 %v826, %v828
      %v830 = vrot.slane %v814, %v829
      %v832 = vunpack.c.l.s4 1966171168
      %v833 = vunpack.c.0.s8 %v832
      %v834 = vlaneseq
      %v835 = vshrl.u32 %v834, 7
      %v836 = vsub.s32 %v833, %v835
      %v837 = vrot.slane %v815, %v836
      %v839 = vunpack.c.l.s4 1966171168
      %v840 = vunpack.c.0.s8 %v839
      %v841 = vlaneseq
      %v842 = vshrl.u32 %v841, 7
      %v843 = vsub.s32 %v840, %v842
      %v844 = vrot.slane %v816, %v843
      %v845 = vcombine.high %v823, %v823
      %v846 = vcombine.high %v830, %v830
      %v847 = vcombine.high %v837, %v837
      %v848 = vcombine.high %v844, %v844
      %v849 = vlaneseq
      %v850 = vshrl.u32 %v849, 7
      %v851 = vsub.s32 0, %v850
      %v852 = vrot.slane %v480, %v851
      %v853 = vlaneseq
      %v854 = vshrl.u32 %v853, 7
      %v855 = vsub.s32 0, %v854
      %v856 = vrot.slane %v494, %v855
      %v857 = vlaneseq
      %v858 = vshrl.u32 %v857, 7
      %v859 = vsub.s32 0, %v858
      %v860 = vrot.slane %v502, %v859
      %v861 = vlaneseq
      %v862 = vshrl.u32 %v861, 7
      %v863 = vsub.s32 0, %v862
      %v864 = vrot.slane %v504, %v863
      %v865 = vlaneseq
      %v866 = vshrl.u32 %v865, 7
      %v867 = vsub.s32 0, %v866
      %v868 = vrot.slane %v487, %v867
      %v869 = vlaneseq
      %v870 = vshrl.u32 %v869, 7
      %v871 = vsub.s32 0, %v870
      %v872 = vrot.slane %v501, %v871
      %v873 = vlaneseq
      %v874 = vshrl.u32 %v873, 7
      %v875 = vsub.s32 0, %v874
      %v876 = vrot.slane %v503, %v875
      %v877 = vlaneseq
      %v878 = vshrl.u32 %v877, 7
      %v879 = vsub.s32 0, %v878
      %v880 = vrot.slane %v505, %v879
      %v881 = vlaneseq
      %v882 = vshrl.u32 %v881, 7
      %v883 = vsub.s32 0, %v882
      %v884 = vrot.slane %v529, %v883
      %v885 = vlaneseq
      %v886 = vshrl.u32 %v885, 7
      %v887 = vsub.s32 0, %v886
      %v888 = vrot.slane %v543, %v887
      %v889 = vlaneseq
      %v890 = vshrl.u32 %v889, 7
      %v891 = vsub.s32 0, %v890
      %v892 = vrot.slane %v551, %v891
      %v893 = vlaneseq
      %v894 = vshrl.u32 %v893, 7
      %v895 = vsub.s32 0, %v894
      %v896 = vrot.slane %v553, %v895
      %v897 = vlaneseq
      %v898 = vshrl.u32 %v897, 7
      %v899 = vsub.s32 0, %v898
      %v900 = vrot.slane %v536, %v899
      %v901 = vlaneseq
      %v902 = vshrl.u32 %v901, 7
      %v903 = vsub.s32 0, %v902
      %v904 = vrot.slane %v550, %v903
      %v905 = vlaneseq
      %v906 = vshrl.u32 %v905, 7
      %v907 = vsub.s32 0, %v906
      %v908 = vrot.slane %v552, %v907
      %v909 = vlaneseq
      %v910 = vshrl.u32 %v909, 7
      %v911 = vsub.s32 0, %v910
      %v912 = vrot.slane %v554, %v911
      %v913 = vlaneseq
      %v914 = vshrl.u32 %v913, 7
      %v915 = vsub.s32 0, %v914
      %v916 = vrot.slane %v578, %v915
      %v917 = vlaneseq
      %v918 = vshrl.u32 %v917, 7
      %v919 = vsub.s32 0, %v918
      %v920 = vrot.slane %v592, %v919
      %v921 = vlaneseq
      %v922 = vshrl.u32 %v921, 7
      %v923 = vsub.s32 0, %v922
      %v924 = vrot.slane %v600, %v923
      %v925 = vlaneseq
      %v926 = vshrl.u32 %v925, 7
      %v927 = vsub.s32 0, %v926
      %v928 = vrot.slane %v602, %v927
      %v929 = vlaneseq
      %v930 = vshrl.u32 %v929, 7
      %v931 = vsub.s32 0, %v930
      %v932 = vrot.slane %v585, %v931
      %v933 = vlaneseq
      %v934 = vshrl.u32 %v933, 7
      %v935 = vsub.s32 0, %v934
      %v936 = vrot.slane %v599, %v935
      %v937 = vlaneseq
      %v938 = vshrl.u32 %v937, 7
      %v939 = vsub.s32 0, %v938
      %v940 = vrot.slane %v601, %v939
      %v941 = vlaneseq
      %v942 = vshrl.u32 %v941, 7
      %v943 = vsub.s32 0, %v942
      %v944 = vrot.slane %v603, %v943
      %v945 = vlaneseq
      %v946 = vshrl.u32 %v945, 7
      %v947 = vsub.s32 0, %v946
      %v948 = vrot.slane %v627, %v947
      %v949 = vlaneseq
      %v950 = vshrl.u32 %v949, 7
      %v951 = vsub.s32 0, %v950
      %v952 = vrot.slane %v641, %v951
      %v953 = vlaneseq
      %v954 = vshrl.u32 %v953, 7
      %v955 = vsub.s32 0, %v954
      %v956 = vrot.slane %v649, %v955
      %v957 = vlaneseq
      %v958 = vshrl.u32 %v957, 7
      %v959 = vsub.s32 0, %v958
      %v960 = vrot.slane %v651, %v959
      %v961 = vlaneseq
      %v962 = vshrl.u32 %v961, 7
      %v963 = vsub.s32 0, %v962
      %v964 = vrot.slane %v634, %v963
      %v965 = vlaneseq
      %v966 = vshrl.u32 %v965, 7
      %v967 = vsub.s32 0, %v966
      %v968 = vrot.slane %v648, %v967
      %v969 = vlaneseq
      %v970 = vshrl.u32 %v969, 7
      %v971 = vsub.s32 0, %v970
      %v972 = vrot.slane %v650, %v971
      %v973 = vlaneseq
      %v974 = vshrl.u32 %v973, 7
      %v975 = vsub.s32 0, %v974
      %v976 = vrot.slane %v652, %v975
      %v977 = vlaneseq
      %v978 = vshrl.u32 %v977, 7
      %v979 = vsub.s32 0, %v978
      %v980 = vrot.slane %v676, %v979
      %v981 = vlaneseq
      %v982 = vshrl.u32 %v981, 7
      %v983 = vsub.s32 0, %v982
      %v984 = vrot.slane %v690, %v983
      %v985 = vlaneseq
      %v986 = vshrl.u32 %v985, 7
      %v987 = vsub.s32 0, %v986
      %v988 = vrot.slane %v698, %v987
      %v989 = vlaneseq
      %v990 = vshrl.u32 %v989, 7
      %v991 = vsub.s32 0, %v990
      %v992 = vrot.slane %v700, %v991
      %v993 = vlaneseq
      %v994 = vshrl.u32 %v993, 7
      %v995 = vsub.s32 0, %v994
      %v996 = vrot.slane %v683, %v995
      %v997 = vlaneseq
      %v998 = vshrl.u32 %v997, 7
      %v999 = vsub.s32 0, %v998
      %v1000 = vrot.slane %v697, %v999
      %v1001 = vlaneseq
      %v1002 = vshrl.u32 %v1001, 7
      %v1003 = vsub.s32 0, %v1002
      %v1004 = vrot.slane %v699, %v1003
      %v1005 = vlaneseq
      %v1006 = vshrl.u32 %v1005, 7
      %v1007 = vsub.s32 0, %v1006
      %v1008 = vrot.slane %v701, %v1007
      %v1009 = vlaneseq
      %v1010 = vshrl.u32 %v1009, 7
      %v1011 = vsub.s32 0, %v1010
      %v1012 = vrot.slane %v725, %v1011
      %v1013 = vlaneseq
      %v1014 = vshrl.u32 %v1013, 7
      %v1015 = vsub.s32 0, %v1014
      %v1016 = vrot.slane %v739, %v1015
      %v1017 = vlaneseq
      %v1018 = vshrl.u32 %v1017, 7
      %v1019 = vsub.s32 0, %v1018
      %v1020 = vrot.slane %v747, %v1019
      %v1021 = vlaneseq
      %v1022 = vshrl.u32 %v1021, 7
      %v1023 = vsub.s32 0, %v1022
      %v1024 = vrot.slane %v749, %v1023
      %v1025 = vlaneseq
      %v1026 = vshrl.u32 %v1025, 7
      %v1027 = vsub.s32 0, %v1026
      %v1028 = vrot.slane %v732, %v1027
      %v1029 = vlaneseq
      %v1030 = vshrl.u32 %v1029, 7
      %v1031 = vsub.s32 0, %v1030
      %v1032 = vrot.slane %v746, %v1031
      %v1033 = vlaneseq
      %v1034 = vshrl.u32 %v1033, 7
      %v1035 = vsub.s32 0, %v1034
      %v1036 = vrot.slane %v748, %v1035
      %v1037 = vlaneseq
      %v1038 = vshrl.u32 %v1037, 7
      %v1039 = vsub.s32 0, %v1038
      %v1040 = vrot.slane %v750, %v1039
      %v1041 = vlaneseq
      %v1042 = vshrl.u32 %v1041, 7
      %v1043 = vsub.s32 0, %v1042
      %v1044 = vrot.slane %v774, %v1043
      %v1045 = vlaneseq
      %v1046 = vshrl.u32 %v1045, 7
      %v1047 = vsub.s32 0, %v1046
      %v1048 = vrot.slane %v788, %v1047
      %v1049 = vlaneseq
      %v1050 = vshrl.u32 %v1049, 7
      %v1051 = vsub.s32 0, %v1050
      %v1052 = vrot.slane %v796, %v1051
      %v1053 = vlaneseq
      %v1054 = vshrl.u32 %v1053, 7
      %v1055 = vsub.s32 0, %v1054
      %v1056 = vrot.slane %v798, %v1055
      %v1057 = vlaneseq
      %v1058 = vshrl.u32 %v1057, 7
      %v1059 = vsub.s32 0, %v1058
      %v1060 = vrot.slane %v781, %v1059
      %v1061 = vlaneseq
      %v1062 = vshrl.u32 %v1061, 7
      %v1063 = vsub.s32 0, %v1062
      %v1064 = vrot.slane %v795, %v1063
      %v1065 = vlaneseq
      %v1066 = vshrl.u32 %v1065, 7
      %v1067 = vsub.s32 0, %v1066
      %v1068 = vrot.slane %v797, %v1067
      %v1069 = vlaneseq
      %v1070 = vshrl.u32 %v1069, 7
      %v1071 = vsub.s32 0, %v1070
      %v1072 = vrot.slane %v799, %v1071
      %v1073 = vlaneseq
      %v1074 = vshrl.u32 %v1073, 7
      %v1075 = vsub.s32 0, %v1074
      %v1076 = vrot.slane %v823, %v1075
      %v1077 = vlaneseq
      %v1078 = vshrl.u32 %v1077, 7
      %v1079 = vsub.s32 0, %v1078
      %v1080 = vrot.slane %v837, %v1079
      %v1081 = vlaneseq
      %v1082 = vshrl.u32 %v1081, 7
      %v1083 = vsub.s32 0, %v1082
      %v1084 = vrot.slane %v845, %v1083
      %v1085 = vlaneseq
      %v1086 = vshrl.u32 %v1085, 7
      %v1087 = vsub.s32 0, %v1086
      %v1088 = vrot.slane %v847, %v1087
      %v1089 = vlaneseq
      %v1090 = vshrl.u32 %v1089, 7
      %v1091 = vsub.s32 0, %v1090
      %v1092 = vrot.slane %v830, %v1091
      %v1093 = vlaneseq
      %v1094 = vshrl.u32 %v1093, 7
      %v1095 = vsub.s32 0, %v1094
      %v1096 = vrot.slane %v844, %v1095
      %v1097 = vlaneseq
      %v1098 = vshrl.u32 %v1097, 7
      %v1099 = vsub.s32 0, %v1098
      %v1100 = vrot.slane %v846, %v1099
      %v1101 = vlaneseq
      %v1102 = vshrl.u32 %v1101, 7
      %v1103 = vsub.s32 0, %v1102
      %v1104 = vrot.slane %v848, %v1103
      %v1105 = vcombine.low %v852, %v856
      %v1106 = vcombine.low %v860, %v864
      %v1108 = vunpack.c.l.s4 1983009808
      %v1109 = vunpack.c.0.s8 %v1108
      %v1110 = vlaneseq
      %v1111 = vshrl.u32 %v1110, 7
      %v1112 = vsub.s32 %v1109, %v1111
      %v1113 = vrot.slane %v1105, %v1112
      %v1115 = vunpack.c.l.s4 1983009808
      %v1116 = vunpack.c.0.s8 %v1115
      %v1117 = vlaneseq
      %v1118 = vshrl.u32 %v1117, 7
      %v1119 = vsub.s32 %v1116, %v1118
      %v1120 = vrot.slane %v1106, %v1119
      %v1121 = vcombine.low %v1113, %v1120
      %v1122 = vcombine.low %v868, %v872
      %v1123 = vcombine.low %v876, %v880
      %v1125 = vunpack.c.l.s4 1983009808
      %v1126 = vunpack.c.0.s8 %v1125
      %v1127 = vlaneseq
      %v1128 = vshrl.u32 %v1127, 7
      %v1129 = vsub.s32 %v1126, %v1128
      %v1130 = vrot.slane %v1122, %v1129
      %v1132 = vunpack.c.l.s4 1983009808
      %v1133 = vunpack.c.0.s8 %v1132
      %v1134 = vlaneseq
      %v1135 = vshrl.u32 %v1134, 7
      %v1136 = vsub.s32 %v1133, %v1135
      %v1137 = vrot.slane %v1123, %v1136
      %v1138 = vcombine.low %v1130, %v1137
      %v1139 = vcombine.low %v884, %v888
      %v1140 = vcombine.low %v892, %v896
      %v1142 = vunpack.c.l.s4 1983009808
      %v1143 = vunpack.c.0.s8 %v1142
      %v1144 = vlaneseq
      %v1145 = vshrl.u32 %v1144, 7
      %v1146 = vsub.s32 %v1143, %v1145
      %v1147 = vrot.slane %v1139, %v1146
      %v1149 = vunpack.c.l.s4 1983009808
      %v1150 = vunpack.c.0.s8 %v1149
      %v1151 = vlaneseq
      %v1152 = vshrl.u32 %v1151, 7
      %v1153 = vsub.s32 %v1150, %v1152
      %v1154 = vrot.slane %v1140, %v1153
      %v1155 = vcombine.low %v1147, %v1154
      %v1156 = vcombine.low %v900, %v904
      %v1157 = vcombine.low %v908, %v912
      %v1159 = vunpack.c.l.s4 1983009808
      %v1160 = vunpack.c.0.s8 %v1159
      %v1161 = vlaneseq
      %v1162 = vshrl.u32 %v1161, 7
      %v1163 = vsub.s32 %v1160, %v1162
      %v1164 = vrot.slane %v1156, %v1163
      %v1166 = vunpack.c.l.s4 1983009808
      %v1167 = vunpack.c.0.s8 %v1166
      %v1168 = vlaneseq
      %v1169 = vshrl.u32 %v1168, 7
      %v1170 = vsub.s32 %v1167, %v1169
      %v1171 = vrot.slane %v1157, %v1170
      %v1172 = vcombine.low %v1164, %v1171
      %v1173 = vcombine.low %v916, %v920
      %v1174 = vcombine.low %v924, %v928
      %v1176 = vunpack.c.l.s4 1983009808
      %v1177 = vunpack.c.0.s8 %v1176
      %v1178 = vlaneseq
      %v1179 = vshrl.u32 %v1178, 7
      %v1180 = vsub.s32 %v1177, %v1179
      %v1181 = vrot.slane %v1173, %v1180
      %v1183 = vunpack.c.l.s4 1983009808
      %v1184 = vunpack.c.0.s8 %v1183
      %v1185 = vlaneseq
      %v1186 = vshrl.u32 %v1185, 7
      %v1187 = vsub.s32 %v1184, %v1186
      %v1188 = vrot.slane %v1174, %v1187
      %v1189 = vcombine.low %v1181, %v1188
      %v1190 = vcombine.low %v932, %v936
      %v1191 = vcombine.low %v940, %v944
      %v1193 = vunpack.c.l.s4 1983009808
      %v1194 = vunpack.c.0.s8 %v1193
      %v1195 = vlaneseq
      %v1196 = vshrl.u32 %v1195, 7
      %v1197 = vsub.s32 %v1194, %v1196
      %v1198 = vrot.slane %v1190, %v1197
      %v1200 = vunpack.c.l.s4 1983009808
      %v1201 = vunpack.c.0.s8 %v1200
      %v1202 = vlaneseq
      %v1203 = vshrl.u32 %v1202, 7
      %v1204 = vsub.s32 %v1201, %v1203
      %v1205 = vrot.slane %v1191, %v1204
      %v1206 = vcombine.low %v1198, %v1205
      %v1207 = vcombine.low %v948, %v952
      %v1208 = vcombine.low %v956, %v960
      %v1210 = vunpack.c.l.s4 1983009808
      %v1211 = vunpack.c.0.s8 %v1210
      %v1212 = vlaneseq
      %v1213 = vshrl.u32 %v1212, 7
      %v1214 = vsub.s32 %v1211, %v1213
      %v1215 = vrot.slane %v1207, %v1214
      %v1217 = vunpack.c.l.s4 1983009808
      %v1218 = vunpack.c.0.s8 %v1217
      %v1219 = vlaneseq
      %v1220 = vshrl.u32 %v1219, 7
      %v1221 = vsub.s32 %v1218, %v1220
      %v1222 = vrot.slane %v1208, %v1221
      %v1223 = vcombine.low %v1215, %v1222
      %v1224 = vcombine.low %v964, %v968
      %v1225 = vcombine.low %v972, %v976
      %v1227 = vunpack.c.l.s4 1983009808
      %v1228 = vunpack.c.0.s8 %v1227
      %v1229 = vlaneseq
      %v1230 = vshrl.u32 %v1229, 7
      %v1231 = vsub.s32 %v1228, %v1230
      %v1232 = vrot.slane %v1224, %v1231
      %v1234 = vunpack.c.l.s4 1983009808
      %v1235 = vunpack.c.0.s8 %v1234
      %v1236 = vlaneseq
      %v1237 = vshrl.u32 %v1236, 7
      %v1238 = vsub.s32 %v1235, %v1237
      %v1239 = vrot.slane %v1225, %v1238
      %v1240 = vcombine.low %v1232, %v1239
      %v1241 = vcombine.low %v980, %v984
      %v1242 = vcombine.low %v988, %v992
      %v1244 = vunpack.c.l.s4 1983009808
      %v1245 = vunpack.c.0.s8 %v1244
      %v1246 = vlaneseq
      %v1247 = vshrl.u32 %v1246, 7
      %v1248 = vsub.s32 %v1245, %v1247
      %v1249 = vrot.slane %v1241, %v1248
      %v1251 = vunpack.c.l.s4 1983009808
      %v1252 = vunpack.c.0.s8 %v1251
      %v1253 = vlaneseq
      %v1254 = vshrl.u32 %v1253, 7
      %v1255 = vsub.s32 %v1252, %v1254
      %v1256 = vrot.slane %v1242, %v1255
      %v1257 = vcombine.low %v1249, %v1256
      %v1258 = vcombine.low %v996, %v1000
      %v1259 = vcombine.low %v1004, %v1008
      %v1261 = vunpack.c.l.s4 1983009808
      %v1262 = vunpack.c.0.s8 %v1261
      %v1263 = vlaneseq
      %v1264 = vshrl.u32 %v1263, 7
      %v1265 = vsub.s32 %v1262, %v1264
      %v1266 = vrot.slane %v1258, %v1265
      %v1268 = vunpack.c.l.s4 1983009808
      %v1269 = vunpack.c.0.s8 %v1268
      %v1270 = vlaneseq
      %v1271 = vshrl.u32 %v1270, 7
      %v1272 = vsub.s32 %v1269, %v1271
      %v1273 = vrot.slane %v1259, %v1272
      %v1274 = vcombine.low %v1266, %v1273
      %v1275 = vcombine.low %v1012, %v1016
      %v1276 = vcombine.low %v1020, %v1024
      %v1278 = vunpack.c.l.s4 1983009808
      %v1279 = vunpack.c.0.s8 %v1278
      %v1280 = vlaneseq
      %v1281 = vshrl.u32 %v1280, 7
      %v1282 = vsub.s32 %v1279, %v1281
      %v1283 = vrot.slane %v1275, %v1282
      %v1285 = vunpack.c.l.s4 1983009808
      %v1286 = vunpack.c.0.s8 %v1285
      %v1287 = vlaneseq
      %v1288 = vshrl.u32 %v1287, 7
      %v1289 = vsub.s32 %v1286, %v1288
      %v1290 = vrot.slane %v1276, %v1289
      %v1291 = vcombine.low %v1283, %v1290
      %v1292 = vcombine.low %v1028, %v1032
      %v1293 = vcombine.low %v1036, %v1040
      %v1295 = vunpack.c.l.s4 1983009808
      %v1296 = vunpack.c.0.s8 %v1295
      %v1297 = vlaneseq
      %v1298 = vshrl.u32 %v1297, 7
      %v1299 = vsub.s32 %v1296, %v1298
      %v1300 = vrot.slane %v1292, %v1299
      %v1302 = vunpack.c.l.s4 1983009808
      %v1303 = vunpack.c.0.s8 %v1302
      %v1304 = vlaneseq
      %v1305 = vshrl.u32 %v1304, 7
      %v1306 = vsub.s32 %v1303, %v1305
      %v1307 = vrot.slane %v1293, %v1306
      %v1308 = vcombine.low %v1300, %v1307
      %v1309 = vcombine.low %v1044, %v1048
      %v1310 = vcombine.low %v1052, %v1056
      %v1312 = vunpack.c.l.s4 1983009808
      %v1313 = vunpack.c.0.s8 %v1312
      %v1314 = vlaneseq
      %v1315 = vshrl.u32 %v1314, 7
      %v1316 = vsub.s32 %v1313, %v1315
      %v1317 = vrot.slane %v1309, %v1316
      %v1319 = vunpack.c.l.s4 1983009808
      %v1320 = vunpack.c.0.s8 %v1319
      %v1321 = vlaneseq
      %v1322 = vshrl.u32 %v1321, 7
      %v1323 = vsub.s32 %v1320, %v1322
      %v1324 = vrot.slane %v1310, %v1323
      %v1325 = vcombine.low %v1317, %v1324
      %v1326 = vcombine.low %v1060, %v1064
      %v1327 = vcombine.low %v1068, %v1072
      %v1329 = vunpack.c.l.s4 1983009808
      %v1330 = vunpack.c.0.s8 %v1329
      %v1331 = vlaneseq
      %v1332 = vshrl.u32 %v1331, 7
      %v1333 = vsub.s32 %v1330, %v1332
      %v1334 = vrot.slane %v1326, %v1333
      %v1336 = vunpack.c.l.s4 1983009808
      %v1337 = vunpack.c.0.s8 %v1336
      %v1338 = vlaneseq
      %v1339 = vshrl.u32 %v1338, 7
      %v1340 = vsub.s32 %v1337, %v1339
      %v1341 = vrot.slane %v1327, %v1340
      %v1342 = vcombine.low %v1334, %v1341
      %v1343 = vcombine.low %v1076, %v1080
      %v1344 = vcombine.low %v1084, %v1088
      %v1346 = vunpack.c.l.s4 1983009808
      %v1347 = vunpack.c.0.s8 %v1346
      %v1348 = vlaneseq
      %v1349 = vshrl.u32 %v1348, 7
      %v1350 = vsub.s32 %v1347, %v1349
      %v1351 = vrot.slane %v1343, %v1350
      %v1353 = vunpack.c.l.s4 1983009808
      %v1354 = vunpack.c.0.s8 %v1353
      %v1355 = vlaneseq
      %v1356 = vshrl.u32 %v1355, 7
      %v1357 = vsub.s32 %v1354, %v1356
      %v1358 = vrot.slane %v1344, %v1357
      %v1359 = vcombine.low %v1351, %v1358
      %v1360 = vcombine.low %v1092, %v1096
      %v1361 = vcombine.low %v1100, %v1104
      %v1363 = vunpack.c.l.s4 1983009808
      %v1364 = vunpack.c.0.s8 %v1363
      %v1365 = vlaneseq
      %v1366 = vshrl.u32 %v1365, 7
      %v1367 = vsub.s32 %v1364, %v1366
      %v1368 = vrot.slane %v1360, %v1367
      %v1370 = vunpack.c.l.s4 1983009808
      %v1371 = vunpack.c.0.s8 %v1370
      %v1372 = vlaneseq
      %v1373 = vshrl.u32 %v1372, 7
      %v1374 = vsub.s32 %v1371, %v1373
      %v1375 = vrot.slane %v1361, %v1374
      %v1376 = vcombine.low %v1368, %v1375
      %1377 = vrot.lane.b32.xlu0 %v1121, 8
      %v1378 = vpop.permute.xlu0 %1377
      %1379 = vrot.lane.b32.xlu0 %v1138, 8
      %v1380 = vpop.permute.xlu0 %1379
      %1381 = vrot.lane.b32.xlu0 %v1155, 8
      %v1382 = vpop.permute.xlu0 %1381
      %1383 = vrot.lane.b32.xlu0 %v1172, 8
      %v1384 = vpop.permute.xlu0 %1383
      %1385 = vrot.lane.b32.xlu0 %v1189, 8
      %v1386 = vpop.permute.xlu0 %1385
      %1387 = vrot.lane.b32.xlu0 %v1206, 8
      %v1388 = vpop.permute.xlu0 %1387
      %1389 = vrot.lane.b32.xlu0 %v1223, 8
      %v1390 = vpop.permute.xlu0 %1389
      %1391 = vrot.lane.b32.xlu0 %v1240, 8
      %v1392 = vpop.permute.xlu0 %1391
      %1393 = vrot.lane.b32.xlu0 %v1257, 8
      %v1394 = vpop.permute.xlu0 %1393
      %1395 = vrot.lane.b32.xlu0 %v1274, 8
      %v1396 = vpop.permute.xlu0 %1395
      %1397 = vrot.lane.b32.xlu0 %v1291, 8
      %v1398 = vpop.permute.xlu0 %1397
      %1399 = vrot.lane.b32.xlu0 %v1308, 8
      %v1400 = vpop.permute.xlu0 %1399
      %1401 = vrot.lane.b32.xlu0 %v1325, 8
      %v1402 = vpop.permute.xlu0 %1401
      %1403 = vrot.lane.b32.xlu0 %v1342, 8
      %v1404 = vpop.permute.xlu0 %1403
      %1405 = vrot.lane.b32.xlu0 %v1359, 8
      %v1406 = vpop.permute.xlu0 %1405
      %1407 = vrot.lane.b32.xlu0 %v1376, 8
      %v1408 = vpop.permute.xlu0 %1407
      %vm1425 = vcmask 130112
      %1426 = vst.msk [vmem:[%s334 + $0x1] sm:$0xff] %vm1425, %v1378
      %1427 = vst.msk [vmem:[%s334 + $0x9] sm:$0xff] %vm1425, %v1380
      %1428 = vst.msk [vmem:[%s334 + $0x19] sm:$0xff] %vm1425, %v1378
      %1429 = vst.msk [vmem:[%s334 + $0x21] sm:$0xff] %vm1425, %v1380
      %1430 = vst.msk [vmem:[%s334 + $0x31] sm:$0xff] %vm1425, %v1382
      %1431 = vst.msk [vmem:[%s334 + $0x39] sm:$0xff] %vm1425, %v1384
      %1432 = vst.msk [vmem:[%s334 + $0x49] sm:$0xff] %vm1425, %v1382
      %1433 = vst.msk [vmem:[%s334 + $0x51] sm:$0xff] %vm1425, %v1384
      %1434 = vst.msk [vmem:[%s334 + $0x61] sm:$0xff] %vm1425, %v1386
      %1435 = vst.msk [vmem:[%s334 + $0x69] sm:$0xff] %vm1425, %v1388
      %1436 = vst.msk [vmem:[%s334 + $0x79] sm:$0xff] %vm1425, %v1386
      %1437 = vst.msk [vmem:[%s334 + $0x81] sm:$0xff] %vm1425, %v1388
      %1438 = vst.msk [vmem:[%s334 + $0x91] sm:$0xff] %vm1425, %v1390
      %1439 = vst.msk [vmem:[%s334 + $0x99] sm:$0xff] %vm1425, %v1392
      %1440 = vst.msk [vmem:[%s334 + $0xa9] sm:$0xff] %vm1425, %v1390
      %1441 = vst.msk [vmem:[%s334 + $0xb1] sm:$0xff] %vm1425, %v1392
      %1442 = vst.msk [vmem:[%s334 + $0xc1] sm:$0xff] %vm1425, %v1394
      %1443 = vst.msk [vmem:[%s334 + $0xc9] sm:$0xff] %vm1425, %v1396
      %1444 = vst.msk [vmem:[%s334 + $0xd9] sm:$0xff] %vm1425, %v1394
      %1445 = vst.msk [vmem:[%s334 + $0xe1] sm:$0xff] %vm1425, %v1396
      %1446 = vst.msk [vmem:[%s334 + $0xf1] sm:$0xff] %vm1425, %v1398
      %1447 = vst.msk [vmem:[%s334 + $0xf9] sm:$0xff] %vm1425, %v1400
      %1448 = vst.msk [vmem:[%s334 + $0x109] sm:$0xff] %vm1425, %v1398
      %1449 = vst.msk [vmem:[%s334 + $0x111] sm:$0xff] %vm1425, %v1400
      %1450 = vst.msk [vmem:[%s334 + $0x121] sm:$0xff] %vm1425, %v1402
      %1451 = vst.msk [vmem:[%s334 + $0x129] sm:$0xff] %vm1425, %v1404
      %1452 = vst.msk [vmem:[%s334 + $0x139] sm:$0xff] %vm1425, %v1402
      %1453 = vst.msk [vmem:[%s334 + $0x141] sm:$0xff] %vm1425, %v1404
      %1454 = vst.msk [vmem:[%s334 + $0x151] sm:$0xff] %vm1425, %v1406
      %1455 = vst.msk [vmem:[%s334 + $0x159] sm:$0xff] %vm1425, %v1408
      %1456 = vst.msk [vmem:[%s334 + $0x169] sm:$0xff] %vm1425, %v1406
      %1457 = vst.msk [vmem:[%s334 + $0x171] sm:$0xff] %vm1425, %v1408
      %v1458 = vlaneseq
      %v1459 = vshrl.u32 %v1458, 7
      %v1460 = vadd.s32 %v1459, 8
      %v1461 = vadd.s32 %v1459, 16
      %vm1462 = vcmp.lt.s32.totalorder %v1459, 16
      %vm1463 = vcmp.lt.s32.totalorder %v1460, 16
      %vm1464 = vcmp.lt.s32.totalorder %v1461, 16
      %v1465 = vld [vmem:[#allocation2] sm:$0xff]
      %v1466 = vld [vmem:[#allocation2 + $0x8] sm:$0xff]
      %v1467 = vld [vmem:[#allocation2 + $0x10] sm:$0xff]
      %v1468 = vld [vmem:[#allocation2 + $0x18] sm:$0xff]
      %v1469 = vld [vmem:[#allocation2 + $0x20] sm:$0xff]
      %v1470 = vld [vmem:[#allocation2 + $0x28] sm:$0xff]
      %v1471 = vld [vmem:[#allocation2 + $0x30] sm:$0xff]
      %v1472 = vld [vmem:[#allocation2 + $0x38] sm:$0xff]
      %v1473 = vld [vmem:[#allocation2 + $0x40] sm:$0xff]
      %v1474 = vld [vmem:[#allocation2 + $0x48] sm:$0xff]
      %v1475 = vld [vmem:[#allocation2 + $0x50] sm:$0xff]
      %v1476 = vld [vmem:[#allocation2 + $0x58] sm:$0xff]
      %v1477 = vld [vmem:[#allocation2 + $0x60] sm:$0xff]
      %v1478 = vld [vmem:[#allocation2 + $0x68] sm:$0xff]
      %v1479 = vld [vmem:[#allocation2 + $0x70] sm:$0xff]
      %v1480 = vld [vmem:[#allocation2 + $0x78] sm:$0xff]
      %v1481 = vld [vmem:[#allocation2 + $0x80] sm:$0xff]
      %v1482 = vld [vmem:[#allocation2 + $0x88] sm:$0xff]
      %v1483 = vld [vmem:[#allocation2 + $0x90] sm:$0xff]
      %v1484 = vld [vmem:[#allocation2 + $0x98] sm:$0xff]
      %v1485 = vld [vmem:[#allocation2 + $0xa0] sm:$0xff]
      %v1486 = vld [vmem:[#allocation2 + $0xa8] sm:$0xff]
      %v1487 = vld [vmem:[#allocation2 + $0xb0] sm:$0xff]
      %v1488 = vld [vmem:[#allocation2 + $0xb8] sm:$0xff]
      %v1489 = vld [vmem:[#allocation2 + $0xc0] sm:$0xff]
      %v1490 = vld [vmem:[#allocation2 + $0xc8] sm:$0xff]
      %v1491 = vld [vmem:[#allocation2 + $0xd0] sm:$0xff]
      %v1492 = vld [vmem:[#allocation2 + $0xd8] sm:$0xff]
      %v1493 = vld [vmem:[#allocation2 + $0xe0] sm:$0xff]
      %v1494 = vld [vmem:[#allocation2 + $0xe8] sm:$0xff]
      %v1495 = vld [vmem:[#allocation2 + $0xf0] sm:$0xff]
      %v1496 = vld [vmem:[#allocation2 + $0xf8] sm:$0xff]
      %v1497 = vld [vmem:[#allocation2 + $0x100] sm:$0xff]
      %v1498 = vld [vmem:[#allocation2 + $0x108] sm:$0xff]
      %v1499 = vld [vmem:[#allocation2 + $0x110] sm:$0xff]
      %v1500 = vld [vmem:[#allocation2 + $0x118] sm:$0xff]
      %v1501 = vld [vmem:[#allocation2 + $0x120] sm:$0xff]
      %v1502 = vld [vmem:[#allocation2 + $0x128] sm:$0xff]
      %v1503 = vld [vmem:[#allocation2 + $0x130] sm:$0xff]
      %v1504 = vld [vmem:[#allocation2 + $0x138] sm:$0xff]
      %v1505 = vld [vmem:[#allocation2 + $0x140] sm:$0xff]
      %v1506 = vld [vmem:[#allocation2 + $0x148] sm:$0xff]
      %v1507 = vld [vmem:[#allocation2 + $0x150] sm:$0xff]
      %v1508 = vld [vmem:[#allocation2 + $0x158] sm:$0xff]
      %v1509 = vld [vmem:[#allocation2 + $0x160] sm:$0xff]
      %v1510 = vld [vmem:[#allocation2 + $0x168] sm:$0xff]
      %v1511 = vld [vmem:[#allocation2 + $0x170] sm:$0xff]
      %v1512 = vld [vmem:[#allocation2 + $0x178] sm:$0xff]
      %v1513 = vld [vmem:[#allocation2 + $0x180] sm:$0xff]
      %v1514 = vld [vmem:[#allocation2 + $0x188] sm:$0xff]
      %v1515 = vld [vmem:[#allocation2 + $0x190] sm:$0xff]
      %v1516 = vld [vmem:[#allocation2 + $0x198] sm:$0xff]
      %v1517 = vld [vmem:[#allocation2 + $0x1a0] sm:$0xff]
      %v1518 = vld [vmem:[#allocation2 + $0x1a8] sm:$0xff]
      %v1519 = vld [vmem:[#allocation2 + $0x1b0] sm:$0xff]
      %vm1569 = vcmask 1046528
      %v1570 = vrot.slane %v1465, 1
      %v1571 = vrot.slane %v1466, 1
      %v1572 = vsel %vm1569, %v1570, %v1571
      %v1573 = vrot.slane %v1467, 1
      %v1574 = vsel %vm1569, %v1571, %v1573
      %v1575 = vrot.slane %v1468, 1
      %v1576 = vsel %vm1569, %v1573, %v1575
      %v1577 = vrot.slane %v1469, 1
      %v1578 = vsel %vm1569, %v1575, %v1577
      %v1579 = vrot.slane %v1470, 1
      %v1580 = vsel %vm1569, %v1577, %v1579
      %v1581 = vrot.slane %v1471, 1
      %v1582 = vsel %vm1569, %v1579, %v1581
      %v1583 = vrot.slane %v1472, 1
      %v1584 = vsel %vm1569, %v1581, %v1583
      %v1585 = vrot.slane %v1473, 1
      %v1586 = vsel %vm1569, %v1583, %v1585
      %v1587 = vrot.slane %v1474, 1
      %v1588 = vsel %vm1569, %v1585, %v1587
      %v1589 = vrot.slane %v1475, 1
      %v1590 = vsel %vm1569, %v1587, %v1589
      %v1591 = vrot.slane %v1476, 1
      %v1592 = vsel %vm1569, %v1589, %v1591
      %v1593 = vrot.slane %v1477, 1
      %v1594 = vsel %vm1569, %v1591, %v1593
      %v1595 = vrot.slane %v1478, 1
      %v1596 = vsel %vm1569, %v1593, %v1595
      %v1597 = vrot.slane %v1479, 1
      %v1598 = vsel %vm1569, %v1595, %v1597
      %v1599 = vrot.slane %v1480, 1
      %v1600 = vsel %vm1569, %v1597, %v1599
      %v1601 = vrot.slane %v1481, 1
      %v1602 = vsel %vm1569, %v1599, %v1601
      %v1603 = vrot.slane %v1482, 1
      %v1604 = vsel %vm1569, %v1601, %v1603
      %v1605 = vrot.slane %v1483, 1
      %v1606 = vsel %vm1569, %v1603, %v1605
      %v1607 = vrot.slane %v1484, 1
      %v1608 = vsel %vm1569, %v1605, %v1607
      %v1609 = vrot.slane %v1485, 1
      %v1610 = vsel %vm1569, %v1607, %v1609
      %v1611 = vrot.slane %v1486, 1
      %v1612 = vsel %vm1569, %v1609, %v1611
      %v1613 = vrot.slane %v1487, 1
      %v1614 = vsel %vm1569, %v1611, %v1613
      %v1615 = vrot.slane %v1488, 1
      %v1616 = vsel %vm1569, %v1613, %v1615
      %v1617 = vrot.slane %v1489, 1
      %v1618 = vsel %vm1569, %v1615, %v1617
      %v1619 = vrot.slane %v1490, 1
      %v1620 = vsel %vm1569, %v1617, %v1619
      %v1621 = vrot.slane %v1491, 1
      %v1622 = vsel %vm1569, %v1619, %v1621
      %v1623 = vrot.slane %v1492, 1
      %v1624 = vsel %vm1569, %v1621, %v1623
      %v1625 = vrot.slane %v1493, 1
      %v1626 = vsel %vm1569, %v1623, %v1625
      %v1627 = vrot.slane %v1494, 1
      %v1628 = vsel %vm1569, %v1625, %v1627
      %v1629 = vrot.slane %v1495, 1
      %v1630 = vsel %vm1569, %v1627, %v1629
      %v1631 = vrot.slane %v1496, 1
      %v1632 = vsel %vm1569, %v1629, %v1631
      %v1633 = vrot.slane %v1497, 1
      %v1634 = vsel %vm1569, %v1631, %v1633
      %v1635 = vrot.slane %v1498, 1
      %v1636 = vsel %vm1569, %v1633, %v1635
      %v1637 = vrot.slane %v1499, 1
      %v1638 = vsel %vm1569, %v1635, %v1637
      %v1639 = vrot.slane %v1500, 1
      %v1640 = vsel %vm1569, %v1637, %v1639
      %v1641 = vrot.slane %v1501, 1
      %v1642 = vsel %vm1569, %v1639, %v1641
      %v1643 = vrot.slane %v1502, 1
      %v1644 = vsel %vm1569, %v1641, %v1643
      %v1645 = vrot.slane %v1503, 1
      %v1646 = vsel %vm1569, %v1643, %v1645
      %v1647 = vrot.slane %v1504, 1
      %v1648 = vsel %vm1569, %v1645, %v1647
      %v1649 = vrot.slane %v1505, 1
      %v1650 = vsel %vm1569, %v1647, %v1649
      %v1651 = vrot.slane %v1506, 1
      %v1652 = vsel %vm1569, %v1649, %v1651
      %v1653 = vrot.slane %v1507, 1
      %v1654 = vsel %vm1569, %v1651, %v1653
      %v1655 = vrot.slane %v1508, 1
      %v1656 = vsel %vm1569, %v1653, %v1655
      %v1657 = vrot.slane %v1509, 1
      %v1658 = vsel %vm1569, %v1655, %v1657
      %v1659 = vrot.slane %v1510, 1
      %v1660 = vsel %vm1569, %v1657, %v1659
      %v1661 = vrot.slane %v1511, 1
      %v1662 = vsel %vm1569, %v1659, %v1661
      %v1663 = vrot.slane %v1512, 1
      %v1664 = vsel %vm1569, %v1661, %v1663
      %v1665 = vrot.slane %v1513, 1
      %v1666 = vsel %vm1569, %v1663, %v1665
      %1667 = vrot.lane.b32.xlu0 %v1572, 16
      %v1668 = vpop.permute.xlu0 %1667
      %1669 = vrot.lane.b32.xlu0 %v1574, 16
      %v1670 = vpop.permute.xlu0 %1669
      %1671 = vrot.lane.b32.xlu0 %v1576, 16
      %v1672 = vpop.permute.xlu0 %1671
      %1673 = vrot.lane.b32.xlu0 %v1578, 16
      %v1674 = vpop.permute.xlu0 %1673
      %1675 = vrot.lane.b32.xlu0 %v1580, 16
      %v1676 = vpop.permute.xlu0 %1675
      %1677 = vrot.lane.b32.xlu0 %v1582, 16
      %v1678 = vpop.permute.xlu0 %1677
      %1679 = vrot.lane.b32.xlu0 %v1584, 16
      %v1680 = vpop.permute.xlu0 %1679
      %1681 = vrot.lane.b32.xlu0 %v1586, 16
      %v1682 = vpop.permute.xlu0 %1681
      %1683 = vrot.lane.b32.xlu0 %v1588, 16
      %v1684 = vpop.permute.xlu0 %1683
      %1685 = vrot.lane.b32.xlu0 %v1590, 16
      %v1686 = vpop.permute.xlu0 %1685
      %1687 = vrot.lane.b32.xlu0 %v1592, 16
      %v1688 = vpop.permute.xlu0 %1687
      %1689 = vrot.lane.b32.xlu0 %v1594, 16
      %v1690 = vpop.permute.xlu0 %1689
      %1691 = vrot.lane.b32.xlu0 %v1596, 16
      %v1692 = vpop.permute.xlu0 %1691
      %1693 = vrot.lane.b32.xlu0 %v1598, 16
      %v1694 = vpop.permute.xlu0 %1693
      %1695 = vrot.lane.b32.xlu0 %v1600, 16
      %v1696 = vpop.permute.xlu0 %1695
      %1697 = vrot.lane.b32.xlu0 %v1602, 16
      %v1698 = vpop.permute.xlu0 %1697
      %1699 = vrot.lane.b32.xlu0 %v1604, 16
      %v1700 = vpop.permute.xlu0 %1699
      %1701 = vrot.lane.b32.xlu0 %v1606, 16
      %v1702 = vpop.permute.xlu0 %1701
      %1703 = vrot.lane.b32.xlu0 %v1608, 16
      %v1704 = vpop.permute.xlu0 %1703
      %1705 = vrot.lane.b32.xlu0 %v1610, 16
      %v1706 = vpop.permute.xlu0 %1705
      %1707 = vrot.lane.b32.xlu0 %v1612, 16
      %v1708 = vpop.permute.xlu0 %1707
      %1709 = vrot.lane.b32.xlu0 %v1614, 16
      %v1710 = vpop.permute.xlu0 %1709
      %1711 = vrot.lane.b32.xlu0 %v1616, 16
      %v1712 = vpop.permute.xlu0 %1711
      %1713 = vrot.lane.b32.xlu0 %v1618, 16
      %v1714 = vpop.permute.xlu0 %1713
      %1715 = vrot.lane.b32.xlu0 %v1620, 16
      %v1716 = vpop.permute.xlu0 %1715
      %1717 = vrot.lane.b32.xlu0 %v1622, 16
      %v1718 = vpop.permute.xlu0 %1717
      %1719 = vrot.lane.b32.xlu0 %v1624, 16
      %v1720 = vpop.permute.xlu0 %1719
      %1721 = vrot.lane.b32.xlu0 %v1626, 16
      %v1722 = vpop.permute.xlu0 %1721
      %1723 = vrot.lane.b32.xlu0 %v1628, 16
      %v1724 = vpop.permute.xlu0 %1723
      %1725 = vrot.lane.b32.xlu0 %v1630, 16
      %v1726 = vpop.permute.xlu0 %1725
      %1727 = vrot.lane.b32.xlu0 %v1632, 16
      %v1728 = vpop.permute.xlu0 %1727
      %1729 = vrot.lane.b32.xlu0 %v1634, 16
      %v1730 = vpop.permute.xlu0 %1729
      %1731 = vrot.lane.b32.xlu0 %v1636, 16
      %v1732 = vpop.permute.xlu0 %1731
      %1733 = vrot.lane.b32.xlu0 %v1638, 16
      %v1734 = vpop.permute.xlu0 %1733
      %1735 = vrot.lane.b32.xlu0 %v1640, 16
      %v1736 = vpop.permute.xlu0 %1735
      %1737 = vrot.lane.b32.xlu0 %v1642, 16
      %v1738 = vpop.permute.xlu0 %1737
      %1739 = vrot.lane.b32.xlu0 %v1644, 16
      %v1740 = vpop.permute.xlu0 %1739
      %1741 = vrot.lane.b32.xlu0 %v1646, 16
      %v1742 = vpop.permute.xlu0 %1741
      %1743 = vrot.lane.b32.xlu0 %v1648, 16
      %v1744 = vpop.permute.xlu0 %1743
      %1745 = vrot.lane.b32.xlu0 %v1650, 16
      %v1746 = vpop.permute.xlu0 %1745
      %1747 = vrot.lane.b32.xlu0 %v1652, 16
      %v1748 = vpop.permute.xlu0 %1747
      %1749 = vrot.lane.b32.xlu0 %v1654, 16
      %v1750 = vpop.permute.xlu0 %1749
      %1751 = vrot.lane.b32.xlu0 %v1656, 16
      %v1752 = vpop.permute.xlu0 %1751
      %1753 = vrot.lane.b32.xlu0 %v1658, 16
      %v1754 = vpop.permute.xlu0 %1753
      %1755 = vrot.lane.b32.xlu0 %v1660, 16
      %v1756 = vpop.permute.xlu0 %1755
      %1757 = vrot.lane.b32.xlu0 %v1662, 16
      %v1758 = vpop.permute.xlu0 %1757
      %1759 = vrot.lane.b32.xlu0 %v1664, 16
      %v1760 = vpop.permute.xlu0 %1759
      %1761 = vrot.lane.b32.xlu0 %v1666, 16
      %v1762 = vpop.permute.xlu0 %1761
      %vm1811 = vcmask 1045504
      %v1812 = vrot.slane %v1465, 2
      %v1813 = vrot.slane %v1466, 2
      %v1814 = vsel %vm1811, %v1812, %v1813
      %v1815 = vrot.slane %v1467, 2
      %v1816 = vsel %vm1811, %v1813, %v1815
      %v1817 = vrot.slane %v1468, 2
      %v1818 = vsel %vm1811, %v1815, %v1817
      %v1819 = vrot.slane %v1469, 2
      %v1820 = vsel %vm1811, %v1817, %v1819
      %v1821 = vrot.slane %v1470, 2
      %v1822 = vsel %vm1811, %v1819, %v1821
      %v1823 = vrot.slane %v1471, 2
      %v1824 = vsel %vm1811, %v1821, %v1823
      %v1825 = vrot.slane %v1472, 2
      %v1826 = vsel %vm1811, %v1823, %v1825
      %v1827 = vrot.slane %v1473, 2
      %v1828 = vsel %vm1811, %v1825, %v1827
      %v1829 = vrot.slane %v1474, 2
      %v1830 = vsel %vm1811, %v1827, %v1829
      %v1831 = vrot.slane %v1475, 2
      %v1832 = vsel %vm1811, %v1829, %v1831
      %v1833 = vrot.slane %v1476, 2
      %v1834 = vsel %vm1811, %v1831, %v1833
      %v1835 = vrot.slane %v1477, 2
      %v1836 = vsel %vm1811, %v1833, %v1835
      %v1837 = vrot.slane %v1478, 2
      %v1838 = vsel %vm1811, %v1835, %v1837
      %v1839 = vrot.slane %v1479, 2
      %v1840 = vsel %vm1811, %v1837, %v1839
      %v1841 = vrot.slane %v1480, 2
      %v1842 = vsel %vm1811, %v1839, %v1841
      %v1843 = vrot.slane %v1481, 2
      %v1844 = vsel %vm1811, %v1841, %v1843
      %v1845 = vrot.slane %v1482, 2
      %v1846 = vsel %vm1811, %v1843, %v1845
      %v1847 = vrot.slane %v1483, 2
      %v1848 = vsel %vm1811, %v1845, %v1847
      %v1849 = vrot.slane %v1484, 2
      %v1850 = vsel %vm1811, %v1847, %v1849
      %v1851 = vrot.slane %v1485, 2
      %v1852 = vsel %vm1811, %v1849, %v1851
      %v1853 = vrot.slane %v1486, 2
      %v1854 = vsel %vm1811, %v1851, %v1853
      %v1855 = vrot.slane %v1487, 2
      %v1856 = vsel %vm1811, %v1853, %v1855
      %v1857 = vrot.slane %v1488, 2
      %v1858 = vsel %vm1811, %v1855, %v1857
      %v1859 = vrot.slane %v1489, 2
      %v1860 = vsel %vm1811, %v1857, %v1859
      %v1861 = vrot.slane %v1490, 2
      %v1862 = vsel %vm1811, %v1859, %v1861
      %v1863 = vrot.slane %v1491, 2
      %v1864 = vsel %vm1811, %v1861, %v1863
      %v1865 = vrot.slane %v1492, 2
      %v1866 = vsel %vm1811, %v1863, %v1865
      %v1867 = vrot.slane %v1493, 2
      %v1868 = vsel %vm1811, %v1865, %v1867
      %v1869 = vrot.slane %v1494, 2
      %v1870 = vsel %vm1811, %v1867, %v1869
      %v1871 = vrot.slane %v1495, 2
      %v1872 = vsel %vm1811, %v1869, %v1871
      %v1873 = vrot.slane %v1496, 2
      %v1874 = vsel %vm1811, %v1871, %v1873
      %v1875 = vrot.slane %v1497, 2
      %v1876 = vsel %vm1811, %v1873, %v1875
      %v1877 = vrot.slane %v1498, 2
      %v1878 = vsel %vm1811, %v1875, %v1877
      %v1879 = vrot.slane %v1499, 2
      %v1880 = vsel %vm1811, %v1877, %v1879
      %v1881 = vrot.slane %v1500, 2
      %v1882 = vsel %vm1811, %v1879, %v1881
      %v1883 = vrot.slane %v1501, 2
      %v1884 = vsel %vm1811, %v1881, %v1883
      %v1885 = vrot.slane %v1502, 2
      %v1886 = vsel %vm1811, %v1883, %v1885
      %v1887 = vrot.slane %v1503, 2
      %v1888 = vsel %vm1811, %v1885, %v1887
      %v1889 = vrot.slane %v1504, 2
      %v1890 = vsel %vm1811, %v1887, %v1889
      %v1891 = vrot.slane %v1505, 2
      %v1892 = vsel %vm1811, %v1889, %v1891
      %v1893 = vrot.slane %v1506, 2
      %v1894 = vsel %vm1811, %v1891, %v1893
      %v1895 = vrot.slane %v1507, 2
      %v1896 = vsel %vm1811, %v1893, %v1895
      %v1897 = vrot.slane %v1508, 2
      %v1898 = vsel %vm1811, %v1895, %v1897
      %v1899 = vrot.slane %v1509, 2
      %v1900 = vsel %vm1811, %v1897, %v1899
      %v1901 = vrot.slane %v1510, 2
      %v1902 = vsel %vm1811, %v1899, %v1901
      %v1903 = vrot.slane %v1511, 2
      %v1904 = vsel %vm1811, %v1901, %v1903
      %v1905 = vrot.slane %v1512, 2
      %v1906 = vsel %vm1811, %v1903, %v1905
      %v1907 = vrot.slane %v1513, 2
      %v1908 = vsel %vm1811, %v1905, %v1907
      %1909 = vrot.lane.b32.xlu0 %v1814, 32
      %v1910 = vpop.permute.xlu0 %1909
      %1911 = vrot.lane.b32.xlu0 %v1816, 32
      %v1912 = vpop.permute.xlu0 %1911
      %1913 = vrot.lane.b32.xlu0 %v1818, 32
      %v1914 = vpop.permute.xlu0 %1913
      %1915 = vrot.lane.b32.xlu0 %v1820, 32
      %v1916 = vpop.permute.xlu0 %1915
      %1917 = vrot.lane.b32.xlu0 %v1822, 32
      %v1918 = vpop.permute.xlu0 %1917
      %1919 = vrot.lane.b32.xlu0 %v1824, 32
      %v1920 = vpop.permute.xlu0 %1919
      %1921 = vrot.lane.b32.xlu0 %v1826, 32
      %v1922 = vpop.permute.xlu0 %1921
      %1923 = vrot.lane.b32.xlu0 %v1828, 32
      %v1924 = vpop.permute.xlu0 %1923
      %1925 = vrot.lane.b32.xlu0 %v1830, 32
      %v1926 = vpop.permute.xlu0 %1925
      %1927 = vrot.lane.b32.xlu0 %v1832, 32
      %v1928 = vpop.permute.xlu0 %1927
      %1929 = vrot.lane.b32.xlu0 %v1834, 32
      %v1930 = vpop.permute.xlu0 %1929
      %1931 = vrot.lane.b32.xlu0 %v1836, 32
      %v1932 = vpop.permute.xlu0 %1931
      %1933 = vrot.lane.b32.xlu0 %v1838, 32
      %v1934 = vpop.permute.xlu0 %1933
      %1935 = vrot.lane.b32.xlu0 %v1840, 32
      %v1936 = vpop.permute.xlu0 %1935
      %1937 = vrot.lane.b32.xlu0 %v1842, 32
      %v1938 = vpop.permute.xlu0 %1937
      %1939 = vrot.lane.b32.xlu0 %v1844, 32
      %v1940 = vpop.permute.xlu0 %1939
      %1941 = vrot.lane.b32.xlu0 %v1846, 32
      %v1942 = vpop.permute.xlu0 %1941
      %1943 = vrot.lane.b32.xlu0 %v1848, 32
      %v1944 = vpop.permute.xlu0 %1943
      %1945 = vrot.lane.b32.xlu0 %v1850, 32
      %v1946 = vpop.permute.xlu0 %1945
      %1947 = vrot.lane.b32.xlu0 %v1852, 32
      %v1948 = vpop.permute.xlu0 %1947
      %1949 = vrot.lane.b32.xlu0 %v1854, 32
      %v1950 = vpop.permute.xlu0 %1949
      %1951 = vrot.lane.b32.xlu0 %v1856, 32
      %v1952 = vpop.permute.xlu0 %1951
      %1953 = vrot.lane.b32.xlu0 %v1858, 32
      %v1954 = vpop.permute.xlu0 %1953
      %1955 = vrot.lane.b32.xlu0 %v1860, 32
      %v1956 = vpop.permute.xlu0 %1955
      %1957 = vrot.lane.b32.xlu0 %v1862, 32
      %v1958 = vpop.permute.xlu0 %1957
      %1959 = vrot.lane.b32.xlu0 %v1864, 32
      %v1960 = vpop.permute.xlu0 %1959
      %1961 = vrot.lane.b32.xlu0 %v1866, 32
      %v1962 = vpop.permute.xlu0 %1961
      %1963 = vrot.lane.b32.xlu0 %v1868, 32
      %v1964 = vpop.permute.xlu0 %1963
      %1965 = vrot.lane.b32.xlu0 %v1870, 32
      %v1966 = vpop.permute.xlu0 %1965
      %1967 = vrot.lane.b32.xlu0 %v1872, 32
      %v1968 = vpop.permute.xlu0 %1967
      %1969 = vrot.lane.b32.xlu0 %v1874, 32
      %v1970 = vpop.permute.xlu0 %1969
      %1971 = vrot.lane.b32.xlu0 %v1876, 32
      %v1972 = vpop.permute.xlu0 %1971
      %1973 = vrot.lane.b32.xlu0 %v1878, 32
      %v1974 = vpop.permute.xlu0 %1973
      %1975 = vrot.lane.b32.xlu0 %v1880, 32
      %v1976 = vpop.permute.xlu0 %1975
      %1977 = vrot.lane.b32.xlu0 %v1882, 32
      %v1978 = vpop.permute.xlu0 %1977
      %1979 = vrot.lane.b32.xlu0 %v1884, 32
      %v1980 = vpop.permute.xlu0 %1979
      %1981 = vrot.lane.b32.xlu0 %v1886, 32
      %v1982 = vpop.permute.xlu0 %1981
      %1983 = vrot.lane.b32.xlu0 %v1888, 32
      %v1984 = vpop.permute.xlu0 %1983
      %1985 = vrot.lane.b32.xlu0 %v1890, 32
      %v1986 = vpop.permute.xlu0 %1985
      %1987 = vrot.lane.b32.xlu0 %v1892, 32
      %v1988 = vpop.permute.xlu0 %1987
      %1989 = vrot.lane.b32.xlu0 %v1894, 32
      %v1990 = vpop.permute.xlu0 %1989
      %1991 = vrot.lane.b32.xlu0 %v1896, 32
      %v1992 = vpop.permute.xlu0 %1991
      %1993 = vrot.lane.b32.xlu0 %v1898, 32
      %v1994 = vpop.permute.xlu0 %1993
      %1995 = vrot.lane.b32.xlu0 %v1900, 32
      %v1996 = vpop.permute.xlu0 %1995
      %1997 = vrot.lane.b32.xlu0 %v1902, 32
      %v1998 = vpop.permute.xlu0 %1997
      %1999 = vrot.lane.b32.xlu0 %v1904, 32
      %v2000 = vpop.permute.xlu0 %1999
      %2001 = vrot.lane.b32.xlu0 %v1906, 32
      %v2002 = vpop.permute.xlu0 %2001
      %2003 = vrot.lane.b32.xlu0 %v1908, 32
      %v2004 = vpop.permute.xlu0 %2003
      %v2053 = vsel %vm326, %v1465, %v1668
      %v2054 = vsel %vm326, %v1466, %v1670
      %v2055 = vsel %vm326, %v1467, %v1672
      %v2056 = vsel %vm326, %v1468, %v1674
      %v2057 = vsel %vm326, %v1469, %v1676
      %v2058 = vsel %vm326, %v1470, %v1678
      %v2059 = vsel %vm326, %v1471, %v1680
      %v2060 = vsel %vm326, %v1472, %v1682
      %v2061 = vsel %vm326, %v1473, %v1684
      %v2062 = vsel %vm326, %v1474, %v1686
      %v2063 = vsel %vm326, %v1475, %v1688
      %v2064 = vsel %vm326, %v1476, %v1690
      %v2065 = vsel %vm326, %v1477, %v1692
      %v2066 = vsel %vm326, %v1478, %v1694
      %v2067 = vsel %vm326, %v1479, %v1696
      %v2068 = vsel %vm326, %v1480, %v1698
      %v2069 = vsel %vm326, %v1481, %v1700
      %v2070 = vsel %vm326, %v1482, %v1702
      %v2071 = vsel %vm326, %v1483, %v1704
      %v2072 = vsel %vm326, %v1484, %v1706
      %v2073 = vsel %vm326, %v1485, %v1708
      %v2074 = vsel %vm326, %v1486, %v1710
      %v2075 = vsel %vm326, %v1487, %v1712
      %v2076 = vsel %vm326, %v1488, %v1714
      %v2077 = vsel %vm326, %v1489, %v1716
      %v2078 = vsel %vm326, %v1490, %v1718
      %v2079 = vsel %vm326, %v1491, %v1720
      %v2080 = vsel %vm326, %v1492, %v1722
      %v2081 = vsel %vm326, %v1493, %v1724
      %v2082 = vsel %vm326, %v1494, %v1726
      %v2083 = vsel %vm326, %v1495, %v1728
      %v2084 = vsel %vm326, %v1496, %v1730
      %v2085 = vsel %vm326, %v1497, %v1732
      %v2086 = vsel %vm326, %v1498, %v1734
      %v2087 = vsel %vm326, %v1499, %v1736
      %v2088 = vsel %vm326, %v1500, %v1738
      %v2089 = vsel %vm326, %v1501, %v1740
      %v2090 = vsel %vm326, %v1502, %v1742
      %v2091 = vsel %vm326, %v1503, %v1744
      %v2092 = vsel %vm326, %v1504, %v1746
      %v2093 = vsel %vm326, %v1505, %v1748
      %v2094 = vsel %vm326, %v1506, %v1750
      %v2095 = vsel %vm326, %v1507, %v1752
      %v2096 = vsel %vm326, %v1508, %v1754
      %v2097 = vsel %vm326, %v1509, %v1756
      %v2098 = vsel %vm326, %v1510, %v1758
      %v2099 = vsel %vm326, %v1511, %v1760
      %v2100 = vsel %vm326, %v1512, %v1762
      %vm2101 = vcmask 261120
      %v2102 = vsel %vm2101, %v2053, %v1910
      %v2103 = vsel %vm2101, %v2054, %v1912
      %v2104 = vsel %vm2101, %v2055, %v1914
      %v2105 = vsel %vm2101, %v2056, %v1916
      %v2106 = vsel %vm2101, %v2057, %v1918
      %v2107 = vsel %vm2101, %v2058, %v1920
      %v2108 = vsel %vm2101, %v2059, %v1922
      %v2109 = vsel %vm2101, %v2060, %v1924
      %v2110 = vsel %vm2101, %v2061, %v1926
      %v2111 = vsel %vm2101, %v2062, %v1928
      %v2112 = vsel %vm2101, %v2063, %v1930
      %v2113 = vsel %vm2101, %v2064, %v1932
      %v2114 = vsel %vm2101, %v2065, %v1934
      %v2115 = vsel %vm2101, %v2066, %v1936
      %v2116 = vsel %vm2101, %v2067, %v1938
      %v2117 = vsel %vm2101, %v2068, %v1940
      %v2118 = vsel %vm2101, %v2069, %v1942
      %v2119 = vsel %vm2101, %v2070, %v1944
      %v2120 = vsel %vm2101, %v2071, %v1946
      %v2121 = vsel %vm2101, %v2072, %v1948
      %v2122 = vsel %vm2101, %v2073, %v1950
      %v2123 = vsel %vm2101, %v2074, %v1952
      %v2124 = vsel %vm2101, %v2075, %v1954
      %v2125 = vsel %vm2101, %v2076, %v1956
      %v2126 = vsel %vm2101, %v2077, %v1958
      %v2127 = vsel %vm2101, %v2078, %v1960
      %v2128 = vsel %vm2101, %v2079, %v1962
      %v2129 = vsel %vm2101, %v2080, %v1964
      %v2130 = vsel %vm2101, %v2081, %v1966
      %v2131 = vsel %vm2101, %v2082, %v1968
      %v2132 = vsel %vm2101, %v2083, %v1970
      %v2133 = vsel %vm2101, %v2084, %v1972
      %v2134 = vsel %vm2101, %v2085, %v1974
      %v2135 = vsel %vm2101, %v2086, %v1976
      %v2136 = vsel %vm2101, %v2087, %v1978
      %v2137 = vsel %vm2101, %v2088, %v1980
      %v2138 = vsel %vm2101, %v2089, %v1982
      %v2139 = vsel %vm2101, %v2090, %v1984
      %v2140 = vsel %vm2101, %v2091, %v1986
      %v2141 = vsel %vm2101, %v2092, %v1988
      %v2142 = vsel %vm2101, %v2093, %v1990
      %v2143 = vsel %vm2101, %v2094, %v1992
      %v2144 = vsel %vm2101, %v2095, %v1994
      %v2145 = vsel %vm2101, %v2096, %v1996
      %v2146 = vsel %vm2101, %v2097, %v1998
      %v2147 = vsel %vm2101, %v2098, %v2000
      %v2148 = vsel %vm2101, %v2099, %v2002
      %v2149 = vsel %vm2101, %v2100, %v2004
      %v2150 = vld [vmem:[%s2] sm:$0xff]
      %v2151 = vld [vmem:[%s2 + $0x8] sm:$0xff]
      %v2152 = vld [vmem:[%s2 + $0x10] sm:$0xff]
      %v2153 = vld [vmem:[%s2 + $0x18] sm:$0xff]
      %v2154 = vld [vmem:[%s2 + $0x20] sm:$0xff]
      %v2155 = vld [vmem:[%s2 + $0x28] sm:$0xff]
      %v2159 = vrot.slane %v1514, 1
      %v2160 = vsel %vm1569, %v1665, %v2159
      %v2161 = vrot.slane %v1515, 1
      %v2162 = vsel %vm1569, %v2159, %v2161
      %v2163 = vrot.slane %v1516, 1
      %v2164 = vsel %vm1569, %v2161, %v2163
      %2165 = vrot.lane.b32.xlu0 %v2160, 16
      %v2166 = vpop.permute.xlu0 %2165
      %2167 = vrot.lane.b32.xlu0 %v2162, 16
      %v2168 = vpop.permute.xlu0 %2167
      %2169 = vrot.lane.b32.xlu0 %v2164, 16
      %v2170 = vpop.permute.xlu0 %2169
      %v2174 = vrot.slane %v1514, 2
      %v2175 = vsel %vm1811, %v1907, %v2174
      %v2176 = vrot.slane %v1515, 2
      %v2177 = vsel %vm1811, %v2174, %v2176
      %v2178 = vrot.slane %v1516, 2
      %v2179 = vsel %vm1811, %v2176, %v2178
      %2180 = vrot.lane.b32.xlu0 %v2175, 32
      %v2181 = vpop.permute.xlu0 %2180
      %2182 = vrot.lane.b32.xlu0 %v2177, 32
      %v2183 = vpop.permute.xlu0 %2182
      %2184 = vrot.lane.b32.xlu0 %v2179, 32
      %v2185 = vpop.permute.xlu0 %2184
      %v2189 = vsel %vm326, %v1513, %v2166
      %v2190 = vsel %vm326, %v1514, %v2168
      %v2191 = vsel %vm326, %v1515, %v2170
      %v2192 = vsel %vm2101, %v2189, %v2181
      %v2193 = vsel %vm2101, %v2190, %v2183
      %v2194 = vsel %vm2101, %v2191, %v2185
      %s2195 = scalar_lea.vmem %s2, 48
      %v2196 = vld [vmem:[%s2195] sm:$0xff]
      %v2197 = vld [vmem:[%s2195 + $0x8] sm:$0xff]
      %v2198 = vld [vmem:[%s2195 + $0x10] sm:$0xff]
      %v2199 = vld [vmem:[%s2195 + $0x18] sm:$0xff]
      %v2200 = vld [vmem:[%s2195 + $0x20] sm:$0xff]
      %v2201 = vld [vmem:[%s2195 + $0x28] sm:$0xff]
      %vm2202 = vcmask 392192
      %v2204 = vsel %vm2202, %v2105, 0
      %v2207 = vsel %vm2202, %v2106, 0
      %v2210 = vsel %vm2202, %v2107, 0
      %v2213 = vsel %vm2202, %v2108, 0
      %v2216 = vsel %vm2202, %v2109, 0
      %v2219 = vsel %vm2202, %v2110, 0
      %v2222 = vsel %vm2202, %v2111, 0
      %v2225 = vsel %vm2202, %v2112, 0
      %v2228 = vsel %vm2202, %v2113, 0
      %v2231 = vsel %vm2202, %v2114, 0
      %v2234 = vsel %vm2202, %v2115, 0
      %v2237 = vsel %vm2202, %v2116, 0
      %v2240 = vsel %vm2202, %v2117, 0
      %v2243 = vsel %vm2202, %v2118, 0
      %v2246 = vsel %vm2202, %v2119, 0
      %v2249 = vsel %vm2202, %v2120, 0
      %v2252 = vsel %vm2202, %v2121, 0
      %v2255 = vsel %vm2202, %v2122, 0
      %v2258 = vsel %vm2202, %v2123, 0
      %v2261 = vsel %vm2202, %v2124, 0
      %v2264 = vsel %vm2202, %v2125, 0
      %v2267 = vsel %vm2202, %v2126, 0
      %v2270 = vsel %vm2202, %v2127, 0
      %v2273 = vsel %vm2202, %v2128, 0
      %v2276 = vsel %vm2202, %v2129, 0
      %v2279 = vsel %vm2202, %v2130, 0
      %v2282 = vsel %vm2202, %v2131, 0
      %v2285 = vsel %vm2202, %v2132, 0
      %v2288 = vsel %vm2202, %v2133, 0
      %v2291 = vsel %vm2202, %v2134, 0
      %v2294 = vsel %vm2202, %v2135, 0
      %v2297 = vsel %vm2202, %v2136, 0
      %v2300 = vsel %vm2202, %v2137, 0
      %v2303 = vsel %vm2202, %v2138, 0
      %v2306 = vsel %vm2202, %v2139, 0
      %v2309 = vsel %vm2202, %v2140, 0
      %v2312 = vsel %vm2202, %v2141, 0
      %v2315 = vsel %vm2202, %v2142, 0
      %v2318 = vsel %vm2202, %v2143, 0
      %v2321 = vsel %vm2202, %v2144, 0
      %v2324 = vsel %vm2202, %v2145, 0
      %v2327 = vsel %vm2202, %v2146, 0
      %v2330 = vsel %vm2202, %v2147, 0
      %v2333 = vsel %vm2202, %v2148, 0
      %v2336 = vsel %vm2202, %v2149, 0
      %v2339 = vsel %vm2202, %v2192, 0
      %v2342 = vsel %vm2202, %v2193, 0
      %v2345 = vsel %vm2202, %v2194, 0
      %2347 = vmatprep.subr.mxu0 0.0
      %2348 = vmatpush1.msra.mxu0 %v2196
      %2349 = vmatprep.subr.mxu0 0.0
      %2350 = vmatpush1.msra.mxu0 %v2197
      %2351 = vmatprep.subr.mxu0 0.0
      %2352 = vmatpush1.msra.mxu0 %v2198
      %2353 = vmatprep.subr.mxu0 0.0
      %2354 = vmatpush1.msra.mxu0 %v2199
      %2355 = vmatprep.subr.mxu0 0.0
      %2356 = vmatpush1.msra.mxu0 %v2200
      %2357 = vmatprep.subr.mxu0 0.0
      %2358 = vmatpush1.msra.mxu0 %v2201
      %2359 = vmatprep.subr.mxu0 0.0
      %2360 = vmatpush1.msra.mxu0 0.0
      %2361 = vmatprep.subr.mxu0 0.0
      %2362 = vmatpush1.msra.mxu0 0.0
      %2363 = vmatprep.subr.mxu0 0.0
      %2364 = vmatpush1.msra.mxu0 0.0
      %2365 = vmatprep.subr.mxu0 0.0
      %2366 = vmatpush1.msra.mxu0 0.0
      %2367 = vmatprep.subr.mxu0 0.0
      %2368 = vmatpush1.msra.mxu0 0.0
      %2369 = vmatprep.subr.mxu0 0.0
      %2370 = vmatpush1.msra.mxu0 0.0
      %2371 = vmatprep.subr.mxu0 0.0
      %2372 = vmatpush1.msra.mxu0 0.0
      %2373 = vmatprep.subr.mxu0 0.0
      %2374 = vmatpush1.msra.mxu0 0.0
      %2375 = vmatprep.subr.mxu0 0.0
      %2376 = vmatpush1.msra.mxu0 0.0
      %2377 = vmatprep.subr.mxu0 0.0
      %2378 = vmatpush1.msra.mxu0 0.0
      %2379 = vmatprep.subr.mxu0 0.0
      %2380 = vmatpush1.msra.mxu0 0.0
      %2381 = vmatprep.subr.mxu0 0.0
      %2382 = vmatpush1.msra.mxu0 0.0
      %2383 = vmatprep.subr.mxu0 0.0
      %2384 = vmatpush1.msra.mxu0 0.0
      %2385 = vmatprep.subr.mxu0 0.0
      %2386 = vmatpush1.msra.mxu0 0.0
      %2387 = vmatprep.subr.mxu0 0.0
      %2388 = vmatpush1.msra.mxu0 0.0
      %2389 = vmatprep.subr.mxu0 0.0
      %2390 = vmatpush1.msra.mxu0 0.0
      %2391 = vmatprep.subr.mxu0 0.0
      %2392 = vmatpush1.msra.mxu0 0.0
      %2393 = vmatprep.subr.mxu0 0.0
      %2394 = vmatpush1.msra.mxu0 0.0
      %2395 = vmatprep.subr.mxu0 0.0
      %2396 = vmatpush1.msra.mxu0 0.0
      %2397 = vmatprep.subr.mxu0 0.0
      %2398 = vmatpush1.msra.mxu0 0.0
      %2399 = vmatprep.subr.mxu0 0.0
      %2400 = vmatpush1.msra.mxu0 0.0
      %2401 = vmatprep.subr.mxu0 0.0
      %2402 = vmatpush1.msra.mxu0 0.0
      %2403 = vmatprep.subr.mxu0 0.0
      %2404 = vmatpush1.msra.mxu0 0.0
      %2405 = vmatprep.subr.mxu0 0.0
      %2406 = vmatpush1.msra.mxu0 0.0
      %2407 = vmatprep.subr.mxu0 0.0
      %2408 = vmatpush1.msra.mxu0 0.0
      %2409 = vmatprep.subr.mxu0 0.0
      %2410 = vmatpush1.msra.mxu0 0.0
      %2411 = vmatprep.mubr.f32.mxu0 0.0
      %2412 = vmatmul.mubr.f32.gmra.mrb[0].mxu0 %v2204
      %v2413 = vpop.f32.mrb[0].mxu0
      %v2414 = vadd.f32 0.0, %v2413
      %v2415 = vpop.f32.mrb[0].mxu0
      %2416 = vmatprep.mubr.f32.mxu0 0.0
      %2417 = vmatmul.mubr.f32.gmra.mrb[0].mxu0 %v2207
      %v2418 = vpop.f32.mrb[0].mxu0
      %v2419 = vadd.f32 0.0, %v2418
      %v2420 = vpop.f32.mrb[0].mxu0
      %2421 = vmatprep.mubr.f32.mxu0 0.0
      %2422 = vmatmul.mubr.f32.gmra.mrb[0].mxu0 %v2210
      %v2423 = vpop.f32.mrb[0].mxu0
      %v2424 = vadd.f32 0.0, %v2423
      %v2425 = vpop.f32.mrb[0].mxu0
      %2426 = vmatprep.mubr.f32.mxu0 0.0
      %2427 = vmatmul.mubr.f32.gmra.mrb[0].mxu0 %v2213
      %v2428 = vpop.f32.mrb[0].mxu0
      %v2429 = vadd.f32 0.0, %v2428
      %v2430 = vpop.f32.mrb[0].mxu0
      %2431 = vmatprep.mubr.f32.mxu0 0.0
      %2432 = vmatmul.mubr.f32.gmra.mrb[0].mxu0 %v2216
      %v2433 = vpop.f32.mrb[0].mxu0
      %v2434 = vadd.f32 0.0, %v2433
      %v2435 = vpop.f32.mrb[0].mxu0
      %2436 = vmatprep.mubr.f32.mxu0 0.0
      %2437 = vmatmul.mubr.f32.gmra.mrb[0].mxu0 %v2219
      %v2438 = vpop.f32.mrb[0].mxu0
      %v2439 = vadd.f32 0.0, %v2438
      %v2440 = vpop.f32.mrb[0].mxu0
      %2441 = vmatprep.mubr.f32.mxu0 0.0
      %2442 = vmatmul.mubr.f32.gmra.mrb[0].mxu0 %v2222
      %v2443 = vpop.f32.mrb[0].mxu0
      %v2444 = vadd.f32 0.0, %v2443
      %v2445 = vpop.f32.mrb[0].mxu0
      %2446 = vmatprep.mubr.f32.mxu0 0.0
      %2447 = vmatmul.mubr.f32.gmra.mrb[0].mxu0 %v2225
      %v2448 = vpop.f32.mrb[0].mxu0
      %v2449 = vadd.f32 0.0, %v2448
      %v2450 = vpop.f32.mrb[0].mxu0
      %2451 = vmatprep.mubr.f32.mxu0 0.0
      %2452 = vmatmul.mubr.f32.gmra.mrb[0].mxu0 %v2228
      %v2453 = vpop.f32.mrb[0].mxu0
      %v2454 = vadd.f32 0.0, %v2453
      %v2455 = vpop.f32.mrb[0].mxu0
      %2456 = vmatprep.mubr.f32.mxu0 0.0
      %2457 = vmatmul.mubr.f32.gmra.mrb[0].mxu0 %v2231
      %v2458 = vpop.f32.mrb[0].mxu0
      %v2459 = vadd.f32 0.0, %v2458
      %v2460 = vpop.f32.mrb[0].mxu0
      %2461 = vmatprep.mubr.f32.mxu0 0.0
      %2462 = vmatmul.mubr.f32.gmra.mrb[0].mxu0 %v2234
      %v2463 = vpop.f32.mrb[0].mxu0
      %v2464 = vadd.f32 0.0, %v2463
      %v2465 = vpop.f32.mrb[0].mxu0
      %2466 = vmatprep.mubr.f32.mxu0 0.0
      %2467 = vmatmul.mubr.f32.gmra.mrb[0].mxu0 %v2237
      %v2468 = vpop.f32.mrb[0].mxu0
      %v2469 = vadd.f32 0.0, %v2468
      %v2470 = vpop.f32.mrb[0].mxu0
      %2471 = vmatprep.mubr.f32.mxu0 0.0
      %2472 = vmatmul.mubr.f32.gmra.mrb[0].mxu0 %v2240
      %v2473 = vpop.f32.mrb[0].mxu0
      %v2474 = vadd.f32 0.0, %v2473
      %v2475 = vpop.f32.mrb[0].mxu0
      %2476 = vmatprep.mubr.f32.mxu0 0.0
      %2477 = vmatmul.mubr.f32.gmra.mrb[0].mxu0 %v2243
      %v2478 = vpop.f32.mrb[0].mxu0
      %v2479 = vadd.f32 0.0, %v2478
      %v2480 = vpop.f32.mrb[0].mxu0
      %2481 = vmatprep.mubr.f32.mxu0 0.0
      %2482 = vmatmul.mubr.f32.gmra.mrb[0].mxu0 %v2246
      %v2483 = vpop.f32.mrb[0].mxu0
      %v2484 = vadd.f32 0.0, %v2483
      %v2485 = vpop.f32.mrb[0].mxu0
      %2486 = vmatprep.mubr.f32.mxu0 0.0
      %2487 = vmatmul.mubr.f32.gmra.mrb[0].mxu0 %v2249
      %v2488 = vpop.f32.mrb[0].mxu0
      %v2489 = vadd.f32 0.0, %v2488
      %v2490 = vpop.f32.mrb[0].mxu0
      %2491 = vmatprep.mubr.f32.mxu0 0.0
      %2492 = vmatmul.mubr.f32.gmra.mrb[0].mxu0 %v2252
      %v2493 = vpop.f32.mrb[0].mxu0
      %v2494 = vadd.f32 0.0, %v2493
      %v2495 = vpop.f32.mrb[0].mxu0
      %2496 = vmatprep.mubr.f32.mxu0 0.0
      %2497 = vmatmul.mubr.f32.gmra.mrb[0].mxu0 %v2255
      %v2498 = vpop.f32.mrb[0].mxu0
      %v2499 = vadd.f32 0.0, %v2498
      %v2500 = vpop.f32.mrb[0].mxu0
      %2501 = vmatprep.mubr.f32.mxu0 0.0
      %2502 = vmatmul.mubr.f32.gmra.mrb[0].mxu0 %v2258
      %v2503 = vpop.f32.mrb[0].mxu0
      %v2504 = vadd.f32 0.0, %v2503
      %v2505 = vpop.f32.mrb[0].mxu0
      %2506 = vmatprep.mubr.f32.mxu0 0.0
      %2507 = vmatmul.mubr.f32.gmra.mrb[0].mxu0 %v2261
      %v2508 = vpop.f32.mrb[0].mxu0
      %v2509 = vadd.f32 0.0, %v2508
      %v2510 = vpop.f32.mrb[0].mxu0
      %2511 = vmatprep.mubr.f32.mxu0 0.0
      %2512 = vmatmul.mubr.f32.gmra.mrb[0].mxu0 %v2264
      %v2513 = vpop.f32.mrb[0].mxu0
      %v2514 = vadd.f32 0.0, %v2513
      %v2515 = vpop.f32.mrb[0].mxu0
      %2516 = vmatprep.mubr.f32.mxu0 0.0
      %2517 = vmatmul.mubr.f32.gmra.mrb[0].mxu0 %v2267
      %v2518 = vpop.f32.mrb[0].mxu0
      %v2519 = vadd.f32 0.0, %v2518
      %v2520 = vpop.f32.mrb[0].mxu0
      %2521 = vmatprep.mubr.f32.mxu0 0.0
      %2522 = vmatmul.mubr.f32.gmra.mrb[0].mxu0 %v2270
      %v2523 = vpop.f32.mrb[0].mxu0
      %v2524 = vadd.f32 0.0, %v2523
      %v2525 = vpop.f32.mrb[0].mxu0
      %2526 = vmatprep.mubr.f32.mxu0 0.0
      %2527 = vmatmul.mubr.f32.gmra.mrb[0].mxu0 %v2273
      %v2528 = vpop.f32.mrb[0].mxu0
      %v2529 = vadd.f32 0.0, %v2528
      %v2530 = vpop.f32.mrb[0].mxu0
      %2531 = vmatprep.mubr.f32.mxu0 0.0
      %2532 = vmatmul.mubr.f32.gmra.mrb[0].mxu0 %v2276
      %v2533 = vpop.f32.mrb[0].mxu0
      %v2534 = vadd.f32 0.0, %v2533
      %v2535 = vpop.f32.mrb[0].mxu0
      %2536 = vmatprep.mubr.f32.mxu0 0.0
      %2537 = vmatmul.mubr.f32.gmra.mrb[0].mxu0 %v2279
      %v2538 = vpop.f32.mrb[0].mxu0
      %v2539 = vadd.f32 0.0, %v2538
      %v2540 = vpop.f32.mrb[0].mxu0
      %2541 = vmatprep.mubr.f32.mxu0 0.0
      %2542 = vmatmul.mubr.f32.gmra.mrb[0].mxu0 %v2282
      %v2543 = vpop.f32.mrb[0].mxu0
      %v2544 = vadd.f32 0.0, %v2543
      %v2545 = vpop.f32.mrb[0].mxu0
      %2546 = vmatprep.mubr.f32.mxu0 0.0
      %2547 = vmatmul.mubr.f32.gmra.mrb[0].mxu0 %v2285
      %v2548 = vpop.f32.mrb[0].mxu0
      %v2549 = vadd.f32 0.0, %v2548
      %v2550 = vpop.f32.mrb[0].mxu0
      %2551 = vmatprep.mubr.f32.mxu0 0.0
      %2552 = vmatmul.mubr.f32.gmra.mrb[0].mxu0 %v2288
      %v2553 = vpop.f32.mrb[0].mxu0
      %v2554 = vadd.f32 0.0, %v2553
      %v2555 = vpop.f32.mrb[0].mxu0
      %2556 = vmatprep.mubr.f32.mxu0 0.0
      %2557 = vmatmul.mubr.f32.gmra.mrb[0].mxu0 %v2291
      %v2558 = vpop.f32.mrb[0].mxu0
      %v2559 = vadd.f32 0.0, %v2558
      %v2560 = vpop.f32.mrb[0].mxu0
      %2561 = vmatprep.mubr.f32.mxu0 0.0
      %2562 = vmatmul.mubr.f32.gmra.mrb[0].mxu0 %v2294
      %v2563 = vpop.f32.mrb[0].mxu0
      %v2564 = vadd.f32 0.0, %v2563
      %v2565 = vpop.f32.mrb[0].mxu0
      %2566 = vmatprep.mubr.f32.mxu0 0.0
      %2567 = vmatmul.mubr.f32.gmra.mrb[0].mxu0 %v2297
      %v2568 = vpop.f32.mrb[0].mxu0
      %v2569 = vadd.f32 0.0, %v2568
      %v2570 = vpop.f32.mrb[0].mxu0
      %2571 = vmatprep.mubr.f32.mxu0 0.0
      %2572 = vmatmul.mubr.f32.gmra.mrb[0].mxu0 %v2300
      %v2573 = vpop.f32.mrb[0].mxu0
      %v2574 = vadd.f32 0.0, %v2573
      %v2575 = vpop.f32.mrb[0].mxu0
      %2576 = vmatprep.mubr.f32.mxu0 0.0
      %2577 = vmatmul.mubr.f32.gmra.mrb[0].mxu0 %v2303
      %v2578 = vpop.f32.mrb[0].mxu0
      %v2579 = vadd.f32 0.0, %v2578
      %v2580 = vpop.f32.mrb[0].mxu0
      %2581 = vmatprep.mubr.f32.mxu0 0.0
      %2582 = vmatmul.mubr.f32.gmra.mrb[0].mxu0 %v2306
      %v2583 = vpop.f32.mrb[0].mxu0
      %v2584 = vadd.f32 0.0, %v2583
      %v2585 = vpop.f32.mrb[0].mxu0
      %2586 = vmatprep.mubr.f32.mxu0 0.0
      %2587 = vmatmul.mubr.f32.gmra.mrb[0].mxu0 %v2309
      %v2588 = vpop.f32.mrb[0].mxu0
      %v2589 = vadd.f32 0.0, %v2588
      %v2590 = vpop.f32.mrb[0].mxu0
      %2591 = vmatprep.mubr.f32.mxu0 0.0
      %2592 = vmatmul.mubr.f32.gmra.mrb[0].mxu0 %v2312
      %v2593 = vpop.f32.mrb[0].mxu0
      %v2594 = vadd.f32 0.0, %v2593
      %v2595 = vpop.f32.mrb[0].mxu0
      %2596 = vmatprep.mubr.f32.mxu0 0.0
      %2597 = vmatmul.mubr.f32.gmra.mrb[0].mxu0 %v2315
      %v2598 = vpop.f32.mrb[0].mxu0
      %v2599 = vadd.f32 0.0, %v2598
      %v2600 = vpop.f32.mrb[0].mxu0
      %2601 = vmatprep.mubr.f32.mxu0 0.0
      %2602 = vmatmul.mubr.f32.gmra.mrb[0].mxu0 %v2318
      %v2603 = vpop.f32.mrb[0].mxu0
      %v2604 = vadd.f32 0.0, %v2603
      %v2605 = vpop.f32.mrb[0].mxu0
      %2606 = vmatprep.mubr.f32.mxu0 0.0
      %2607 = vmatmul.mubr.f32.gmra.mrb[0].mxu0 %v2321
      %v2608 = vpop.f32.mrb[0].mxu0
      %v2609 = vadd.f32 0.0, %v2608
      %v2610 = vpop.f32.mrb[0].mxu0
      %2611 = vmatprep.mubr.f32.mxu0 0.0
      %2612 = vmatmul.mubr.f32.gmra.mrb[0].mxu0 %v2324
      %v2613 = vpop.f32.mrb[0].mxu0
      %v2614 = vadd.f32 0.0, %v2613
      %v2615 = vpop.f32.mrb[0].mxu0
      %2616 = vmatprep.mubr.f32.mxu0 0.0
      %2617 = vmatmul.mubr.f32.gmra.mrb[0].mxu0 %v2327
      %v2618 = vpop.f32.mrb[0].mxu0
      %v2619 = vadd.f32 0.0, %v2618
      %v2620 = vpop.f32.mrb[0].mxu0
      %2621 = vmatprep.mubr.f32.mxu0 0.0
      %2622 = vmatmul.mubr.f32.gmra.mrb[0].mxu0 %v2330
      %v2623 = vpop.f32.mrb[0].mxu0
      %v2624 = vadd.f32 0.0, %v2623
      %v2625 = vpop.f32.mrb[0].mxu0
      %2626 = vmatprep.mubr.f32.mxu0 0.0
      %2627 = vmatmul.mubr.f32.gmra.mrb[0].mxu0 %v2333
      %v2628 = vpop.f32.mrb[0].mxu0
      %v2629 = vadd.f32 0.0, %v2628
      %v2630 = vpop.f32.mrb[0].mxu0
      %2631 = vmatprep.mubr.f32.mxu0 0.0
      %2632 = vmatmul.mubr.f32.gmra.mrb[0].mxu0 %v2336
      %v2633 = vpop.f32.mrb[0].mxu0
      %v2634 = vadd.f32 0.0, %v2633
      %v2635 = vpop.f32.mrb[0].mxu0
      %2636 = vmatprep.mubr.f32.mxu0 0.0
      %2637 = vmatmul.mubr.f32.gmra.mrb[0].mxu0 %v2339
      %v2638 = vpop.f32.mrb[0].mxu0
      %v2639 = vadd.f32 0.0, %v2638
      %v2640 = vpop.f32.mrb[0].mxu0
      %2641 = vmatprep.mubr.f32.mxu0 0.0
      %2642 = vmatmul.mubr.f32.gmra.mrb[0].mxu0 %v2342
      %v2643 = vpop.f32.mrb[0].mxu0
      %v2644 = vadd.f32 0.0, %v2643
      %v2645 = vpop.f32.mrb[0].mxu0
      %2646 = vmatprep.mubr.f32.mxu0 0.0
      %2647 = vmatmul.mubr.f32.gmra.mrb[0].mxu0 %v2345
      %v2648 = vpop.f32.mrb[0].mxu0
      %v2649 = vadd.f32 0.0, %v2648
      %v2650 = vpop.f32.mrb[0].mxu0
      %2651 = vdwg.mxu0
      %v2653 = vsel %vm2202, %v2102, 0
      %v2656 = vsel %vm2202, %v2103, 0
      %v2659 = vsel %vm2202, %v2104, 0
      %2661 = vmatprep.subr.mxu0 0.0
      %2662 = vmatpush1.msra.mxu0 %v2150
      %2663 = vmatprep.subr.mxu0 0.0
      %2664 = vmatpush1.msra.mxu0 %v2151
      %2665 = vmatprep.subr.mxu0 0.0
      %2666 = vmatpush1.msra.mxu0 %v2152
      %2667 = vmatprep.subr.mxu0 0.0
      %2668 = vmatpush1.msra.mxu0 %v2153
      %2669 = vmatprep.subr.mxu0 0.0
      %2670 = vmatpush1.msra.mxu0 %v2154
      %2671 = vmatprep.subr.mxu0 0.0
      %2672 = vmatpush1.msra.mxu0 %v2155
      %2673 = vmatprep.subr.mxu0 0.0
      %2674 = vmatpush1.msra.mxu0 0.0
      %2675 = vmatprep.subr.mxu0 0.0
      %2676 = vmatpush1.msra.mxu0 0.0
      %2677 = vmatprep.subr.mxu0 0.0
      %2678 = vmatpush1.msra.mxu0 0.0
      %2679 = vmatprep.subr.mxu0 0.0
      %2680 = vmatpush1.msra.mxu0 0.0
      %2681 = vmatprep.subr.mxu0 0.0
      %2682 = vmatpush1.msra.mxu0 0.0
      %2683 = vmatprep.subr.mxu0 0.0
      %2684 = vmatpush1.msra.mxu0 0.0
      %2685 = vmatprep.subr.mxu0 0.0
      %2686 = vmatpush1.msra.mxu0 0.0
      %2687 = vmatprep.subr.mxu0 0.0
      %2688 = vmatpush1.msra.mxu0 0.0
      %2689 = vmatprep.subr.mxu0 0.0
      %2690 = vmatpush1.msra.mxu0 0.0
      %2691 = vmatprep.subr.mxu0 0.0
      %2692 = vmatpush1.msra.mxu0 0.0
      %2693 = vmatprep.subr.mxu0 0.0
      %2694 = vmatpush1.msra.mxu0 0.0
      %2695 = vmatprep.subr.mxu0 0.0
      %2696 = vmatpush1.msra.mxu0 0.0
      %2697 = vmatprep.subr.mxu0 0.0
      %2698 = vmatpush1.msra.mxu0 0.0
      %2699 = vmatprep.subr.mxu0 0.0
      %2700 = vmatpush1.msra.mxu0 0.0
      %2701 = vmatprep.subr.mxu0 0.0
      %2702 = vmatpush1.msra.mxu0 0.0
      %2703 = vmatprep.subr.mxu0 0.0
      %2704 = vmatpush1.msra.mxu0 0.0
      %2705 = vmatprep.subr.mxu0 0.0
      %2706 = vmatpush1.msra.mxu0 0.0
      %2707 = vmatprep.subr.mxu0 0.0
      %2708 = vmatpush1.msra.mxu0 0.0
      %2709 = vmatprep.subr.mxu0 0.0
      %2710 = vmatpush1.msra.mxu0 0.0
      %2711 = vmatprep.subr.mxu0 0.0
      %2712 = vmatpush1.msra.mxu0 0.0
      %2713 = vmatprep.subr.mxu0 0.0
      %2714 = vmatpush1.msra.mxu0 0.0
      %2715 = vmatprep.subr.mxu0 0.0
      %2716 = vmatpush1.msra.mxu0 0.0
      %2717 = vmatprep.subr.mxu0 0.0
      %2718 = vmatpush1.msra.mxu0 0.0
      %2719 = vmatprep.subr.mxu0 0.0
      %2720 = vmatpush1.msra.mxu0 0.0
      %2721 = vmatprep.subr.mxu0 0.0
      %2722 = vmatpush1.msra.mxu0 0.0
      %2723 = vmatprep.subr.mxu0 0.0
      %2724 = vmatpush1.msra.mxu0 0.0
      %2725 = vmatprep.mubr.f32.mxu0 0.0
      %2726 = vmatmul.mubr.f32.gmra.mrb[0].mxu0 %v2653
      %v2727 = vpop.f32.mrb[0].mxu0
      %v2728 = vadd.f32 %v2414, %v2727
      %v2729 = vpop.f32.mrb[0].mxu0
      %2730 = vmatprep.mubr.f32.mxu0 0.0
      %2731 = vmatmul.mubr.f32.gmra.mrb[0].mxu0 %v2656
      %v2732 = vpop.f32.mrb[0].mxu0
      %v2733 = vadd.f32 %v2419, %v2732
      %v2734 = vpop.f32.mrb[0].mxu0
      %2735 = vmatprep.mubr.f32.mxu0 0.0
      %2736 = vmatmul.mubr.f32.gmra.mrb[0].mxu0 %v2659
      %v2737 = vpop.f32.mrb[0].mxu0
      %v2738 = vadd.f32 %v2424, %v2737
      %v2739 = vpop.f32.mrb[0].mxu0
      %2740 = vmatprep.mubr.f32.mxu0 0.0
      %2741 = vmatmul.mubr.f32.gmra.mrb[0].mxu0 %v2204
      %v2742 = vpop.f32.mrb[0].mxu0
      %v2743 = vadd.f32 %v2429, %v2742
      %v2744 = vpop.f32.mrb[0].mxu0
      %2745 = vmatprep.mubr.f32.mxu0 0.0
      %2746 = vmatmul.mubr.f32.gmra.mrb[0].mxu0 %v2207
      %v2747 = vpop.f32.mrb[0].mxu0
      %v2748 = vadd.f32 %v2434, %v2747
      %v2749 = vpop.f32.mrb[0].mxu0
      %2750 = vmatprep.mubr.f32.mxu0 0.0
      %2751 = vmatmul.mubr.f32.gmra.mrb[0].mxu0 %v2210
      %v2752 = vpop.f32.mrb[0].mxu0
      %v2753 = vadd.f32 %v2439, %v2752
      %v2754 = vpop.f32.mrb[0].mxu0
      %2755 = vmatprep.mubr.f32.mxu0 0.0
      %2756 = vmatmul.mubr.f32.gmra.mrb[0].mxu0 %v2213
      %v2757 = vpop.f32.mrb[0].mxu0
      %v2758 = vadd.f32 %v2444, %v2757
      %v2759 = vpop.f32.mrb[0].mxu0
      %2760 = vmatprep.mubr.f32.mxu0 0.0
      %2761 = vmatmul.mubr.f32.gmra.mrb[0].mxu0 %v2216
      %v2762 = vpop.f32.mrb[0].mxu0
      %v2763 = vadd.f32 %v2449, %v2762
      %v2764 = vpop.f32.mrb[0].mxu0
      %2765 = vmatprep.mubr.f32.mxu0 0.0
      %2766 = vmatmul.mubr.f32.gmra.mrb[0].mxu0 %v2219
      %v2767 = vpop.f32.mrb[0].mxu0
      %v2768 = vadd.f32 %v2454, %v2767
      %v2769 = vpop.f32.mrb[0].mxu0
      %2770 = vmatprep.mubr.f32.mxu0 0.0
      %2771 = vmatmul.mubr.f32.gmra.mrb[0].mxu0 %v2222
      %v2772 = vpop.f32.mrb[0].mxu0
      %v2773 = vadd.f32 %v2459, %v2772
      %v2774 = vpop.f32.mrb[0].mxu0
      %2775 = vmatprep.mubr.f32.mxu0 0.0
      %2776 = vmatmul.mubr.f32.gmra.mrb[0].mxu0 %v2225
      %v2777 = vpop.f32.mrb[0].mxu0
      %v2778 = vadd.f32 %v2464, %v2777
      %v2779 = vpop.f32.mrb[0].mxu0
      %2780 = vmatprep.mubr.f32.mxu0 0.0
      %2781 = vmatmul.mubr.f32.gmra.mrb[0].mxu0 %v2228
      %v2782 = vpop.f32.mrb[0].mxu0
      %v2783 = vadd.f32 %v2469, %v2782
      %v2784 = vpop.f32.mrb[0].mxu0
      %2785 = vmatprep.mubr.f32.mxu0 0.0
      %2786 = vmatmul.mubr.f32.gmra.mrb[0].mxu0 %v2231
      %v2787 = vpop.f32.mrb[0].mxu0
      %v2788 = vadd.f32 %v2474, %v2787
      %v2789 = vpop.f32.mrb[0].mxu0
      %2790 = vmatprep.mubr.f32.mxu0 0.0
      %2791 = vmatmul.mubr.f32.gmra.mrb[0].mxu0 %v2234
      %v2792 = vpop.f32.mrb[0].mxu0
      %v2793 = vadd.f32 %v2479, %v2792
      %v2794 = vpop.f32.mrb[0].mxu0
      %2795 = vmatprep.mubr.f32.mxu0 0.0
      %2796 = vmatmul.mubr.f32.gmra.mrb[0].mxu0 %v2237
      %v2797 = vpop.f32.mrb[0].mxu0
      %v2798 = vadd.f32 %v2484, %v2797
      %v2799 = vpop.f32.mrb[0].mxu0
      %2800 = vmatprep.mubr.f32.mxu0 0.0
      %2801 = vmatmul.mubr.f32.gmra.mrb[0].mxu0 %v2240
      %v2802 = vpop.f32.mrb[0].mxu0
      %v2803 = vadd.f32 %v2489, %v2802
      %v2804 = vpop.f32.mrb[0].mxu0
      %2805 = vmatprep.mubr.f32.mxu0 0.0
      %2806 = vmatmul.mubr.f32.gmra.mrb[0].mxu0 %v2243
      %v2807 = vpop.f32.mrb[0].mxu0
      %v2808 = vadd.f32 %v2494, %v2807
      %v2809 = vpop.f32.mrb[0].mxu0
      %2810 = vmatprep.mubr.f32.mxu0 0.0
      %2811 = vmatmul.mubr.f32.gmra.mrb[0].mxu0 %v2246
      %v2812 = vpop.f32.mrb[0].mxu0
      %v2813 = vadd.f32 %v2499, %v2812
      %v2814 = vpop.f32.mrb[0].mxu0
      %2815 = vmatprep.mubr.f32.mxu0 0.0
      %2816 = vmatmul.mubr.f32.gmra.mrb[0].mxu0 %v2249
      %v2817 = vpop.f32.mrb[0].mxu0
      %v2818 = vadd.f32 %v2504, %v2817
      %v2819 = vpop.f32.mrb[0].mxu0
      %2820 = vmatprep.mubr.f32.mxu0 0.0
      %2821 = vmatmul.mubr.f32.gmra.mrb[0].mxu0 %v2252
      %v2822 = vpop.f32.mrb[0].mxu0
      %v2823 = vadd.f32 %v2509, %v2822
      %v2824 = vpop.f32.mrb[0].mxu0
      %2825 = vmatprep.mubr.f32.mxu0 0.0
      %2826 = vmatmul.mubr.f32.gmra.mrb[0].mxu0 %v2255
      %v2827 = vpop.f32.mrb[0].mxu0
      %v2828 = vadd.f32 %v2514, %v2827
      %v2829 = vpop.f32.mrb[0].mxu0
      %2830 = vmatprep.mubr.f32.mxu0 0.0
      %2831 = vmatmul.mubr.f32.gmra.mrb[0].mxu0 %v2258
      %v2832 = vpop.f32.mrb[0].mxu0
      %v2833 = vadd.f32 %v2519, %v2832
      %v2834 = vpop.f32.mrb[0].mxu0
      %2835 = vmatprep.mubr.f32.mxu0 0.0
      %2836 = vmatmul.mubr.f32.gmra.mrb[0].mxu0 %v2261
      %v2837 = vpop.f32.mrb[0].mxu0
      %v2838 = vadd.f32 %v2524, %v2837
      %v2839 = vpop.f32.mrb[0].mxu0
      %2840 = vmatprep.mubr.f32.mxu0 0.0
      %2841 = vmatmul.mubr.f32.gmra.mrb[0].mxu0 %v2264
      %v2842 = vpop.f32.mrb[0].mxu0
      %v2843 = vadd.f32 %v2529, %v2842
      %v2844 = vpop.f32.mrb[0].mxu0
      %2845 = vmatprep.mubr.f32.mxu0 0.0
      %2846 = vmatmul.mubr.f32.gmra.mrb[0].mxu0 %v2267
      %v2847 = vpop.f32.mrb[0].mxu0
      %v2848 = vadd.f32 %v2534, %v2847
      %v2849 = vpop.f32.mrb[0].mxu0
      %2850 = vmatprep.mubr.f32.mxu0 0.0
      %2851 = vmatmul.mubr.f32.gmra.mrb[0].mxu0 %v2270
      %v2852 = vpop.f32.mrb[0].mxu0
      %v2853 = vadd.f32 %v2539, %v2852
      %v2854 = vpop.f32.mrb[0].mxu0
      %2855 = vmatprep.mubr.f32.mxu0 0.0
      %2856 = vmatmul.mubr.f32.gmra.mrb[0].mxu0 %v2273
      %v2857 = vpop.f32.mrb[0].mxu0
      %v2858 = vadd.f32 %v2544, %v2857
      %v2859 = vpop.f32.mrb[0].mxu0
      %2860 = vmatprep.mubr.f32.mxu0 0.0
      %2861 = vmatmul.mubr.f32.gmra.mrb[0].mxu0 %v2276
      %v2862 = vpop.f32.mrb[0].mxu0
      %v2863 = vadd.f32 %v2549, %v2862
      %v2864 = vpop.f32.mrb[0].mxu0
      %2865 = vmatprep.mubr.f32.mxu0 0.0
      %2866 = vmatmul.mubr.f32.gmra.mrb[0].mxu0 %v2279
      %v2867 = vpop.f32.mrb[0].mxu0
      %v2868 = vadd.f32 %v2554, %v2867
      %v2869 = vpop.f32.mrb[0].mxu0
      %2870 = vmatprep.mubr.f32.mxu0 0.0
      %2871 = vmatmul.mubr.f32.gmra.mrb[0].mxu0 %v2282
      %v2872 = vpop.f32.mrb[0].mxu0
      %v2873 = vadd.f32 %v2559, %v2872
      %v2874 = vpop.f32.mrb[0].mxu0
      %2875 = vmatprep.mubr.f32.mxu0 0.0
      %2876 = vmatmul.mubr.f32.gmra.mrb[0].mxu0 %v2285
      %v2877 = vpop.f32.mrb[0].mxu0
      %v2878 = vadd.f32 %v2564, %v2877
      %v2879 = vpop.f32.mrb[0].mxu0
      %2880 = vmatprep.mubr.f32.mxu0 0.0
      %2881 = vmatmul.mubr.f32.gmra.mrb[0].mxu0 %v2288
      %v2882 = vpop.f32.mrb[0].mxu0
      %v2883 = vadd.f32 %v2569, %v2882
      %v2884 = vpop.f32.mrb[0].mxu0
      %2885 = vmatprep.mubr.f32.mxu0 0.0
      %2886 = vmatmul.mubr.f32.gmra.mrb[0].mxu0 %v2291
      %v2887 = vpop.f32.mrb[0].mxu0
      %v2888 = vadd.f32 %v2574, %v2887
      %v2889 = vpop.f32.mrb[0].mxu0
      %2890 = vmatprep.mubr.f32.mxu0 0.0
      %2891 = vmatmul.mubr.f32.gmra.mrb[0].mxu0 %v2294
      %v2892 = vpop.f32.mrb[0].mxu0
      %v2893 = vadd.f32 %v2579, %v2892
      %v2894 = vpop.f32.mrb[0].mxu0
      %2895 = vmatprep.mubr.f32.mxu0 0.0
      %2896 = vmatmul.mubr.f32.gmra.mrb[0].mxu0 %v2297
      %v2897 = vpop.f32.mrb[0].mxu0
      %v2898 = vadd.f32 %v2584, %v2897
      %v2899 = vpop.f32.mrb[0].mxu0
      %2900 = vmatprep.mubr.f32.mxu0 0.0
      %2901 = vmatmul.mubr.f32.gmra.mrb[0].mxu0 %v2300
      %v2902 = vpop.f32.mrb[0].mxu0
      %v2903 = vadd.f32 %v2589, %v2902
      %v2904 = vpop.f32.mrb[0].mxu0
      %2905 = vmatprep.mubr.f32.mxu0 0.0
      %2906 = vmatmul.mubr.f32.gmra.mrb[0].mxu0 %v2303
      %v2907 = vpop.f32.mrb[0].mxu0
      %v2908 = vadd.f32 %v2594, %v2907
      %v2909 = vpop.f32.mrb[0].mxu0
      %2910 = vmatprep.mubr.f32.mxu0 0.0
      %2911 = vmatmul.mubr.f32.gmra.mrb[0].mxu0 %v2306
      %v2912 = vpop.f32.mrb[0].mxu0
      %v2913 = vadd.f32 %v2599, %v2912
      %v2914 = vpop.f32.mrb[0].mxu0
      %2915 = vmatprep.mubr.f32.mxu0 0.0
      %2916 = vmatmul.mubr.f32.gmra.mrb[0].mxu0 %v2309
      %v2917 = vpop.f32.mrb[0].mxu0
      %v2918 = vadd.f32 %v2604, %v2917
      %v2919 = vpop.f32.mrb[0].mxu0
      %2920 = vmatprep.mubr.f32.mxu0 0.0
      %2921 = vmatmul.mubr.f32.gmra.mrb[0].mxu0 %v2312
      %v2922 = vpop.f32.mrb[0].mxu0
      %v2923 = vadd.f32 %v2609, %v2922
      %v2924 = vpop.f32.mrb[0].mxu0
      %2925 = vmatprep.mubr.f32.mxu0 0.0
      %2926 = vmatmul.mubr.f32.gmra.mrb[0].mxu0 %v2315
      %v2927 = vpop.f32.mrb[0].mxu0
      %v2928 = vadd.f32 %v2614, %v2927
      %v2929 = vpop.f32.mrb[0].mxu0
      %2930 = vmatprep.mubr.f32.mxu0 0.0
      %2931 = vmatmul.mubr.f32.gmra.mrb[0].mxu0 %v2318
      %v2932 = vpop.f32.mrb[0].mxu0
      %v2933 = vadd.f32 %v2619, %v2932
      %v2934 = vpop.f32.mrb[0].mxu0
      %2935 = vmatprep.mubr.f32.mxu0 0.0
      %2936 = vmatmul.mubr.f32.gmra.mrb[0].mxu0 %v2321
      %v2937 = vpop.f32.mrb[0].mxu0
      %v2938 = vadd.f32 %v2624, %v2937
      %v2939 = vpop.f32.mrb[0].mxu0
      %2940 = vmatprep.mubr.f32.mxu0 0.0
      %2941 = vmatmul.mubr.f32.gmra.mrb[0].mxu0 %v2324
      %v2942 = vpop.f32.mrb[0].mxu0
      %v2943 = vadd.f32 %v2629, %v2942
      %v2944 = vpop.f32.mrb[0].mxu0
      %2945 = vmatprep.mubr.f32.mxu0 0.0
      %2946 = vmatmul.mubr.f32.gmra.mrb[0].mxu0 %v2327
      %v2947 = vpop.f32.mrb[0].mxu0
      %v2948 = vadd.f32 %v2634, %v2947
      %v2949 = vpop.f32.mrb[0].mxu0
      %2950 = vmatprep.mubr.f32.mxu0 0.0
      %2951 = vmatmul.mubr.f32.gmra.mrb[0].mxu0 %v2330
      %v2952 = vpop.f32.mrb[0].mxu0
      %v2953 = vadd.f32 %v2639, %v2952
      %v2954 = vpop.f32.mrb[0].mxu0
      %2955 = vmatprep.mubr.f32.mxu0 0.0
      %2956 = vmatmul.mubr.f32.gmra.mrb[0].mxu0 %v2333
      %v2957 = vpop.f32.mrb[0].mxu0
      %v2958 = vadd.f32 %v2644, %v2957
      %v2959 = vpop.f32.mrb[0].mxu0
      %2960 = vmatprep.mubr.f32.mxu0 0.0
      %2961 = vmatmul.mubr.f32.gmra.mrb[0].mxu0 %v2336
      %v2962 = vpop.f32.mrb[0].mxu0
      %v2963 = vadd.f32 %v2649, %v2962
      %v2964 = vpop.f32.mrb[0].mxu0
      %2965 = vdwg.mxu0
      %v2969 = vrot.slane %v1517, 1
      %v2970 = vsel %vm1569, %v2163, %v2969
      %v2971 = vrot.slane %v1518, 1
      %v2972 = vsel %vm1569, %v2969, %v2971
      %v2973 = vrot.slane %v1519, 1
      %v2974 = vsel %vm1569, %v2971, %v2973
      %2975 = vrot.lane.b32.xlu0 %v2970, 16
      %v2976 = vpop.permute.xlu0 %2975
      %2977 = vrot.lane.b32.xlu0 %v2972, 16
      %v2978 = vpop.permute.xlu0 %2977
      %2979 = vrot.lane.b32.xlu0 %v2974, 16
      %v2980 = vpop.permute.xlu0 %2979
      %v2984 = vrot.slane %v1517, 2
      %v2985 = vsel %vm1811, %v2178, %v2984
      %v2986 = vrot.slane %v1518, 2
      %v2987 = vsel %vm1811, %v2984, %v2986
      %v2988 = vrot.slane %v1519, 2
      %v2989 = vsel %vm1811, %v2986, %v2988
      %2990 = vrot.lane.b32.xlu0 %v2985, 32
      %v2991 = vpop.permute.xlu0 %2990
      %2992 = vrot.lane.b32.xlu0 %v2987, 32
      %v2993 = vpop.permute.xlu0 %2992
      %2994 = vrot.lane.b32.xlu0 %v2989, 32
      %v2995 = vpop.permute.xlu0 %2994
      %v2999 = vsel %vm326, %v1516, %v2976
      %v3000 = vsel %vm326, %v1517, %v2978
      %v3001 = vsel %vm326, %v1518, %v2980
      %v3002 = vsel %vm2101, %v2999, %v2991
      %v3003 = vsel %vm2101, %v3000, %v2993
      %v3004 = vsel %vm2101, %v3001, %v2995
      %s3005 = scalar_lea.vmem %s2, 96
      %v3006 = vld [vmem:[%s3005] sm:$0xff]
      %v3007 = vld [vmem:[%s3005 + $0x8] sm:$0xff]
      %v3008 = vld [vmem:[%s3005 + $0x10] sm:$0xff]
      %v3009 = vld [vmem:[%s3005 + $0x18] sm:$0xff]
      %v3010 = vld [vmem:[%s3005 + $0x20] sm:$0xff]
      %v3011 = vld [vmem:[%s3005 + $0x28] sm:$0xff]
      %v3013 = vsel %vm2202, %v3002, 0
      %v3016 = vsel %vm2202, %v3003, 0
      %v3019 = vsel %vm2202, %v3004, 0
      %3021 = vmatprep.subr.mxu0 0.0
      %3022 = vmatpush1.msra.mxu0 %v3006
      %3023 = vmatprep.subr.mxu0 0.0
      %3024 = vmatpush1.msra.mxu0 %v3007
      %3025 = vmatprep.subr.mxu0 0.0
      %3026 = vmatpush1.msra.mxu0 %v3008
      %3027 = vmatprep.subr.mxu0 0.0
      %3028 = vmatpush1.msra.mxu0 %v3009
      %3029 = vmatprep.subr.mxu0 0.0
      %3030 = vmatpush1.msra.mxu0 %v3010
      %3031 = vmatprep.subr.mxu0 0.0
      %3032 = vmatpush1.msra.mxu0 %v3011
      %3033 = vmatprep.subr.mxu0 0.0
      %3034 = vmatpush1.msra.mxu0 0.0
      %3035 = vmatprep.subr.mxu0 0.0
      %3036 = vmatpush1.msra.mxu0 0.0
      %3037 = vmatprep.subr.mxu0 0.0
      %3038 = vmatpush1.msra.mxu0 0.0
      %3039 = vmatprep.subr.mxu0 0.0
      %3040 = vmatpush1.msra.mxu0 0.0
      %3041 = vmatprep.subr.mxu0 0.0
      %3042 = vmatpush1.msra.mxu0 0.0
      %3043 = vmatprep.subr.mxu0 0.0
      %3044 = vmatpush1.msra.mxu0 0.0
      %3045 = vmatprep.subr.mxu0 0.0
      %3046 = vmatpush1.msra.mxu0 0.0
      %3047 = vmatprep.subr.mxu0 0.0
      %3048 = vmatpush1.msra.mxu0 0.0
      %3049 = vmatprep.subr.mxu0 0.0
      %3050 = vmatpush1.msra.mxu0 0.0
      %3051 = vmatprep.subr.mxu0 0.0
      %3052 = vmatpush1.msra.mxu0 0.0
      %3053 = vmatprep.subr.mxu0 0.0
      %3054 = vmatpush1.msra.mxu0 0.0
      %3055 = vmatprep.subr.mxu0 0.0
      %3056 = vmatpush1.msra.mxu0 0.0
      %3057 = vmatprep.subr.mxu0 0.0
      %3058 = vmatpush1.msra.mxu0 0.0
      %3059 = vmatprep.subr.mxu0 0.0
      %3060 = vmatpush1.msra.mxu0 0.0
      %3061 = vmatprep.subr.mxu0 0.0
      %3062 = vmatpush1.msra.mxu0 0.0
      %3063 = vmatprep.subr.mxu0 0.0
      %3064 = vmatpush1.msra.mxu0 0.0
      %3065 = vmatprep.subr.mxu0 0.0
      %3066 = vmatpush1.msra.mxu0 0.0
      %3067 = vmatprep.subr.mxu0 0.0
      %3068 = vmatpush1.msra.mxu0 0.0
      %3069 = vmatprep.subr.mxu0 0.0
      %3070 = vmatpush1.msra.mxu0 0.0
      %3071 = vmatprep.subr.mxu0 0.0
      %3072 = vmatpush1.msra.mxu0 0.0
      %3073 = vmatprep.subr.mxu0 0.0
      %3074 = vmatpush1.msra.mxu0 0.0
      %3075 = vmatprep.subr.mxu0 0.0
      %3076 = vmatpush1.msra.mxu0 0.0
      %3077 = vmatprep.subr.mxu0 0.0
      %3078 = vmatpush1.msra.mxu0 0.0
      %3079 = vmatprep.subr.mxu0 0.0
      %3080 = vmatpush1.msra.mxu0 0.0
      %3081 = vmatprep.subr.mxu0 0.0
      %3082 = vmatpush1.msra.mxu0 0.0
      %3083 = vmatprep.subr.mxu0 0.0
      %3084 = vmatpush1.msra.mxu0 0.0
      %3085 = vmatprep.mubr.f32.mxu0 0.0
      %3086 = vmatmul.mubr.f32.gmra.mrb[0].mxu0 %v2213
      %v3087 = vpop.f32.mrb[0].mxu0
      %v3088 = vadd.f32 0.0, %v3087
      %v3089 = vpop.f32.mrb[0].mxu0
      %3090 = vmatprep.mubr.f32.mxu0 0.0
      %3091 = vmatmul.mubr.f32.gmra.mrb[0].mxu0 %v2216
      %v3092 = vpop.f32.mrb[0].mxu0
      %v3093 = vadd.f32 0.0, %v3092
      %v3094 = vpop.f32.mrb[0].mxu0
      %3095 = vmatprep.mubr.f32.mxu0 0.0
      %3096 = vmatmul.mubr.f32.gmra.mrb[0].mxu0 %v2219
      %v3097 = vpop.f32.mrb[0].mxu0
      %v3098 = vadd.f32 0.0, %v3097
      %v3099 = vpop.f32.mrb[0].mxu0
      %3100 = vmatprep.mubr.f32.mxu0 0.0
      %3101 = vmatmul.mubr.f32.gmra.mrb[0].mxu0 %v2222
      %v3102 = vpop.f32.mrb[0].mxu0
      %v3103 = vadd.f32 0.0, %v3102
      %v3104 = vpop.f32.mrb[0].mxu0
      %3105 = vmatprep.mubr.f32.mxu0 0.0
      %3106 = vmatmul.mubr.f32.gmra.mrb[0].mxu0 %v2225
      %v3107 = vpop.f32.mrb[0].mxu0
      %v3108 = vadd.f32 0.0, %v3107
      %v3109 = vpop.f32.mrb[0].mxu0
      %3110 = vmatprep.mubr.f32.mxu0 0.0
      %3111 = vmatmul.mubr.f32.gmra.mrb[0].mxu0 %v2228
      %v3112 = vpop.f32.mrb[0].mxu0
      %v3113 = vadd.f32 0.0, %v3112
      %v3114 = vpop.f32.mrb[0].mxu0
      %3115 = vmatprep.mubr.f32.mxu0 0.0
      %3116 = vmatmul.mubr.f32.gmra.mrb[0].mxu0 %v2231
      %v3117 = vpop.f32.mrb[0].mxu0
      %v3118 = vadd.f32 0.0, %v3117
      %v3119 = vpop.f32.mrb[0].mxu0
      %3120 = vmatprep.mubr.f32.mxu0 0.0
      %3121 = vmatmul.mubr.f32.gmra.mrb[0].mxu0 %v2234
      %v3122 = vpop.f32.mrb[0].mxu0
      %v3123 = vadd.f32 0.0, %v3122
      %v3124 = vpop.f32.mrb[0].mxu0
      %3125 = vmatprep.mubr.f32.mxu0 0.0
      %3126 = vmatmul.mubr.f32.gmra.mrb[0].mxu0 %v2237
      %v3127 = vpop.f32.mrb[0].mxu0
      %v3128 = vadd.f32 0.0, %v3127
      %v3129 = vpop.f32.mrb[0].mxu0
      %3130 = vmatprep.mubr.f32.mxu0 0.0
      %3131 = vmatmul.mubr.f32.gmra.mrb[0].mxu0 %v2240
      %v3132 = vpop.f32.mrb[0].mxu0
      %v3133 = vadd.f32 0.0, %v3132
      %v3134 = vpop.f32.mrb[0].mxu0
      %3135 = vmatprep.mubr.f32.mxu0 0.0
      %3136 = vmatmul.mubr.f32.gmra.mrb[0].mxu0 %v2243
      %v3137 = vpop.f32.mrb[0].mxu0
      %v3138 = vadd.f32 0.0, %v3137
      %v3139 = vpop.f32.mrb[0].mxu0
      %3140 = vmatprep.mubr.f32.mxu0 0.0
      %3141 = vmatmul.mubr.f32.gmra.mrb[0].mxu0 %v2246
      %v3142 = vpop.f32.mrb[0].mxu0
      %v3143 = vadd.f32 0.0, %v3142
      %v3144 = vpop.f32.mrb[0].mxu0
      %3145 = vmatprep.mubr.f32.mxu0 0.0
      %3146 = vmatmul.mubr.f32.gmra.mrb[0].mxu0 %v2249
      %v3147 = vpop.f32.mrb[0].mxu0
      %v3148 = vadd.f32 0.0, %v3147
      %v3149 = vpop.f32.mrb[0].mxu0
      %3150 = vmatprep.mubr.f32.mxu0 0.0
      %3151 = vmatmul.mubr.f32.gmra.mrb[0].mxu0 %v2252
      %v3152 = vpop.f32.mrb[0].mxu0
      %v3153 = vadd.f32 0.0, %v3152
      %v3154 = vpop.f32.mrb[0].mxu0
      %3155 = vmatprep.mubr.f32.mxu0 0.0
      %3156 = vmatmul.mubr.f32.gmra.mrb[0].mxu0 %v2255
      %v3157 = vpop.f32.mrb[0].mxu0
      %v3158 = vadd.f32 0.0, %v3157
      %v3159 = vpop.f32.mrb[0].mxu0
      %3160 = vmatprep.mubr.f32.mxu0 0.0
      %3161 = vmatmul.mubr.f32.gmra.mrb[0].mxu0 %v2258
      %v3162 = vpop.f32.mrb[0].mxu0
      %v3163 = vadd.f32 0.0, %v3162
      %v3164 = vpop.f32.mrb[0].mxu0
      %3165 = vmatprep.mubr.f32.mxu0 0.0
      %3166 = vmatmul.mubr.f32.gmra.mrb[0].mxu0 %v2261
      %v3167 = vpop.f32.mrb[0].mxu0
      %v3168 = vadd.f32 0.0, %v3167
      %v3169 = vpop.f32.mrb[0].mxu0
      %3170 = vmatprep.mubr.f32.mxu0 0.0
      %3171 = vmatmul.mubr.f32.gmra.mrb[0].mxu0 %v2264
      %v3172 = vpop.f32.mrb[0].mxu0
      %v3173 = vadd.f32 0.0, %v3172
      %v3174 = vpop.f32.mrb[0].mxu0
      %3175 = vmatprep.mubr.f32.mxu0 0.0
      %3176 = vmatmul.mubr.f32.gmra.mrb[0].mxu0 %v2267
      %v3177 = vpop.f32.mrb[0].mxu0
      %v3178 = vadd.f32 0.0, %v3177
      %v3179 = vpop.f32.mrb[0].mxu0
      %3180 = vmatprep.mubr.f32.mxu0 0.0
      %3181 = vmatmul.mubr.f32.gmra.mrb[0].mxu0 %v2270
      %v3182 = vpop.f32.mrb[0].mxu0
      %v3183 = vadd.f32 0.0, %v3182
      %v3184 = vpop.f32.mrb[0].mxu0
      %3185 = vmatprep.mubr.f32.mxu0 0.0
      %3186 = vmatmul.mubr.f32.gmra.mrb[0].mxu0 %v2273
      %v3187 = vpop.f32.mrb[0].mxu0
      %v3188 = vadd.f32 0.0, %v3187
      %v3189 = vpop.f32.mrb[0].mxu0
      %3190 = vmatprep.mubr.f32.mxu0 0.0
      %3191 = vmatmul.mubr.f32.gmra.mrb[0].mxu0 %v2276
      %v3192 = vpop.f32.mrb[0].mxu0
      %v3193 = vadd.f32 0.0, %v3192
      %v3194 = vpop.f32.mrb[0].mxu0
      %3195 = vmatprep.mubr.f32.mxu0 0.0
      %3196 = vmatmul.mubr.f32.gmra.mrb[0].mxu0 %v2279
      %v3197 = vpop.f32.mrb[0].mxu0
      %v3198 = vadd.f32 0.0, %v3197
      %v3199 = vpop.f32.mrb[0].mxu0
      %3200 = vmatprep.mubr.f32.mxu0 0.0
      %3201 = vmatmul.mubr.f32.gmra.mrb[0].mxu0 %v2282
      %v3202 = vpop.f32.mrb[0].mxu0
      %v3203 = vadd.f32 0.0, %v3202
      %v3204 = vpop.f32.mrb[0].mxu0
      %3205 = vmatprep.mubr.f32.mxu0 0.0
      %3206 = vmatmul.mubr.f32.gmra.mrb[0].mxu0 %v2285
      %v3207 = vpop.f32.mrb[0].mxu0
      %v3208 = vadd.f32 0.0, %v3207
      %v3209 = vpop.f32.mrb[0].mxu0
      %3210 = vmatprep.mubr.f32.mxu0 0.0
      %3211 = vmatmul.mubr.f32.gmra.mrb[0].mxu0 %v2288
      %v3212 = vpop.f32.mrb[0].mxu0
      %v3213 = vadd.f32 0.0, %v3212
      %v3214 = vpop.f32.mrb[0].mxu0
      %3215 = vmatprep.mubr.f32.mxu0 0.0
      %3216 = vmatmul.mubr.f32.gmra.mrb[0].mxu0 %v2291
      %v3217 = vpop.f32.mrb[0].mxu0
      %v3218 = vadd.f32 0.0, %v3217
      %v3219 = vpop.f32.mrb[0].mxu0
      %3220 = vmatprep.mubr.f32.mxu0 0.0
      %3221 = vmatmul.mubr.f32.gmra.mrb[0].mxu0 %v2294
      %v3222 = vpop.f32.mrb[0].mxu0
      %v3223 = vadd.f32 0.0, %v3222
      %v3224 = vpop.f32.mrb[0].mxu0
      %3225 = vmatprep.mubr.f32.mxu0 0.0
      %3226 = vmatmul.mubr.f32.gmra.mrb[0].mxu0 %v2297
      %v3227 = vpop.f32.mrb[0].mxu0
      %v3228 = vadd.f32 0.0, %v3227
      %v3229 = vpop.f32.mrb[0].mxu0
      %3230 = vmatprep.mubr.f32.mxu0 0.0
      %3231 = vmatmul.mubr.f32.gmra.mrb[0].mxu0 %v2300
      %v3232 = vpop.f32.mrb[0].mxu0
      %v3233 = vadd.f32 0.0, %v3232
      %v3234 = vpop.f32.mrb[0].mxu0
      %3235 = vmatprep.mubr.f32.mxu0 0.0
      %3236 = vmatmul.mubr.f32.gmra.mrb[0].mxu0 %v2303
      %v3237 = vpop.f32.mrb[0].mxu0
      %v3238 = vadd.f32 0.0, %v3237
      %v3239 = vpop.f32.mrb[0].mxu0
      %3240 = vmatprep.mubr.f32.mxu0 0.0
      %3241 = vmatmul.mubr.f32.gmra.mrb[0].mxu0 %v2306
      %v3242 = vpop.f32.mrb[0].mxu0
      %v3243 = vadd.f32 0.0, %v3242
      %v3244 = vpop.f32.mrb[0].mxu0
      %3245 = vmatprep.mubr.f32.mxu0 0.0
      %3246 = vmatmul.mubr.f32.gmra.mrb[0].mxu0 %v2309
      %v3247 = vpop.f32.mrb[0].mxu0
      %v3248 = vadd.f32 0.0, %v3247
      %v3249 = vpop.f32.mrb[0].mxu0
      %3250 = vmatprep.mubr.f32.mxu0 0.0
      %3251 = vmatmul.mubr.f32.gmra.mrb[0].mxu0 %v2312
      %v3252 = vpop.f32.mrb[0].mxu0
      %v3253 = vadd.f32 0.0, %v3252
      %v3254 = vpop.f32.mrb[0].mxu0
      %3255 = vmatprep.mubr.f32.mxu0 0.0
      %3256 = vmatmul.mubr.f32.gmra.mrb[0].mxu0 %v2315
      %v3257 = vpop.f32.mrb[0].mxu0
      %v3258 = vadd.f32 0.0, %v3257
      %v3259 = vpop.f32.mrb[0].mxu0
      %3260 = vmatprep.mubr.f32.mxu0 0.0
      %3261 = vmatmul.mubr.f32.gmra.mrb[0].mxu0 %v2318
      %v3262 = vpop.f32.mrb[0].mxu0
      %v3263 = vadd.f32 0.0, %v3262
      %v3264 = vpop.f32.mrb[0].mxu0
      %3265 = vmatprep.mubr.f32.mxu0 0.0
      %3266 = vmatmul.mubr.f32.gmra.mrb[0].mxu0 %v2321
      %v3267 = vpop.f32.mrb[0].mxu0
      %v3268 = vadd.f32 0.0, %v3267
      %v3269 = vpop.f32.mrb[0].mxu0
      %3270 = vmatprep.mubr.f32.mxu0 0.0
      %3271 = vmatmul.mubr.f32.gmra.mrb[0].mxu0 %v2324
      %v3272 = vpop.f32.mrb[0].mxu0
      %v3273 = vadd.f32 0.0, %v3272
      %v3274 = vpop.f32.mrb[0].mxu0
      %3275 = vmatprep.mubr.f32.mxu0 0.0
      %3276 = vmatmul.mubr.f32.gmra.mrb[0].mxu0 %v2327
      %v3277 = vpop.f32.mrb[0].mxu0
      %v3278 = vadd.f32 0.0, %v3277
      %v3279 = vpop.f32.mrb[0].mxu0
      %3280 = vmatprep.mubr.f32.mxu0 0.0
      %3281 = vmatmul.mubr.f32.gmra.mrb[0].mxu0 %v2330
      %v3282 = vpop.f32.mrb[0].mxu0
      %v3283 = vadd.f32 0.0, %v3282
      %v3284 = vpop.f32.mrb[0].mxu0
      %3285 = vmatprep.mubr.f32.mxu0 0.0
      %3286 = vmatmul.mubr.f32.gmra.mrb[0].mxu0 %v2333
      %v3287 = vpop.f32.mrb[0].mxu0
      %v3288 = vadd.f32 0.0, %v3287
      %v3289 = vpop.f32.mrb[0].mxu0
      %3290 = vmatprep.mubr.f32.mxu0 0.0
      %3291 = vmatmul.mubr.f32.gmra.mrb[0].mxu0 %v2336
      %v3292 = vpop.f32.mrb[0].mxu0
      %v3293 = vadd.f32 0.0, %v3292
      %v3294 = vpop.f32.mrb[0].mxu0
      %3295 = vmatprep.mubr.f32.mxu0 0.0
      %3296 = vmatmul.mubr.f32.gmra.mrb[0].mxu0 %v2339
      %v3297 = vpop.f32.mrb[0].mxu0
      %v3298 = vadd.f32 0.0, %v3297
      %v3299 = vpop.f32.mrb[0].mxu0
      %3300 = vmatprep.mubr.f32.mxu0 0.0
      %3301 = vmatmul.mubr.f32.gmra.mrb[0].mxu0 %v2342
      %v3302 = vpop.f32.mrb[0].mxu0
      %v3303 = vadd.f32 0.0, %v3302
      %v3304 = vpop.f32.mrb[0].mxu0
      %3305 = vmatprep.mubr.f32.mxu0 0.0
      %3306 = vmatmul.mubr.f32.gmra.mrb[0].mxu0 %v2345
      %v3307 = vpop.f32.mrb[0].mxu0
      %v3308 = vadd.f32 0.0, %v3307
      %v3309 = vpop.f32.mrb[0].mxu0
      %3310 = vmatprep.mubr.f32.mxu0 0.0
      %3311 = vmatmul.mubr.f32.gmra.mrb[0].mxu0 %v3013
      %v3312 = vpop.f32.mrb[0].mxu0
      %v3313 = vadd.f32 0.0, %v3312
      %v3314 = vpop.f32.mrb[0].mxu0
      %3315 = vmatprep.mubr.f32.mxu0 0.0
      %3316 = vmatmul.mubr.f32.gmra.mrb[0].mxu0 %v3016
      %v3317 = vpop.f32.mrb[0].mxu0
      %v3318 = vadd.f32 0.0, %v3317
      %v3319 = vpop.f32.mrb[0].mxu0
      %3320 = vmatprep.mubr.f32.mxu0 0.0
      %3321 = vmatmul.mubr.f32.gmra.mrb[0].mxu0 %v3019
      %v3322 = vpop.f32.mrb[0].mxu0
      %v3323 = vadd.f32 0.0, %v3322
      %v3324 = vpop.f32.mrb[0].mxu0
      %3325 = vdwg.mxu0
      %v3326 = vadd.f32 %v2728, %v3088
      %v3327 = vadd.f32 %v2733, %v3093
      %v3328 = vadd.f32 %v2738, %v3098
      %v3329 = vadd.f32 %v2743, %v3103
      %v3330 = vadd.f32 %v2748, %v3108
      %v3331 = vadd.f32 %v2753, %v3113
      %v3332 = vadd.f32 %v2758, %v3118
      %v3333 = vadd.f32 %v2763, %v3123
      %v3334 = vadd.f32 %v2768, %v3128
      %v3335 = vadd.f32 %v2773, %v3133
      %v3336 = vadd.f32 %v2778, %v3138
      %v3337 = vadd.f32 %v2783, %v3143
      %v3338 = vadd.f32 %v2788, %v3148
      %v3339 = vadd.f32 %v2793, %v3153
      %v3340 = vadd.f32 %v2798, %v3158
      %v3341 = vadd.f32 %v2803, %v3163
      %v3342 = vadd.f32 %v2808, %v3168
      %v3343 = vadd.f32 %v2813, %v3173
      %v3344 = vadd.f32 %v2818, %v3178
      %v3345 = vadd.f32 %v2823, %v3183
      %v3346 = vadd.f32 %v2828, %v3188
      %v3347 = vadd.f32 %v2833, %v3193
      %v3348 = vadd.f32 %v2838, %v3198
      %v3349 = vadd.f32 %v2843, %v3203
      %v3350 = vadd.f32 %v2848, %v3208
      %v3351 = vadd.f32 %v2853, %v3213
      %v3352 = vadd.f32 %v2858, %v3218
      %v3353 = vadd.f32 %v2863, %v3223
      %v3354 = vadd.f32 %v2868, %v3228
      %v3355 = vadd.f32 %v2873, %v3233
      %v3356 = vadd.f32 %v2878, %v3238
      %v3357 = vadd.f32 %v2883, %v3243
      %v3358 = vadd.f32 %v2888, %v3248
      %v3359 = vadd.f32 %v2893, %v3253
      %v3360 = vadd.f32 %v2898, %v3258
      %v3361 = vadd.f32 %v2903, %v3263
      %v3362 = vadd.f32 %v2908, %v3268
      %v3363 = vadd.f32 %v2913, %v3273
      %v3364 = vadd.f32 %v2918, %v3278
      %v3365 = vadd.f32 %v2923, %v3283
      %v3366 = vadd.f32 %v2928, %v3288
      %v3367 = vadd.f32 %v2933, %v3293
      %v3368 = vadd.f32 %v2938, %v3298
      %v3369 = vadd.f32 %v2943, %v3303
      %v3370 = vadd.f32 %v2948, %v3308
      %v3371 = vadd.f32 %v2953, %v3313
      %v3372 = vadd.f32 %v2958, %v3318
      %v3373 = vadd.f32 %v2963, %v3323
      %v3374 = vld [vmem:[%s4] sm:$0x1]
      %v3376 = vlaneseq
      %v3377 = vshrl.u32 %v3376, 7
      %v3378 = vsub.s32 0, %v3377
      %v3379 = vrot.slane %v3374, %v3378
      %v3381 = vmul.f32 %v3326, %v3379
      %v3382 = vmul.f32 %v3327, %v3379
      %v3383 = vmul.f32 %v3328, %v3379
      %v3384 = vmul.f32 %v3329, %v3379
      %v3385 = vmul.f32 %v3330, %v3379
      %v3386 = vmul.f32 %v3331, %v3379
      %v3387 = vmul.f32 %v3332, %v3379
      %v3388 = vmul.f32 %v3333, %v3379
      %v3389 = vmul.f32 %v3334, %v3379
      %v3390 = vmul.f32 %v3335, %v3379
      %v3391 = vmul.f32 %v3336, %v3379
      %v3392 = vmul.f32 %v3337, %v3379
      %v3393 = vmul.f32 %v3338, %v3379
      %v3394 = vmul.f32 %v3339, %v3379
      %v3395 = vmul.f32 %v3340, %v3379
      %v3396 = vmul.f32 %v3341, %v3379
      %v3397 = vmul.f32 %v3342, %v3379
      %v3398 = vmul.f32 %v3343, %v3379
      %v3399 = vmul.f32 %v3344, %v3379
      %v3400 = vmul.f32 %v3345, %v3379
      %v3401 = vmul.f32 %v3346, %v3379
      %v3402 = vmul.f32 %v3347, %v3379
      %v3403 = vmul.f32 %v3348, %v3379
      %v3404 = vmul.f32 %v3349, %v3379
      %v3405 = vmul.f32 %v3350, %v3379
      %v3406 = vmul.f32 %v3351, %v3379
      %v3407 = vmul.f32 %v3352, %v3379
      %v3408 = vmul.f32 %v3353, %v3379
      %v3409 = vmul.f32 %v3354, %v3379
      %v3410 = vmul.f32 %v3355, %v3379
      %v3411 = vmul.f32 %v3356, %v3379
      %v3412 = vmul.f32 %v3357, %v3379
      %v3413 = vmul.f32 %v3358, %v3379
      %v3414 = vmul.f32 %v3359, %v3379
      %v3415 = vmul.f32 %v3360, %v3379
      %v3416 = vmul.f32 %v3361, %v3379
      %v3417 = vmul.f32 %v3362, %v3379
      %v3418 = vmul.f32 %v3363, %v3379
      %v3419 = vmul.f32 %v3364, %v3379
      %v3420 = vmul.f32 %v3365, %v3379
      %v3421 = vmul.f32 %v3366, %v3379
      %v3422 = vmul.f32 %v3367, %v3379
      %v3423 = vmul.f32 %v3368, %v3379
      %v3424 = vmul.f32 %v3369, %v3379
      %v3425 = vmul.f32 %v3370, %v3379
      %v3426 = vmul.f32 %v3371, %v3379
      %v3427 = vmul.f32 %v3372, %v3379
      %v3428 = vmul.f32 %v3373, %v3379
      %v3429 = vld [vmem:[%s5] sm:$0x1]
      %v3431 = vlaneseq
      %v3432 = vshrl.u32 %v3431, 7
      %v3433 = vsub.s32 0, %v3432
      %v3434 = vrot.slane %v3429, %v3433
      %v3436 = vadd.f32 %v3381, %v3434
      %v3437 = vadd.f32 %v3382, %v3434
      %v3438 = vadd.f32 %v3383, %v3434
      %v3439 = vadd.f32 %v3384, %v3434
      %v3440 = vadd.f32 %v3385, %v3434
      %v3441 = vadd.f32 %v3386, %v3434
      %v3442 = vadd.f32 %v3387, %v3434
      %v3443 = vadd.f32 %v3388, %v3434
      %v3444 = vadd.f32 %v3389, %v3434
      %v3445 = vadd.f32 %v3390, %v3434
      %v3446 = vadd.f32 %v3391, %v3434
      %v3447 = vadd.f32 %v3392, %v3434
      %v3448 = vadd.f32 %v3393, %v3434
      %v3449 = vadd.f32 %v3394, %v3434
      %v3450 = vadd.f32 %v3395, %v3434
      %v3451 = vadd.f32 %v3396, %v3434
      %v3452 = vadd.f32 %v3397, %v3434
      %v3453 = vadd.f32 %v3398, %v3434
      %v3454 = vadd.f32 %v3399, %v3434
      %v3455 = vadd.f32 %v3400, %v3434
      %v3456 = vadd.f32 %v3401, %v3434
      %v3457 = vadd.f32 %v3402, %v3434
      %v3458 = vadd.f32 %v3403, %v3434
      %v3459 = vadd.f32 %v3404, %v3434
      %v3460 = vadd.f32 %v3405, %v3434
      %v3461 = vadd.f32 %v3406, %v3434
      %v3462 = vadd.f32 %v3407, %v3434
      %v3463 = vadd.f32 %v3408, %v3434
      %v3464 = vadd.f32 %v3409, %v3434
      %v3465 = vadd.f32 %v3410, %v3434
      %v3466 = vadd.f32 %v3411, %v3434
      %v3467 = vadd.f32 %v3412, %v3434
      %v3468 = vadd.f32 %v3413, %v3434
      %v3469 = vadd.f32 %v3414, %v3434
      %v3470 = vadd.f32 %v3415, %v3434
      %v3471 = vadd.f32 %v3416, %v3434
      %v3472 = vadd.f32 %v3417, %v3434
      %v3473 = vadd.f32 %v3418, %v3434
      %v3474 = vadd.f32 %v3419, %v3434
      %v3475 = vadd.f32 %v3420, %v3434
      %v3476 = vadd.f32 %v3421, %v3434
      %v3477 = vadd.f32 %v3422, %v3434
      %v3478 = vadd.f32 %v3423, %v3434
      %v3479 = vadd.f32 %v3424, %v3434
      %v3480 = vadd.f32 %v3425, %v3434
      %v3481 = vadd.f32 %v3426, %v3434
      %v3482 = vadd.f32 %v3427, %v3434
      %v3483 = vadd.f32 %v3428, %v3434
      %v3484 = vmax.f32 %v3436, 0.0
      %v3485 = vmax.f32 %v3437, 0.0
      %v3486 = vmax.f32 %v3438, 0.0
      %v3487 = vmax.f32 %v3439, 0.0
      %v3488 = vmax.f32 %v3440, 0.0
      %v3489 = vmax.f32 %v3441, 0.0
      %v3490 = vmax.f32 %v3442, 0.0
      %v3491 = vmax.f32 %v3443, 0.0
      %v3492 = vmax.f32 %v3444, 0.0
      %v3493 = vmax.f32 %v3445, 0.0
      %v3494 = vmax.f32 %v3446, 0.0
      %v3495 = vmax.f32 %v3447, 0.0
      %v3496 = vmax.f32 %v3448, 0.0
      %v3497 = vmax.f32 %v3449, 0.0
      %v3498 = vmax.f32 %v3450, 0.0
      %v3499 = vmax.f32 %v3451, 0.0
      %v3500 = vmax.f32 %v3452, 0.0
      %v3501 = vmax.f32 %v3453, 0.0
      %v3502 = vmax.f32 %v3454, 0.0
      %v3503 = vmax.f32 %v3455, 0.0
      %v3504 = vmax.f32 %v3456, 0.0
      %v3505 = vmax.f32 %v3457, 0.0
      %v3506 = vmax.f32 %v3458, 0.0
      %v3507 = vmax.f32 %v3459, 0.0
      %v3508 = vmax.f32 %v3460, 0.0
      %v3509 = vmax.f32 %v3461, 0.0
      %v3510 = vmax.f32 %v3462, 0.0
      %v3511 = vmax.f32 %v3463, 0.0
      %v3512 = vmax.f32 %v3464, 0.0
      %v3513 = vmax.f32 %v3465, 0.0
      %v3514 = vmax.f32 %v3466, 0.0
      %v3515 = vmax.f32 %v3467, 0.0
      %v3516 = vmax.f32 %v3468, 0.0
      %v3517 = vmax.f32 %v3469, 0.0
      %v3518 = vmax.f32 %v3470, 0.0
      %v3519 = vmax.f32 %v3471, 0.0
      %v3520 = vmax.f32 %v3472, 0.0
      %v3521 = vmax.f32 %v3473, 0.0
      %v3522 = vmax.f32 %v3474, 0.0
      %v3523 = vmax.f32 %v3475, 0.0
      %v3524 = vmax.f32 %v3476, 0.0
      %v3525 = vmax.f32 %v3477, 0.0
      %v3526 = vmax.f32 %v3478, 0.0
      %v3527 = vmax.f32 %v3479, 0.0
      %v3528 = vmax.f32 %v3480, 0.0
      %v3529 = vmax.f32 %v3481, 0.0
      %v3530 = vmax.f32 %v3482, 0.0
      %v3531 = vmax.f32 %v3483, 0.0
      %v3532 = vsel %vm1462, 1, 0
      %v3533 = vsel %vm1463, 1, 0
      %v3534 = vsel %vm1464, 1, 0
      %vm3535 = vcmp.eq.s32.totalorder %v3532, 1
      %vm3536 = vcmp.eq.s32.totalorder %v3533, 1
      %vm3537 = vcmp.eq.s32.totalorder %v3534, 1
      %v3538 = vsel %vm3535, %v3484, 0.0
      %v3539 = vsel %vm3536, %v3485, 0.0
      %v3540 = vsel %vm3537, %v3486, 0.0
      %v3541 = vsel %vm3535, %v3487, 0.0
      %v3542 = vsel %vm3536, %v3488, 0.0
      %v3543 = vsel %vm3537, %v3489, 0.0
      %v3544 = vsel %vm3535, %v3490, 0.0
      %v3545 = vsel %vm3536, %v3491, 0.0
      %v3546 = vsel %vm3537, %v3492, 0.0
      %v3547 = vsel %vm3535, %v3493, 0.0
      %v3548 = vsel %vm3536, %v3494, 0.0
      %v3549 = vsel %vm3537, %v3495, 0.0
      %v3550 = vsel %vm3535, %v3496, 0.0
      %v3551 = vsel %vm3536, %v3497, 0.0
      %v3552 = vsel %vm3537, %v3498, 0.0
      %v3553 = vsel %vm3535, %v3499, 0.0
      %v3554 = vsel %vm3536, %v3500, 0.0
      %v3555 = vsel %vm3537, %v3501, 0.0
      %v3556 = vsel %vm3535, %v3502, 0.0
      %v3557 = vsel %vm3536, %v3503, 0.0
      %v3558 = vsel %vm3537, %v3504, 0.0
      %v3559 = vsel %vm3535, %v3505, 0.0
      %v3560 = vsel %vm3536, %v3506, 0.0
      %v3561 = vsel %vm3537, %v3507, 0.0
      %v3562 = vsel %vm3535, %v3508, 0.0
      %v3563 = vsel %vm3536, %v3509, 0.0
      %v3564 = vsel %vm3537, %v3510, 0.0
      %v3565 = vsel %vm3535, %v3511, 0.0
      %v3566 = vsel %vm3536, %v3512, 0.0
      %v3567 = vsel %vm3537, %v3513, 0.0
      %v3568 = vsel %vm3535, %v3514, 0.0
      %v3569 = vsel %vm3536, %v3515, 0.0
      %v3570 = vsel %vm3537, %v3516, 0.0
      %v3571 = vsel %vm3535, %v3517, 0.0
      %v3572 = vsel %vm3536, %v3518, 0.0
      %v3573 = vsel %vm3537, %v3519, 0.0
      %v3574 = vsel %vm3535, %v3520, 0.0
      %v3575 = vsel %vm3536, %v3521, 0.0
      %v3576 = vsel %vm3537, %v3522, 0.0
      %v3577 = vsel %vm3535, %v3523, 0.0
      %v3578 = vsel %vm3536, %v3524, 0.0
      %v3579 = vsel %vm3537, %v3525, 0.0
      %v3580 = vsel %vm3535, %v3526, 0.0
      %v3581 = vsel %vm3536, %v3527, 0.0
      %v3582 = vsel %vm3537, %v3528, 0.0
      %v3583 = vsel %vm3535, %v3529, 0.0
      %v3584 = vsel %vm3536, %v3530, 0.0
      %v3585 = vsel %vm3537, %v3531, 0.0
      %3586 = vst.msk [vmem:[#allocation3 + $0x19] sm:$0xff] %vm368, %v3538
      %3587 = vst.msk [vmem:[#allocation3 + $0x21] sm:$0xff] %vm368, %v3539
      %3588 = vst.msk [vmem:[#allocation3 + $0x29] sm:$0xff] %vm368, %v3540
      %3589 = vst.msk [vmem:[#allocation3 + $0x31] sm:$0xff] %vm368, %v3541
      %3590 = vst.msk [vmem:[#allocation3 + $0x39] sm:$0xff] %vm368, %v3542
      %3591 = vst.msk [vmem:[#allocation3 + $0x41] sm:$0xff] %vm368, %v3543
      %3592 = vst.msk [vmem:[#allocation3 + $0x49] sm:$0xff] %vm368, %v3544
      %3593 = vst.msk [vmem:[#allocation3 + $0x51] sm:$0xff] %vm368, %v3545
      %3594 = vst.msk [vmem:[#allocation3 + $0x59] sm:$0xff] %vm368, %v3546
      %3595 = vst.msk [vmem:[#allocation3 + $0x61] sm:$0xff] %vm368, %v3547
      %3596 = vst.msk [vmem:[#allocation3 + $0x69] sm:$0xff] %vm368, %v3548
      %3597 = vst.msk [vmem:[#allocation3 + $0x71] sm:$0xff] %vm368, %v3549
      %3598 = vst.msk [vmem:[#allocation3 + $0x79] sm:$0xff] %vm368, %v3550
      %3599 = vst.msk [vmem:[#allocation3 + $0x81] sm:$0xff] %vm368, %v3551
      %3600 = vst.msk [vmem:[#allocation3 + $0x89] sm:$0xff] %vm368, %v3552
      %3601 = vst.msk [vmem:[#allocation3 + $0x91] sm:$0xff] %vm368, %v3553
      %3602 = vst.msk [vmem:[#allocation3 + $0x99] sm:$0xff] %vm368, %v3554
      %3603 = vst.msk [vmem:[#allocation3 + $0xa1] sm:$0xff] %vm368, %v3555
      %3604 = vst.msk [vmem:[#allocation3 + $0xa9] sm:$0xff] %vm368, %v3556
      %3605 = vst.msk [vmem:[#allocation3 + $0xb1] sm:$0xff] %vm368, %v3557
      %3606 = vst.msk [vmem:[#allocation3 + $0xb9] sm:$0xff] %vm368, %v3558
      %3607 = vst.msk [vmem:[#allocation3 + $0xc1] sm:$0xff] %vm368, %v3559
      %3608 = vst.msk [vmem:[#allocation3 + $0xc9] sm:$0xff] %vm368, %v3560
      %3609 = vst.msk [vmem:[#allocation3 + $0xd1] sm:$0xff] %vm368, %v3561
      %3610 = vst.msk [vmem:[#allocation3 + $0xd9] sm:$0xff] %vm368, %v3562
      %3611 = vst.msk [vmem:[#allocation3 + $0xe1] sm:$0xff] %vm368, %v3563
      %3612 = vst.msk [vmem:[#allocation3 + $0xe9] sm:$0xff] %vm368, %v3564
      %3613 = vst.msk [vmem:[#allocation3 + $0xf1] sm:$0xff] %vm368, %v3565
      %3614 = vst.msk [vmem:[#allocation3 + $0xf9] sm:$0xff] %vm368, %v3566
      %3615 = vst.msk [vmem:[#allocation3 + $0x101] sm:$0xff] %vm368, %v3567
      %3616 = vst.msk [vmem:[#allocation3 + $0x109] sm:$0xff] %vm368, %v3568
      %3617 = vst.msk [vmem:[#allocation3 + $0x111] sm:$0xff] %vm368, %v3569
      %3618 = vst.msk [vmem:[#allocation3 + $0x119] sm:$0xff] %vm368, %v3570
      %3619 = vst.msk [vmem:[#allocation3 + $0x121] sm:$0xff] %vm368, %v3571
      %3620 = vst.msk [vmem:[#allocation3 + $0x129] sm:$0xff] %vm368, %v3572
      %3621 = vst.msk [vmem:[#allocation3 + $0x131] sm:$0xff] %vm368, %v3573
      %3622 = vst.msk [vmem:[#allocation3 + $0x139] sm:$0xff] %vm368, %v3574
      %3623 = vst.msk [vmem:[#allocation3 + $0x141] sm:$0xff] %vm368, %v3575
      %3624 = vst.msk [vmem:[#allocation3 + $0x149] sm:$0xff] %vm368, %v3576
      %3625 = vst.msk [vmem:[#allocation3 + $0x151] sm:$0xff] %vm368, %v3577
      %3626 = vst.msk [vmem:[#allocation3 + $0x159] sm:$0xff] %vm368, %v3578
      %3627 = vst.msk [vmem:[#allocation3 + $0x161] sm:$0xff] %vm368, %v3579
      %3628 = vst.msk [vmem:[#allocation3 + $0x169] sm:$0xff] %vm368, %v3580
      %3629 = vst.msk [vmem:[#allocation3 + $0x171] sm:$0xff] %vm368, %v3581
      %3630 = vst.msk [vmem:[#allocation3 + $0x179] sm:$0xff] %vm368, %v3582
      %3631 = vst.msk [vmem:[#allocation3 + $0x181] sm:$0xff] %vm368, %v3583
      %3632 = vst.msk [vmem:[#allocation3 + $0x189] sm:$0xff] %vm368, %v3584
      %3633 = vst.msk [vmem:[#allocation3 + $0x191] sm:$0xff] %vm368, %v3585
      %v3634 = vld [vmem:[#allocation3] sm:$0xff]
      %v3635 = vld [vmem:[#allocation3 + $0x8] sm:$0xff]
      %v3636 = vld [vmem:[#allocation3 + $0x10] sm:$0xff]
      %v3637 = vld [vmem:[#allocation3 + $0x18] sm:$0xff]
      %v3638 = vld [vmem:[#allocation3 + $0x20] sm:$0xff]
      %v3639 = vld [vmem:[#allocation3 + $0x28] sm:$0xff]
      %v3640 = vld [vmem:[#allocation3 + $0x30] sm:$0xff]
      %v3641 = vld [vmem:[#allocation3 + $0x38] sm:$0xff]
      %v3642 = vld [vmem:[#allocation3 + $0x40] sm:$0xff]
      %v3643 = vld [vmem:[#allocation3 + $0x48] sm:$0xff]
      %v3644 = vld [vmem:[#allocation3 + $0x50] sm:$0xff]
      %v3645 = vld [vmem:[#allocation3 + $0x58] sm:$0xff]
      %v3646 = vld [vmem:[#allocation3 + $0x60] sm:$0xff]
      %v3647 = vld [vmem:[#allocation3 + $0x68] sm:$0xff]
      %v3648 = vld [vmem:[#allocation3 + $0x70] sm:$0xff]
      %v3649 = vld [vmem:[#allocation3 + $0x78] sm:$0xff]
      %v3650 = vld [vmem:[#allocation3 + $0x80] sm:$0xff]
      %v3651 = vld [vmem:[#allocation3 + $0x88] sm:$0xff]
      %v3652 = vld [vmem:[#allocation3 + $0x90] sm:$0xff]
      %v3653 = vld [vmem:[#allocation3 + $0x98] sm:$0xff]
      %v3654 = vld [vmem:[#allocation3 + $0xa0] sm:$0xff]
      %v3655 = vld [vmem:[#allocation3 + $0xa8] sm:$0xff]
      %v3656 = vld [vmem:[#allocation3 + $0xb0] sm:$0xff]
      %v3657 = vld [vmem:[#allocation3 + $0xb8] sm:$0xff]
      %v3658 = vld [vmem:[#allocation3 + $0xc0] sm:$0xff]
      %v3659 = vld [vmem:[#allocation3 + $0xc8] sm:$0xff]
      %v3660 = vld [vmem:[#allocation3 + $0xd0] sm:$0xff]
      %v3661 = vld [vmem:[#allocation3 + $0xd8] sm:$0xff]
      %v3662 = vld [vmem:[#allocation3 + $0xe0] sm:$0xff]
      %v3663 = vld [vmem:[#allocation3 + $0xe8] sm:$0xff]
      %v3664 = vld [vmem:[#allocation3 + $0xf0] sm:$0xff]
      %v3665 = vld [vmem:[#allocation3 + $0xf8] sm:$0xff]
      %v3666 = vld [vmem:[#allocation3 + $0x100] sm:$0xff]
      %v3667 = vld [vmem:[#allocation3 + $0x108] sm:$0xff]
      %v3668 = vld [vmem:[#allocation3 + $0x110] sm:$0xff]
      %v3669 = vld [vmem:[#allocation3 + $0x118] sm:$0xff]
      %v3670 = vld [vmem:[#allocation3 + $0x120] sm:$0xff]
      %v3671 = vld [vmem:[#allocation3 + $0x128] sm:$0xff]
      %v3672 = vld [vmem:[#allocation3 + $0x130] sm:$0xff]
      %v3673 = vld [vmem:[#allocation3 + $0x138] sm:$0xff]
      %v3674 = vld [vmem:[#allocation3 + $0x140] sm:$0xff]
      %v3675 = vld [vmem:[#allocation3 + $0x148] sm:$0xff]
      %v3676 = vld [vmem:[#allocation3 + $0x150] sm:$0xff]
      %v3677 = vld [vmem:[#allocation3 + $0x158] sm:$0xff]
      %v3678 = vld [vmem:[#allocation3 + $0x160] sm:$0xff]
      %v3679 = vld [vmem:[#allocation3 + $0x168] sm:$0xff]
      %v3680 = vld [vmem:[#allocation3 + $0x170] sm:$0xff]
      %v3681 = vld [vmem:[#allocation3 + $0x178] sm:$0xff]
      %v3682 = vld [vmem:[#allocation3 + $0x1] sm:$0xff]
      %v3683 = vld [vmem:[#allocation3 + $0x9] sm:$0xff]
      %v3684 = vld [vmem:[#allocation3 + $0x11] sm:$0xff]
      %v3685 = vld [vmem:[#allocation3 + $0x19] sm:$0xff]
      %v3686 = vld [vmem:[#allocation3 + $0x21] sm:$0xff]
      %v3687 = vld [vmem:[#allocation3 + $0x29] sm:$0xff]
      %v3688 = vld [vmem:[#allocation3 + $0x31] sm:$0xff]
      %v3689 = vld [vmem:[#allocation3 + $0x39] sm:$0xff]
      %v3690 = vld [vmem:[#allocation3 + $0x41] sm:$0xff]
      %v3691 = vld [vmem:[#allocation3 + $0x49] sm:$0xff]
      %v3692 = vld [vmem:[#allocation3 + $0x51] sm:$0xff]
      %v3693 = vld [vmem:[#allocation3 + $0x59] sm:$0xff]
      %v3694 = vld [vmem:[#allocation3 + $0x61] sm:$0xff]
      %v3695 = vld [vmem:[#allocation3 + $0x69] sm:$0xff]
      %v3696 = vld [vmem:[#allocation3 + $0x71] sm:$0xff]
      %v3697 = vld [vmem:[#allocation3 + $0x79] sm:$0xff]
      %v3698 = vld [vmem:[#allocation3 + $0x81] sm:$0xff]
      %v3699 = vld [vmem:[#allocation3 + $0x89] sm:$0xff]
      %v3700 = vld [vmem:[#allocation3 + $0x91] sm:$0xff]
      %v3701 = vld [vmem:[#allocation3 + $0x99] sm:$0xff]
      %v3702 = vld [vmem:[#allocation3 + $0xa1] sm:$0xff]
      %v3703 = vld [vmem:[#allocation3 + $0xa9] sm:$0xff]
      %v3704 = vld [vmem:[#allocation3 + $0xb1] sm:$0xff]
      %v3705 = vld [vmem:[#allocation3 + $0xb9] sm:$0xff]
      %v3706 = vld [vmem:[#allocation3 + $0xc1] sm:$0xff]
      %v3707 = vld [vmem:[#allocation3 + $0xc9] sm:$0xff]
      %v3708 = vld [vmem:[#allocation3 + $0xd1] sm:$0xff]
      %v3709 = vld [vmem:[#allocation3 + $0xd9] sm:$0xff]
      %v3710 = vld [vmem:[#allocation3 + $0xe1] sm:$0xff]
      %v3711 = vld [vmem:[#allocation3 + $0xe9] sm:$0xff]
      %v3712 = vld [vmem:[#allocation3 + $0xf1] sm:$0xff]
      %v3713 = vld [vmem:[#allocation3 + $0xf9] sm:$0xff]
      %v3714 = vld [vmem:[#allocation3 + $0x101] sm:$0xff]
      %v3715 = vld [vmem:[#allocation3 + $0x109] sm:$0xff]
      %v3716 = vld [vmem:[#allocation3 + $0x111] sm:$0xff]
      %v3717 = vld [vmem:[#allocation3 + $0x119] sm:$0xff]
      %v3718 = vld [vmem:[#allocation3 + $0x121] sm:$0xff]
      %v3719 = vld [vmem:[#allocation3 + $0x129] sm:$0xff]
      %v3720 = vld [vmem:[#allocation3 + $0x131] sm:$0xff]
      %v3721 = vld [vmem:[#allocation3 + $0x139] sm:$0xff]
      %v3722 = vld [vmem:[#allocation3 + $0x141] sm:$0xff]
      %v3723 = vld [vmem:[#allocation3 + $0x149] sm:$0xff]
      %v3724 = vld [vmem:[#allocation3 + $0x151] sm:$0xff]
      %v3725 = vld [vmem:[#allocation3 + $0x159] sm:$0xff]
      %v3726 = vld [vmem:[#allocation3 + $0x161] sm:$0xff]
      %v3727 = vld [vmem:[#allocation3 + $0x169] sm:$0xff]
      %v3728 = vld [vmem:[#allocation3 + $0x171] sm:$0xff]
      %v3729 = vld [vmem:[#allocation3 + $0x179] sm:$0xff]
      %v3730 = vld [vmem:[#allocation3 + $0x2] sm:$0xff]
      %v3731 = vld [vmem:[#allocation3 + $0xa] sm:$0xff]
      %v3732 = vld [vmem:[#allocation3 + $0x12] sm:$0xff]
      %v3733 = vld [vmem:[#allocation3 + $0x1a] sm:$0xff]
      %v3734 = vld [vmem:[#allocation3 + $0x22] sm:$0xff]
      %v3735 = vld [vmem:[#allocation3 + $0x2a] sm:$0xff]
      %v3736 = vld [vmem:[#allocation3 + $0x32] sm:$0xff]
      %v3737 = vld [vmem:[#allocation3 + $0x3a] sm:$0xff]
      %v3738 = vld [vmem:[#allocation3 + $0x42] sm:$0xff]
      %v3739 = vld [vmem:[#allocation3 + $0x4a] sm:$0xff]
      %v3740 = vld [vmem:[#allocation3 + $0x52] sm:$0xff]
      %v3741 = vld [vmem:[#allocation3 + $0x5a] sm:$0xff]
      %v3742 = vld [vmem:[#allocation3 + $0x62] sm:$0xff]
      %v3743 = vld [vmem:[#allocation3 + $0x6a] sm:$0xff]
      %v3744 = vld [vmem:[#allocation3 + $0x72] sm:$0xff]
      %v3745 = vld [vmem:[#allocation3 + $0x7a] sm:$0xff]
      %v3746 = vld [vmem:[#allocation3 + $0x82] sm:$0xff]
      %v3747 = vld [vmem:[#allocation3 + $0x8a] sm:$0xff]
      %v3748 = vld [vmem:[#allocation3 + $0x92] sm:$0xff]
      %v3749 = vld [vmem:[#allocation3 + $0x9a] sm:$0xff]
      %v3750 = vld [vmem:[#allocation3 + $0xa2] sm:$0xff]
      %v3751 = vld [vmem:[#allocation3 + $0xaa] sm:$0xff]
      %v3752 = vld [vmem:[#allocation3 + $0xb2] sm:$0xff]
      %v3753 = vld [vmem:[#allocation3 + $0xba] sm:$0xff]
      %v3754 = vld [vmem:[#allocation3 + $0xc2] sm:$0xff]
      %v3755 = vld [vmem:[#allocation3 + $0xca] sm:$0xff]
      %v3756 = vld [vmem:[#allocation3 + $0xd2] sm:$0xff]
      %v3757 = vld [vmem:[#allocation3 + $0xda] sm:$0xff]
      %v3758 = vld [vmem:[#allocation3 + $0xe2] sm:$0xff]
      %v3759 = vld [vmem:[#allocation3 + $0xea] sm:$0xff]
      %v3760 = vld [vmem:[#allocation3 + $0xf2] sm:$0xff]
      %v3761 = vld [vmem:[#allocation3 + $0xfa] sm:$0xff]
      %v3762 = vld [vmem:[#allocation3 + $0x102] sm:$0xff]
      %v3763 = vld [vmem:[#allocation3 + $0x10a] sm:$0xff]
      %v3764 = vld [vmem:[#allocation3 + $0x112] sm:$0xff]
      %v3765 = vld [vmem:[#allocation3 + $0x11a] sm:$0xff]
      %v3766 = vld [vmem:[#allocation3 + $0x122] sm:$0xff]
      %v3767 = vld [vmem:[#allocation3 + $0x12a] sm:$0xff]
      %v3768 = vld [vmem:[#allocation3 + $0x132] sm:$0xff]
      %v3769 = vld [vmem:[#allocation3 + $0x13a] sm:$0xff]
      %v3770 = vld [vmem:[#allocation3 + $0x142] sm:$0xff]
      %v3771 = vld [vmem:[#allocation3 + $0x14a] sm:$0xff]
      %v3772 = vld [vmem:[#allocation3 + $0x152] sm:$0xff]
      %v3773 = vld [vmem:[#allocation3 + $0x15a] sm:$0xff]
      %v3774 = vld [vmem:[#allocation3 + $0x162] sm:$0xff]
      %v3775 = vld [vmem:[#allocation3 + $0x16a] sm:$0xff]
      %v3776 = vld [vmem:[#allocation3 + $0x172] sm:$0xff]
      %v3777 = vld [vmem:[#allocation3 + $0x17a] sm:$0xff]
      %3826 = vrot.lane.b32.xlu0 %v3682, 8
      %v3827 = vpop.permute.xlu0 %3826
      %3828 = vrot.lane.b32.xlu0 %v3683, 8
      %v3829 = vpop.permute.xlu0 %3828
      %3830 = vrot.lane.b32.xlu0 %v3684, 8
      %v3831 = vpop.permute.xlu0 %3830
      %3832 = vrot.lane.b32.xlu0 %v3685, 8
      %v3833 = vpop.permute.xlu0 %3832
      %3834 = vrot.lane.b32.xlu0 %v3686, 8
      %v3835 = vpop.permute.xlu0 %3834
      %3836 = vrot.lane.b32.xlu0 %v3687, 8
      %v3837 = vpop.permute.xlu0 %3836
      %3838 = vrot.lane.b32.xlu0 %v3688, 8
      %v3839 = vpop.permute.xlu0 %3838
      %3840 = vrot.lane.b32.xlu0 %v3689, 8
      %v3841 = vpop.permute.xlu0 %3840
      %3842 = vrot.lane.b32.xlu0 %v3690, 8
      %v3843 = vpop.permute.xlu0 %3842
      %3844 = vrot.lane.b32.xlu0 %v3691, 8
      %v3845 = vpop.permute.xlu0 %3844
      %3846 = vrot.lane.b32.xlu0 %v3692, 8
      %v3847 = vpop.permute.xlu0 %3846
      %3848 = vrot.lane.b32.xlu0 %v3693, 8
      %v3849 = vpop.permute.xlu0 %3848
      %3850 = vrot.lane.b32.xlu0 %v3694, 8
      %v3851 = vpop.permute.xlu0 %3850
      %3852 = vrot.lane.b32.xlu0 %v3695, 8
      %v3853 = vpop.permute.xlu0 %3852
      %3854 = vrot.lane.b32.xlu0 %v3696, 8
      %v3855 = vpop.permute.xlu0 %3854
      %3856 = vrot.lane.b32.xlu0 %v3697, 8
      %v3857 = vpop.permute.xlu0 %3856
      %3858 = vrot.lane.b32.xlu0 %v3698, 8
      %v3859 = vpop.permute.xlu0 %3858
      %3860 = vrot.lane.b32.xlu0 %v3699, 8
      %v3861 = vpop.permute.xlu0 %3860
      %3862 = vrot.lane.b32.xlu0 %v3700, 8
      %v3863 = vpop.permute.xlu0 %3862
      %3864 = vrot.lane.b32.xlu0 %v3701, 8
      %v3865 = vpop.permute.xlu0 %3864
      %3866 = vrot.lane.b32.xlu0 %v3702, 8
      %v3867 = vpop.permute.xlu0 %3866
      %3868 = vrot.lane.b32.xlu0 %v3703, 8
      %v3869 = vpop.permute.xlu0 %3868
      %3870 = vrot.lane.b32.xlu0 %v3704, 8
      %v3871 = vpop.permute.xlu0 %3870
      %3872 = vrot.lane.b32.xlu0 %v3705, 8
      %v3873 = vpop.permute.xlu0 %3872
      %3874 = vrot.lane.b32.xlu0 %v3706, 8
      %v3875 = vpop.permute.xlu0 %3874
      %3876 = vrot.lane.b32.xlu0 %v3707, 8
      %v3877 = vpop.permute.xlu0 %3876
      %3878 = vrot.lane.b32.xlu0 %v3708, 8
      %v3879 = vpop.permute.xlu0 %3878
      %3880 = vrot.lane.b32.xlu0 %v3709, 8
      %v3881 = vpop.permute.xlu0 %3880
      %3882 = vrot.lane.b32.xlu0 %v3710, 8
      %v3883 = vpop.permute.xlu0 %3882
      %3884 = vrot.lane.b32.xlu0 %v3711, 8
      %v3885 = vpop.permute.xlu0 %3884
      %3886 = vrot.lane.b32.xlu0 %v3712, 8
      %v3887 = vpop.permute.xlu0 %3886
      %3888 = vrot.lane.b32.xlu0 %v3713, 8
      %v3889 = vpop.permute.xlu0 %3888
      %3890 = vrot.lane.b32.xlu0 %v3714, 8
      %v3891 = vpop.permute.xlu0 %3890
      %3892 = vrot.lane.b32.xlu0 %v3715, 8
      %v3893 = vpop.permute.xlu0 %3892
      %3894 = vrot.lane.b32.xlu0 %v3716, 8
      %v3895 = vpop.permute.xlu0 %3894
      %3896 = vrot.lane.b32.xlu0 %v3717, 8
      %v3897 = vpop.permute.xlu0 %3896
      %3898 = vrot.lane.b32.xlu0 %v3718, 8
      %v3899 = vpop.permute.xlu0 %3898
      %3900 = vrot.lane.b32.xlu0 %v3719, 8
      %v3901 = vpop.permute.xlu0 %3900
      %3902 = vrot.lane.b32.xlu0 %v3720, 8
      %v3903 = vpop.permute.xlu0 %3902
      %3904 = vrot.lane.b32.xlu0 %v3721, 8
      %v3905 = vpop.permute.xlu0 %3904
      %3906 = vrot.lane.b32.xlu0 %v3722, 8
      %v3907 = vpop.permute.xlu0 %3906
      %3908 = vrot.lane.b32.xlu0 %v3723, 8
      %v3909 = vpop.permute.xlu0 %3908
      %3910 = vrot.lane.b32.xlu0 %v3724, 8
      %v3911 = vpop.permute.xlu0 %3910
      %3912 = vrot.lane.b32.xlu0 %v3725, 8
      %v3913 = vpop.permute.xlu0 %3912
      %3914 = vrot.lane.b32.xlu0 %v3726, 8
      %v3915 = vpop.permute.xlu0 %3914
      %3916 = vrot.lane.b32.xlu0 %v3727, 8
      %v3917 = vpop.permute.xlu0 %3916
      %3918 = vrot.lane.b32.xlu0 %v3728, 8
      %v3919 = vpop.permute.xlu0 %3918
      %3920 = vrot.lane.b32.xlu0 %v3729, 8
      %v3921 = vpop.permute.xlu0 %3920
      %4018 = vrot.lane.b32.xlu0 %v3730, 16
      %v4019 = vpop.permute.xlu0 %4018
      %4020 = vrot.lane.b32.xlu0 %v3731, 16
      %v4021 = vpop.permute.xlu0 %4020
      %4022 = vrot.lane.b32.xlu0 %v3732, 16
      %v4023 = vpop.permute.xlu0 %4022
      %4024 = vrot.lane.b32.xlu0 %v3733, 16
      %v4025 = vpop.permute.xlu0 %4024
      %4026 = vrot.lane.b32.xlu0 %v3734, 16
      %v4027 = vpop.permute.xlu0 %4026
      %4028 = vrot.lane.b32.xlu0 %v3735, 16
      %v4029 = vpop.permute.xlu0 %4028
      %4030 = vrot.lane.b32.xlu0 %v3736, 16
      %v4031 = vpop.permute.xlu0 %4030
      %4032 = vrot.lane.b32.xlu0 %v3737, 16
      %v4033 = vpop.permute.xlu0 %4032
      %4034 = vrot.lane.b32.xlu0 %v3738, 16
      %v4035 = vpop.permute.xlu0 %4034
      %4036 = vrot.lane.b32.xlu0 %v3739, 16
      %v4037 = vpop.permute.xlu0 %4036
      %4038 = vrot.lane.b32.xlu0 %v3740, 16
      %v4039 = vpop.permute.xlu0 %4038
      %4040 = vrot.lane.b32.xlu0 %v3741, 16
      %v4041 = vpop.permute.xlu0 %4040
      %4042 = vrot.lane.b32.xlu0 %v3742, 16
      %v4043 = vpop.permute.xlu0 %4042
      %4044 = vrot.lane.b32.xlu0 %v3743, 16
      %v4045 = vpop.permute.xlu0 %4044
      %4046 = vrot.lane.b32.xlu0 %v3744, 16
      %v4047 = vpop.permute.xlu0 %4046
      %4048 = vrot.lane.b32.xlu0 %v3745, 16
      %v4049 = vpop.permute.xlu0 %4048
      %4050 = vrot.lane.b32.xlu0 %v3746, 16
      %v4051 = vpop.permute.xlu0 %4050
      %4052 = vrot.lane.b32.xlu0 %v3747, 16
      %v4053 = vpop.permute.xlu0 %4052
      %4054 = vrot.lane.b32.xlu0 %v3748, 16
      %v4055 = vpop.permute.xlu0 %4054
      %4056 = vrot.lane.b32.xlu0 %v3749, 16
      %v4057 = vpop.permute.xlu0 %4056
      %4058 = vrot.lane.b32.xlu0 %v3750, 16
      %v4059 = vpop.permute.xlu0 %4058
      %4060 = vrot.lane.b32.xlu0 %v3751, 16
      %v4061 = vpop.permute.xlu0 %4060
      %4062 = vrot.lane.b32.xlu0 %v3752, 16
      %v4063 = vpop.permute.xlu0 %4062
      %4064 = vrot.lane.b32.xlu0 %v3753, 16
      %v4065 = vpop.permute.xlu0 %4064
      %4066 = vrot.lane.b32.xlu0 %v3754, 16
      %v4067 = vpop.permute.xlu0 %4066
      %4068 = vrot.lane.b32.xlu0 %v3755, 16
      %v4069 = vpop.permute.xlu0 %4068
      %4070 = vrot.lane.b32.xlu0 %v3756, 16
      %v4071 = vpop.permute.xlu0 %4070
      %4072 = vrot.lane.b32.xlu0 %v3757, 16
      %v4073 = vpop.permute.xlu0 %4072
      %4074 = vrot.lane.b32.xlu0 %v3758, 16
      %v4075 = vpop.permute.xlu0 %4074
      %4076 = vrot.lane.b32.xlu0 %v3759, 16
      %v4077 = vpop.permute.xlu0 %4076
      %4078 = vrot.lane.b32.xlu0 %v3760, 16
      %v4079 = vpop.permute.xlu0 %4078
      %4080 = vrot.lane.b32.xlu0 %v3761, 16
      %v4081 = vpop.permute.xlu0 %4080
      %4082 = vrot.lane.b32.xlu0 %v3762, 16
      %v4083 = vpop.permute.xlu0 %4082
      %4084 = vrot.lane.b32.xlu0 %v3763, 16
      %v4085 = vpop.permute.xlu0 %4084
      %4086 = vrot.lane.b32.xlu0 %v3764, 16
      %v4087 = vpop.permute.xlu0 %4086
      %4088 = vrot.lane.b32.xlu0 %v3765, 16
      %v4089 = vpop.permute.xlu0 %4088
      %4090 = vrot.lane.b32.xlu0 %v3766, 16
      %v4091 = vpop.permute.xlu0 %4090
      %4092 = vrot.lane.b32.xlu0 %v3767, 16
      %v4093 = vpop.permute.xlu0 %4092
      %4094 = vrot.lane.b32.xlu0 %v3768, 16
      %v4095 = vpop.permute.xlu0 %4094
      %4096 = vrot.lane.b32.xlu0 %v3769, 16
      %v4097 = vpop.permute.xlu0 %4096
      %4098 = vrot.lane.b32.xlu0 %v3770, 16
      %v4099 = vpop.permute.xlu0 %4098
      %4100 = vrot.lane.b32.xlu0 %v3771, 16
      %v4101 = vpop.permute.xlu0 %4100
      %4102 = vrot.lane.b32.xlu0 %v3772, 16
      %v4103 = vpop.permute.xlu0 %4102
      %4104 = vrot.lane.b32.xlu0 %v3773, 16
      %v4105 = vpop.permute.xlu0 %4104
      %4106 = vrot.lane.b32.xlu0 %v3774, 16
      %v4107 = vpop.permute.xlu0 %4106
      %4108 = vrot.lane.b32.xlu0 %v3775, 16
      %v4109 = vpop.permute.xlu0 %4108
      %4110 = vrot.lane.b32.xlu0 %v3776, 16
      %v4111 = vpop.permute.xlu0 %4110
      %4112 = vrot.lane.b32.xlu0 %v3777, 16
      %v4113 = vpop.permute.xlu0 %4112
      %v4162 = vsel %vm368, %v3634, %v3827
      %v4163 = vsel %vm368, %v3635, %v3829
      %v4164 = vsel %vm368, %v3636, %v3831
      %v4165 = vsel %vm368, %v3637, %v3833
      %v4166 = vsel %vm368, %v3638, %v3835
      %v4167 = vsel %vm368, %v3639, %v3837
      %v4168 = vsel %vm368, %v3640, %v3839
      %v4169 = vsel %vm368, %v3641, %v3841
      %v4170 = vsel %vm368, %v3642, %v3843
      %v4171 = vsel %vm368, %v3643, %v3845
      %v4172 = vsel %vm368, %v3644, %v3847
      %v4173 = vsel %vm368, %v3645, %v3849
      %v4174 = vsel %vm368, %v3646, %v3851
      %v4175 = vsel %vm368, %v3647, %v3853
      %v4176 = vsel %vm368, %v3648, %v3855
      %v4177 = vsel %vm368, %v3649, %v3857
      %v4178 = vsel %vm368, %v3650, %v3859
      %v4179 = vsel %vm368, %v3651, %v3861
      %v4180 = vsel %vm368, %v3652, %v3863
      %v4181 = vsel %vm368, %v3653, %v3865
      %v4182 = vsel %vm368, %v3654, %v3867
      %v4183 = vsel %vm368, %v3655, %v3869
      %v4184 = vsel %vm368, %v3656, %v3871
      %v4185 = vsel %vm368, %v3657, %v3873
      %v4186 = vsel %vm368, %v3658, %v3875
      %v4187 = vsel %vm368, %v3659, %v3877
      %v4188 = vsel %vm368, %v3660, %v3879
      %v4189 = vsel %vm368, %v3661, %v3881
      %v4190 = vsel %vm368, %v3662, %v3883
      %v4191 = vsel %vm368, %v3663, %v3885
      %v4192 = vsel %vm368, %v3664, %v3887
      %v4193 = vsel %vm368, %v3665, %v3889
      %v4194 = vsel %vm368, %v3666, %v3891
      %v4195 = vsel %vm368, %v3667, %v3893
      %v4196 = vsel %vm368, %v3668, %v3895
      %v4197 = vsel %vm368, %v3669, %v3897
      %v4198 = vsel %vm368, %v3670, %v3899
      %v4199 = vsel %vm368, %v3671, %v3901
      %v4200 = vsel %vm368, %v3672, %v3903
      %v4201 = vsel %vm368, %v3673, %v3905
      %v4202 = vsel %vm368, %v3674, %v3907
      %v4203 = vsel %vm368, %v3675, %v3909
      %v4204 = vsel %vm368, %v3676, %v3911
      %v4205 = vsel %vm368, %v3677, %v3913
      %v4206 = vsel %vm368, %v3678, %v3915
      %v4207 = vsel %vm368, %v3679, %v3917
      %v4208 = vsel %vm368, %v3680, %v3919
      %v4209 = vsel %vm368, %v3681, %v3921
      %v4210 = vsel %vm326, %v4162, %v4019
      %v4211 = vsel %vm326, %v4163, %v4021
      %v4212 = vsel %vm326, %v4164, %v4023
      %v4213 = vsel %vm326, %v4165, %v4025
      %v4214 = vsel %vm326, %v4166, %v4027
      %v4215 = vsel %vm326, %v4167, %v4029
      %v4216 = vsel %vm326, %v4168, %v4031
      %v4217 = vsel %vm326, %v4169, %v4033
      %v4218 = vsel %vm326, %v4170, %v4035
      %v4219 = vsel %vm326, %v4171, %v4037
      %v4220 = vsel %vm326, %v4172, %v4039
      %v4221 = vsel %vm326, %v4173, %v4041
      %v4222 = vsel %vm326, %v4174, %v4043
      %v4223 = vsel %vm326, %v4175, %v4045
      %v4224 = vsel %vm326, %v4176, %v4047
      %v4225 = vsel %vm326, %v4177, %v4049
      %v4226 = vsel %vm326, %v4178, %v4051
      %v4227 = vsel %vm326, %v4179, %v4053
      %v4228 = vsel %vm326, %v4180, %v4055
      %v4229 = vsel %vm326, %v4181, %v4057
      %v4230 = vsel %vm326, %v4182, %v4059
      %v4231 = vsel %vm326, %v4183, %v4061
      %v4232 = vsel %vm326, %v4184, %v4063
      %v4233 = vsel %vm326, %v4185, %v4065
      %v4234 = vsel %vm326, %v4186, %v4067
      %v4235 = vsel %vm326, %v4187, %v4069
      %v4236 = vsel %vm326, %v4188, %v4071
      %v4237 = vsel %vm326, %v4189, %v4073
      %v4238 = vsel %vm326, %v4190, %v4075
      %v4239 = vsel %vm326, %v4191, %v4077
      %v4240 = vsel %vm326, %v4192, %v4079
      %v4241 = vsel %vm326, %v4193, %v4081
      %v4242 = vsel %vm326, %v4194, %v4083
      %v4243 = vsel %vm326, %v4195, %v4085
      %v4244 = vsel %vm326, %v4196, %v4087
      %v4245 = vsel %vm326, %v4197, %v4089
      %v4246 = vsel %vm326, %v4198, %v4091
      %v4247 = vsel %vm326, %v4199, %v4093
      %v4248 = vsel %vm326, %v4200, %v4095
      %v4249 = vsel %vm326, %v4201, %v4097
      %v4250 = vsel %vm326, %v4202, %v4099
      %v4251 = vsel %vm326, %v4203, %v4101
      %v4252 = vsel %vm326, %v4204, %v4103
      %v4253 = vsel %vm326, %v4205, %v4105
      %v4254 = vsel %vm326, %v4206, %v4107
      %v4255 = vsel %vm326, %v4207, %v4109
      %v4256 = vsel %vm326, %v4208, %v4111
      %v4257 = vsel %vm326, %v4209, %v4113
      %v4258 = vld [vmem:[%s3] sm:$0xff]
      %v4259 = vld [vmem:[%s3 + $0x8] sm:$0xff]
      %v4260 = vld [vmem:[%s3 + $0x10] sm:$0xff]
      %v4261 = vld [vmem:[#allocation3 + $0x180] sm:$0xff]
      %v4262 = vld [vmem:[#allocation3 + $0x188] sm:$0xff]
      %v4263 = vld [vmem:[#allocation3 + $0x190] sm:$0xff]
      %v4264 = vld [vmem:[#allocation3 + $0x181] sm:$0xff]
      %v4265 = vld [vmem:[#allocation3 + $0x189] sm:$0xff]
      %v4266 = vld [vmem:[#allocation3 + $0x191] sm:$0xff]
      %v4267 = vld [vmem:[#allocation3 + $0x182] sm:$0xff]
      %v4268 = vld [vmem:[#allocation3 + $0x18a] sm:$0xff]
      %v4269 = vld [vmem:[#allocation3 + $0x192] sm:$0xff]
      %4273 = vrot.lane.b32.xlu0 %v4264, 8
      %v4274 = vpop.permute.xlu0 %4273
      %4275 = vrot.lane.b32.xlu0 %v4265, 8
      %v4276 = vpop.permute.xlu0 %4275
      %4277 = vrot.lane.b32.xlu0 %v4266, 8
      %v4278 = vpop.permute.xlu0 %4277
      %4285 = vrot.lane.b32.xlu0 %v4267, 16
      %v4286 = vpop.permute.xlu0 %4285
      %4287 = vrot.lane.b32.xlu0 %v4268, 16
      %v4288 = vpop.permute.xlu0 %4287
      %4289 = vrot.lane.b32.xlu0 %v4269, 16
      %v4290 = vpop.permute.xlu0 %4289
      %v4294 = vsel %vm368, %v4261, %v4274
      %v4295 = vsel %vm368, %v4262, %v4276
      %v4296 = vsel %vm368, %v4263, %v4278
      %v4297 = vsel %vm326, %v4294, %v4286
      %v4298 = vsel %vm326, %v4295, %v4288
      %v4299 = vsel %vm326, %v4296, %v4290
      %s4300 = scalar_lea.vmem %s3, 24
      %v4301 = vld [vmem:[%s4300] sm:$0xff]
      %v4302 = vld [vmem:[%s4300 + $0x8] sm:$0xff]
      %v4303 = vld [vmem:[%s4300 + $0x10] sm:$0xff]
      %vm4304 = vcmask 195584
      %v4306 = vsel %vm4304, %v4213, 0
      %v4309 = vsel %vm4304, %v4214, 0
      %v4312 = vsel %vm4304, %v4215, 0
      %v4315 = vsel %vm4304, %v4216, 0
      %v4318 = vsel %vm4304, %v4217, 0
      %v4321 = vsel %vm4304, %v4218, 0
      %v4324 = vsel %vm4304, %v4219, 0
      %v4327 = vsel %vm4304, %v4220, 0
      %v4330 = vsel %vm4304, %v4221, 0
      %v4333 = vsel %vm4304, %v4222, 0
      %v4336 = vsel %vm4304, %v4223, 0
      %v4339 = vsel %vm4304, %v4224, 0
      %v4342 = vsel %vm4304, %v4225, 0
      %v4345 = vsel %vm4304, %v4226, 0
      %v4348 = vsel %vm4304, %v4227, 0
      %v4351 = vsel %vm4304, %v4228, 0
      %v4354 = vsel %vm4304, %v4229, 0
      %v4357 = vsel %vm4304, %v4230, 0
      %v4360 = vsel %vm4304, %v4231, 0
      %v4363 = vsel %vm4304, %v4232, 0
      %v4366 = vsel %vm4304, %v4233, 0
      %v4369 = vsel %vm4304, %v4234, 0
      %v4372 = vsel %vm4304, %v4235, 0
      %v4375 = vsel %vm4304, %v4236, 0
      %v4378 = vsel %vm4304, %v4237, 0
      %v4381 = vsel %vm4304, %v4238, 0
      %v4384 = vsel %vm4304, %v4239, 0
      %v4387 = vsel %vm4304, %v4240, 0
      %v4390 = vsel %vm4304, %v4241, 0
      %v4393 = vsel %vm4304, %v4242, 0
      %v4396 = vsel %vm4304, %v4243, 0
      %v4399 = vsel %vm4304, %v4244, 0
      %v4402 = vsel %vm4304, %v4245, 0
      %v4405 = vsel %vm4304, %v4246, 0
      %v4408 = vsel %vm4304, %v4247, 0
      %v4411 = vsel %vm4304, %v4248, 0
      %v4414 = vsel %vm4304, %v4249, 0
      %v4417 = vsel %vm4304, %v4250, 0
      %v4420 = vsel %vm4304, %v4251, 0
      %v4423 = vsel %vm4304, %v4252, 0
      %v4426 = vsel %vm4304, %v4253, 0
      %v4429 = vsel %vm4304, %v4254, 0
      %v4432 = vsel %vm4304, %v4255, 0
      %v4435 = vsel %vm4304, %v4256, 0
      %v4438 = vsel %vm4304, %v4257, 0
      %v4441 = vsel %vm4304, %v4297, 0
      %v4444 = vsel %vm4304, %v4298, 0
      %v4447 = vsel %vm4304, %v4299, 0
      %4449 = vmatprep.subr.mxu0 0.0
      %4450 = vmatpush1.msra.mxu0 %v4301
      %4451 = vmatprep.subr.mxu0 0.0
      %4452 = vmatpush1.msra.mxu0 %v4302
      %4453 = vmatprep.subr.mxu0 0.0
      %4454 = vmatpush1.msra.mxu0 %v4303
      %4455 = vmatprep.subr.mxu0 0.0
      %4456 = vmatpush1.msra.mxu0 0.0
      %4457 = vmatprep.subr.mxu0 0.0
      %4458 = vmatpush1.msra.mxu0 0.0
      %4459 = vmatprep.subr.mxu0 0.0
      %4460 = vmatpush1.msra.mxu0 0.0
      %4461 = vmatprep.subr.mxu0 0.0
      %4462 = vmatpush1.msra.mxu0 0.0
      %4463 = vmatprep.subr.mxu0 0.0
      %4464 = vmatpush1.msra.mxu0 0.0
      %4465 = vmatprep.subr.mxu0 0.0
      %4466 = vmatpush1.msra.mxu0 0.0
      %4467 = vmatprep.subr.mxu0 0.0
      %4468 = vmatpush1.msra.mxu0 0.0
      %4469 = vmatprep.subr.mxu0 0.0
      %4470 = vmatpush1.msra.mxu0 0.0
      %4471 = vmatprep.subr.mxu0 0.0
      %4472 = vmatpush1.msra.mxu0 0.0
      %4473 = vmatprep.subr.mxu0 0.0
      %4474 = vmatpush1.msra.mxu0 0.0
      %4475 = vmatprep.subr.mxu0 0.0
      %4476 = vmatpush1.msra.mxu0 0.0
      %4477 = vmatprep.subr.mxu0 0.0
      %4478 = vmatpush1.msra.mxu0 0.0
      %4479 = vmatprep.subr.mxu0 0.0
      %4480 = vmatpush1.msra.mxu0 0.0
      %4481 = vmatprep.subr.mxu0 0.0
      %4482 = vmatpush1.msra.mxu0 0.0
      %4483 = vmatprep.subr.mxu0 0.0
      %4484 = vmatpush1.msra.mxu0 0.0
      %4485 = vmatprep.subr.mxu0 0.0
      %4486 = vmatpush1.msra.mxu0 0.0
      %4487 = vmatprep.subr.mxu0 0.0
      %4488 = vmatpush1.msra.mxu0 0.0
      %4489 = vmatprep.subr.mxu0 0.0
      %4490 = vmatpush1.msra.mxu0 0.0
      %4491 = vmatprep.subr.mxu0 0.0
      %4492 = vmatpush1.msra.mxu0 0.0
      %4493 = vmatprep.subr.mxu0 0.0
      %4494 = vmatpush1.msra.mxu0 0.0
      %4495 = vmatprep.subr.mxu0 0.0
      %4496 = vmatpush1.msra.mxu0 0.0
      %4497 = vmatprep.subr.mxu0 0.0
      %4498 = vmatpush1.msra.mxu0 0.0
      %4499 = vmatprep.subr.mxu0 0.0
      %4500 = vmatpush1.msra.mxu0 0.0
      %4501 = vmatprep.subr.mxu0 0.0
      %4502 = vmatpush1.msra.mxu0 0.0
      %4503 = vmatprep.subr.mxu0 0.0
      %4504 = vmatpush1.msra.mxu0 0.0
      %4505 = vmatprep.subr.mxu0 0.0
      %4506 = vmatpush1.msra.mxu0 0.0
      %4507 = vmatprep.subr.mxu0 0.0
      %4508 = vmatpush1.msra.mxu0 0.0
      %4509 = vmatprep.subr.mxu0 0.0
      %4510 = vmatpush1.msra.mxu0 0.0
      %4511 = vmatprep.subr.mxu0 0.0
      %4512 = vmatpush1.msra.mxu0 0.0
      %4513 = vmatprep.mubr.f32.mxu0 0.0
      %4514 = vmatmul.mubr.f32.gmra.mrb[0].mxu0 %v4306
      %v4515 = vpop.f32.mrb[0].mxu0
      %v4516 = vadd.f32 0.0, %v4515
      %v4517 = vpop.f32.mrb[0].mxu0
      %4518 = vmatprep.mubr.f32.mxu0 0.0
      %4519 = vmatmul.mubr.f32.gmra.mrb[0].mxu0 %v4309
      %v4520 = vpop.f32.mrb[0].mxu0
      %v4521 = vadd.f32 0.0, %v4520
      %v4522 = vpop.f32.mrb[0].mxu0
      %4523 = vmatprep.mubr.f32.mxu0 0.0
      %4524 = vmatmul.mubr.f32.gmra.mrb[0].mxu0 %v4312
      %v4525 = vpop.f32.mrb[0].mxu0
      %v4526 = vadd.f32 0.0, %v4525
      %v4527 = vpop.f32.mrb[0].mxu0
      %4528 = vmatprep.mubr.f32.mxu0 0.0
      %4529 = vmatmul.mubr.f32.gmra.mrb[0].mxu0 %v4315
      %v4530 = vpop.f32.mrb[0].mxu0
      %v4531 = vadd.f32 0.0, %v4530
      %v4532 = vpop.f32.mrb[0].mxu0
      %4533 = vmatprep.mubr.f32.mxu0 0.0
      %4534 = vmatmul.mubr.f32.gmra.mrb[0].mxu0 %v4318
      %v4535 = vpop.f32.mrb[0].mxu0
      %v4536 = vadd.f32 0.0, %v4535
      %v4537 = vpop.f32.mrb[0].mxu0
      %4538 = vmatprep.mubr.f32.mxu0 0.0
      %4539 = vmatmul.mubr.f32.gmra.mrb[0].mxu0 %v4321
      %v4540 = vpop.f32.mrb[0].mxu0
      %v4541 = vadd.f32 0.0, %v4540
      %v4542 = vpop.f32.mrb[0].mxu0
      %4543 = vmatprep.mubr.f32.mxu0 0.0
      %4544 = vmatmul.mubr.f32.gmra.mrb[0].mxu0 %v4324
      %v4545 = vpop.f32.mrb[0].mxu0
      %v4546 = vadd.f32 0.0, %v4545
      %v4547 = vpop.f32.mrb[0].mxu0
      %4548 = vmatprep.mubr.f32.mxu0 0.0
      %4549 = vmatmul.mubr.f32.gmra.mrb[0].mxu0 %v4327
      %v4550 = vpop.f32.mrb[0].mxu0
      %v4551 = vadd.f32 0.0, %v4550
      %v4552 = vpop.f32.mrb[0].mxu0
      %4553 = vmatprep.mubr.f32.mxu0 0.0
      %4554 = vmatmul.mubr.f32.gmra.mrb[0].mxu0 %v4330
      %v4555 = vpop.f32.mrb[0].mxu0
      %v4556 = vadd.f32 0.0, %v4555
      %v4557 = vpop.f32.mrb[0].mxu0
      %4558 = vmatprep.mubr.f32.mxu0 0.0
      %4559 = vmatmul.mubr.f32.gmra.mrb[0].mxu0 %v4333
      %v4560 = vpop.f32.mrb[0].mxu0
      %v4561 = vadd.f32 0.0, %v4560
      %v4562 = vpop.f32.mrb[0].mxu0
      %4563 = vmatprep.mubr.f32.mxu0 0.0
      %4564 = vmatmul.mubr.f32.gmra.mrb[0].mxu0 %v4336
      %v4565 = vpop.f32.mrb[0].mxu0
      %v4566 = vadd.f32 0.0, %v4565
      %v4567 = vpop.f32.mrb[0].mxu0
      %4568 = vmatprep.mubr.f32.mxu0 0.0
      %4569 = vmatmul.mubr.f32.gmra.mrb[0].mxu0 %v4339
      %v4570 = vpop.f32.mrb[0].mxu0
      %v4571 = vadd.f32 0.0, %v4570
      %v4572 = vpop.f32.mrb[0].mxu0
      %4573 = vmatprep.mubr.f32.mxu0 0.0
      %4574 = vmatmul.mubr.f32.gmra.mrb[0].mxu0 %v4342
      %v4575 = vpop.f32.mrb[0].mxu0
      %v4576 = vadd.f32 0.0, %v4575
      %v4577 = vpop.f32.mrb[0].mxu0
      %4578 = vmatprep.mubr.f32.mxu0 0.0
      %4579 = vmatmul.mubr.f32.gmra.mrb[0].mxu0 %v4345
      %v4580 = vpop.f32.mrb[0].mxu0
      %v4581 = vadd.f32 0.0, %v4580
      %v4582 = vpop.f32.mrb[0].mxu0
      %4583 = vmatprep.mubr.f32.mxu0 0.0
      %4584 = vmatmul.mubr.f32.gmra.mrb[0].mxu0 %v4348
      %v4585 = vpop.f32.mrb[0].mxu0
      %v4586 = vadd.f32 0.0, %v4585
      %v4587 = vpop.f32.mrb[0].mxu0
      %4588 = vmatprep.mubr.f32.mxu0 0.0
      %4589 = vmatmul.mubr.f32.gmra.mrb[0].mxu0 %v4351
      %v4590 = vpop.f32.mrb[0].mxu0
      %v4591 = vadd.f32 0.0, %v4590
      %v4592 = vpop.f32.mrb[0].mxu0
      %4593 = vmatprep.mubr.f32.mxu0 0.0
      %4594 = vmatmul.mubr.f32.gmra.mrb[0].mxu0 %v4354
      %v4595 = vpop.f32.mrb[0].mxu0
      %v4596 = vadd.f32 0.0, %v4595
      %v4597 = vpop.f32.mrb[0].mxu0
      %4598 = vmatprep.mubr.f32.mxu0 0.0
      %4599 = vmatmul.mubr.f32.gmra.mrb[0].mxu0 %v4357
      %v4600 = vpop.f32.mrb[0].mxu0
      %v4601 = vadd.f32 0.0, %v4600
      %v4602 = vpop.f32.mrb[0].mxu0
      %4603 = vmatprep.mubr.f32.mxu0 0.0
      %4604 = vmatmul.mubr.f32.gmra.mrb[0].mxu0 %v4360
      %v4605 = vpop.f32.mrb[0].mxu0
      %v4606 = vadd.f32 0.0, %v4605
      %v4607 = vpop.f32.mrb[0].mxu0
      %4608 = vmatprep.mubr.f32.mxu0 0.0
      %4609 = vmatmul.mubr.f32.gmra.mrb[0].mxu0 %v4363
      %v4610 = vpop.f32.mrb[0].mxu0
      %v4611 = vadd.f32 0.0, %v4610
      %v4612 = vpop.f32.mrb[0].mxu0
      %4613 = vmatprep.mubr.f32.mxu0 0.0
      %4614 = vmatmul.mubr.f32.gmra.mrb[0].mxu0 %v4366
      %v4615 = vpop.f32.mrb[0].mxu0
      %v4616 = vadd.f32 0.0, %v4615
      %v4617 = vpop.f32.mrb[0].mxu0
      %4618 = vmatprep.mubr.f32.mxu0 0.0
      %4619 = vmatmul.mubr.f32.gmra.mrb[0].mxu0 %v4369
      %v4620 = vpop.f32.mrb[0].mxu0
      %v4621 = vadd.f32 0.0, %v4620
      %v4622 = vpop.f32.mrb[0].mxu0
      %4623 = vmatprep.mubr.f32.mxu0 0.0
      %4624 = vmatmul.mubr.f32.gmra.mrb[0].mxu0 %v4372
      %v4625 = vpop.f32.mrb[0].mxu0
      %v4626 = vadd.f32 0.0, %v4625
      %v4627 = vpop.f32.mrb[0].mxu0
      %4628 = vmatprep.mubr.f32.mxu0 0.0
      %4629 = vmatmul.mubr.f32.gmra.mrb[0].mxu0 %v4375
      %v4630 = vpop.f32.mrb[0].mxu0
      %v4631 = vadd.f32 0.0, %v4630
      %v4632 = vpop.f32.mrb[0].mxu0
      %4633 = vmatprep.mubr.f32.mxu0 0.0
      %4634 = vmatmul.mubr.f32.gmra.mrb[0].mxu0 %v4378
      %v4635 = vpop.f32.mrb[0].mxu0
      %v4636 = vadd.f32 0.0, %v4635
      %v4637 = vpop.f32.mrb[0].mxu0
      %4638 = vmatprep.mubr.f32.mxu0 0.0
      %4639 = vmatmul.mubr.f32.gmra.mrb[0].mxu0 %v4381
      %v4640 = vpop.f32.mrb[0].mxu0
      %v4641 = vadd.f32 0.0, %v4640
      %v4642 = vpop.f32.mrb[0].mxu0
      %4643 = vmatprep.mubr.f32.mxu0 0.0
      %4644 = vmatmul.mubr.f32.gmra.mrb[0].mxu0 %v4384
      %v4645 = vpop.f32.mrb[0].mxu0
      %v4646 = vadd.f32 0.0, %v4645
      %v4647 = vpop.f32.mrb[0].mxu0
      %4648 = vmatprep.mubr.f32.mxu0 0.0
      %4649 = vmatmul.mubr.f32.gmra.mrb[0].mxu0 %v4387
      %v4650 = vpop.f32.mrb[0].mxu0
      %v4651 = vadd.f32 0.0, %v4650
      %v4652 = vpop.f32.mrb[0].mxu0
      %4653 = vmatprep.mubr.f32.mxu0 0.0
      %4654 = vmatmul.mubr.f32.gmra.mrb[0].mxu0 %v4390
      %v4655 = vpop.f32.mrb[0].mxu0
      %v4656 = vadd.f32 0.0, %v4655
      %v4657 = vpop.f32.mrb[0].mxu0
      %4658 = vmatprep.mubr.f32.mxu0 0.0
      %4659 = vmatmul.mubr.f32.gmra.mrb[0].mxu0 %v4393
      %v4660 = vpop.f32.mrb[0].mxu0
      %v4661 = vadd.f32 0.0, %v4660
      %v4662 = vpop.f32.mrb[0].mxu0
      %4663 = vmatprep.mubr.f32.mxu0 0.0
      %4664 = vmatmul.mubr.f32.gmra.mrb[0].mxu0 %v4396
      %v4665 = vpop.f32.mrb[0].mxu0
      %v4666 = vadd.f32 0.0, %v4665
      %v4667 = vpop.f32.mrb[0].mxu0
      %4668 = vmatprep.mubr.f32.mxu0 0.0
      %4669 = vmatmul.mubr.f32.gmra.mrb[0].mxu0 %v4399
      %v4670 = vpop.f32.mrb[0].mxu0
      %v4671 = vadd.f32 0.0, %v4670
      %v4672 = vpop.f32.mrb[0].mxu0
      %4673 = vmatprep.mubr.f32.mxu0 0.0
      %4674 = vmatmul.mubr.f32.gmra.mrb[0].mxu0 %v4402
      %v4675 = vpop.f32.mrb[0].mxu0
      %v4676 = vadd.f32 0.0, %v4675
      %v4677 = vpop.f32.mrb[0].mxu0
      %4678 = vmatprep.mubr.f32.mxu0 0.0
      %4679 = vmatmul.mubr.f32.gmra.mrb[0].mxu0 %v4405
      %v4680 = vpop.f32.mrb[0].mxu0
      %v4681 = vadd.f32 0.0, %v4680
      %v4682 = vpop.f32.mrb[0].mxu0
      %4683 = vmatprep.mubr.f32.mxu0 0.0
      %4684 = vmatmul.mubr.f32.gmra.mrb[0].mxu0 %v4408
      %v4685 = vpop.f32.mrb[0].mxu0
      %v4686 = vadd.f32 0.0, %v4685
      %v4687 = vpop.f32.mrb[0].mxu0
      %4688 = vmatprep.mubr.f32.mxu0 0.0
      %4689 = vmatmul.mubr.f32.gmra.mrb[0].mxu0 %v4411
      %v4690 = vpop.f32.mrb[0].mxu0
      %v4691 = vadd.f32 0.0, %v4690
      %v4692 = vpop.f32.mrb[0].mxu0
      %4693 = vmatprep.mubr.f32.mxu0 0.0
      %4694 = vmatmul.mubr.f32.gmra.mrb[0].mxu0 %v4414
      %v4695 = vpop.f32.mrb[0].mxu0
      %v4696 = vadd.f32 0.0, %v4695
      %v4697 = vpop.f32.mrb[0].mxu0
      %4698 = vmatprep.mubr.f32.mxu0 0.0
      %4699 = vmatmul.mubr.f32.gmra.mrb[0].mxu0 %v4417
      %v4700 = vpop.f32.mrb[0].mxu0
      %v4701 = vadd.f32 0.0, %v4700
      %v4702 = vpop.f32.mrb[0].mxu0
      %4703 = vmatprep.mubr.f32.mxu0 0.0
      %4704 = vmatmul.mubr.f32.gmra.mrb[0].mxu0 %v4420
      %v4705 = vpop.f32.mrb[0].mxu0
      %v4706 = vadd.f32 0.0, %v4705
      %v4707 = vpop.f32.mrb[0].mxu0
      %4708 = vmatprep.mubr.f32.mxu0 0.0
      %4709 = vmatmul.mubr.f32.gmra.mrb[0].mxu0 %v4423
      %v4710 = vpop.f32.mrb[0].mxu0
      %v4711 = vadd.f32 0.0, %v4710
      %v4712 = vpop.f32.mrb[0].mxu0
      %4713 = vmatprep.mubr.f32.mxu0 0.0
      %4714 = vmatmul.mubr.f32.gmra.mrb[0].mxu0 %v4426
      %v4715 = vpop.f32.mrb[0].mxu0
      %v4716 = vadd.f32 0.0, %v4715
      %v4717 = vpop.f32.mrb[0].mxu0
      %4718 = vmatprep.mubr.f32.mxu0 0.0
      %4719 = vmatmul.mubr.f32.gmra.mrb[0].mxu0 %v4429
      %v4720 = vpop.f32.mrb[0].mxu0
      %v4721 = vadd.f32 0.0, %v4720
      %v4722 = vpop.f32.mrb[0].mxu0
      %4723 = vmatprep.mubr.f32.mxu0 0.0
      %4724 = vmatmul.mubr.f32.gmra.mrb[0].mxu0 %v4432
      %v4725 = vpop.f32.mrb[0].mxu0
      %v4726 = vadd.f32 0.0, %v4725
      %v4727 = vpop.f32.mrb[0].mxu0
      %4728 = vmatprep.mubr.f32.mxu0 0.0
      %4729 = vmatmul.mubr.f32.gmra.mrb[0].mxu0 %v4435
      %v4730 = vpop.f32.mrb[0].mxu0
      %v4731 = vadd.f32 0.0, %v4730
      %v4732 = vpop.f32.mrb[0].mxu0
      %4733 = vmatprep.mubr.f32.mxu0 0.0
      %4734 = vmatmul.mubr.f32.gmra.mrb[0].mxu0 %v4438
      %v4735 = vpop.f32.mrb[0].mxu0
      %v4736 = vadd.f32 0.0, %v4735
      %v4737 = vpop.f32.mrb[0].mxu0
      %4738 = vmatprep.mubr.f32.mxu0 0.0
      %4739 = vmatmul.mubr.f32.gmra.mrb[0].mxu0 %v4441
      %v4740 = vpop.f32.mrb[0].mxu0
      %v4741 = vadd.f32 0.0, %v4740
      %v4742 = vpop.f32.mrb[0].mxu0
      %4743 = vmatprep.mubr.f32.mxu0 0.0
      %4744 = vmatmul.mubr.f32.gmra.mrb[0].mxu0 %v4444
      %v4745 = vpop.f32.mrb[0].mxu0
      %v4746 = vadd.f32 0.0, %v4745
      %v4747 = vpop.f32.mrb[0].mxu0
      %4748 = vmatprep.mubr.f32.mxu0 0.0
      %4749 = vmatmul.mubr.f32.gmra.mrb[0].mxu0 %v4447
      %v4750 = vpop.f32.mrb[0].mxu0
      %v4751 = vadd.f32 0.0, %v4750
      %v4752 = vpop.f32.mrb[0].mxu0
      %4753 = vdwg.mxu0
      %v4755 = vsel %vm4304, %v4210, 0
      %v4758 = vsel %vm4304, %v4211, 0
      %v4761 = vsel %vm4304, %v4212, 0
      %4763 = vmatprep.subr.mxu0 0.0
      %4764 = vmatpush1.msra.mxu0 %v4258
      %4765 = vmatprep.subr.mxu0 0.0
      %4766 = vmatpush1.msra.mxu0 %v4259
      %4767 = vmatprep.subr.mxu0 0.0
      %4768 = vmatpush1.msra.mxu0 %v4260
      %4769 = vmatprep.subr.mxu0 0.0
      %4770 = vmatpush1.msra.mxu0 0.0
      %4771 = vmatprep.subr.mxu0 0.0
      %4772 = vmatpush1.msra.mxu0 0.0
      %4773 = vmatprep.subr.mxu0 0.0
      %4774 = vmatpush1.msra.mxu0 0.0
      %4775 = vmatprep.subr.mxu0 0.0
      %4776 = vmatpush1.msra.mxu0 0.0
      %4777 = vmatprep.subr.mxu0 0.0
      %4778 = vmatpush1.msra.mxu0 0.0
      %4779 = vmatprep.subr.mxu0 0.0
      %4780 = vmatpush1.msra.mxu0 0.0
      %4781 = vmatprep.subr.mxu0 0.0
      %4782 = vmatpush1.msra.mxu0 0.0
      %4783 = vmatprep.subr.mxu0 0.0
      %4784 = vmatpush1.msra.mxu0 0.0
      %4785 = vmatprep.subr.mxu0 0.0
      %4786 = vmatpush1.msra.mxu0 0.0
      %4787 = vmatprep.subr.mxu0 0.0
      %4788 = vmatpush1.msra.mxu0 0.0
      %4789 = vmatprep.subr.mxu0 0.0
      %4790 = vmatpush1.msra.mxu0 0.0
      %4791 = vmatprep.subr.mxu0 0.0
      %4792 = vmatpush1.msra.mxu0 0.0
      %4793 = vmatprep.subr.mxu0 0.0
      %4794 = vmatpush1.msra.mxu0 0.0
      %4795 = vmatprep.subr.mxu0 0.0
      %4796 = vmatpush1.msra.mxu0 0.0
      %4797 = vmatprep.subr.mxu0 0.0
      %4798 = vmatpush1.msra.mxu0 0.0
      %4799 = vmatprep.subr.mxu0 0.0
      %4800 = vmatpush1.msra.mxu0 0.0
      %4801 = vmatprep.subr.mxu0 0.0
      %4802 = vmatpush1.msra.mxu0 0.0
      %4803 = vmatprep.subr.mxu0 0.0
      %4804 = vmatpush1.msra.mxu0 0.0
      %4805 = vmatprep.subr.mxu0 0.0
      %4806 = vmatpush1.msra.mxu0 0.0
      %4807 = vmatprep.subr.mxu0 0.0
      %4808 = vmatpush1.msra.mxu0 0.0
      %4809 = vmatprep.subr.mxu0 0.0
      %4810 = vmatpush1.msra.mxu0 0.0
      %4811 = vmatprep.subr.mxu0 0.0
      %4812 = vmatpush1.msra.mxu0 0.0
      %4813 = vmatprep.subr.mxu0 0.0
      %4814 = vmatpush1.msra.mxu0 0.0
      %4815 = vmatprep.subr.mxu0 0.0
      %4816 = vmatpush1.msra.mxu0 0.0
      %4817 = vmatprep.subr.mxu0 0.0
      %4818 = vmatpush1.msra.mxu0 0.0
      %4819 = vmatprep.subr.mxu0 0.0
      %4820 = vmatpush1.msra.mxu0 0.0
      %4821 = vmatprep.subr.mxu0 0.0
      %4822 = vmatpush1.msra.mxu0 0.0
      %4823 = vmatprep.subr.mxu0 0.0
      %4824 = vmatpush1.msra.mxu0 0.0
      %4825 = vmatprep.subr.mxu0 0.0
      %4826 = vmatpush1.msra.mxu0 0.0
      %4827 = vmatprep.mubr.f32.mxu0 0.0
      %4828 = vmatmul.mubr.f32.gmra.mrb[0].mxu0 %v4755
      %v4829 = vpop.f32.mrb[0].mxu0
      %v4830 = vadd.f32 %v4516, %v4829
      %v4831 = vpop.f32.mrb[0].mxu0
      %4832 = vmatprep.mubr.f32.mxu0 0.0
      %4833 = vmatmul.mubr.f32.gmra.mrb[0].mxu0 %v4758
      %v4834 = vpop.f32.mrb[0].mxu0
      %v4835 = vadd.f32 %v4521, %v4834
      %v4836 = vpop.f32.mrb[0].mxu0
      %4837 = vmatprep.mubr.f32.mxu0 0.0
      %4838 = vmatmul.mubr.f32.gmra.mrb[0].mxu0 %v4761
      %v4839 = vpop.f32.mrb[0].mxu0
      %v4840 = vadd.f32 %v4526, %v4839
      %v4841 = vpop.f32.mrb[0].mxu0
      %4842 = vmatprep.mubr.f32.mxu0 0.0
      %4843 = vmatmul.mubr.f32.gmra.mrb[0].mxu0 %v4306
      %v4844 = vpop.f32.mrb[0].mxu0
      %v4845 = vadd.f32 %v4531, %v4844
      %v4846 = vpop.f32.mrb[0].mxu0
      %4847 = vmatprep.mubr.f32.mxu0 0.0
      %4848 = vmatmul.mubr.f32.gmra.mrb[0].mxu0 %v4309
      %v4849 = vpop.f32.mrb[0].mxu0
      %v4850 = vadd.f32 %v4536, %v4849
      %v4851 = vpop.f32.mrb[0].mxu0
      %4852 = vmatprep.mubr.f32.mxu0 0.0
      %4853 = vmatmul.mubr.f32.gmra.mrb[0].mxu0 %v4312
      %v4854 = vpop.f32.mrb[0].mxu0
      %v4855 = vadd.f32 %v4541, %v4854
      %v4856 = vpop.f32.mrb[0].mxu0
      %4857 = vmatprep.mubr.f32.mxu0 0.0
      %4858 = vmatmul.mubr.f32.gmra.mrb[0].mxu0 %v4315
      %v4859 = vpop.f32.mrb[0].mxu0
      %v4860 = vadd.f32 %v4546, %v4859
      %v4861 = vpop.f32.mrb[0].mxu0
      %4862 = vmatprep.mubr.f32.mxu0 0.0
      %4863 = vmatmul.mubr.f32.gmra.mrb[0].mxu0 %v4318
      %v4864 = vpop.f32.mrb[0].mxu0
      %v4865 = vadd.f32 %v4551, %v4864
      %v4866 = vpop.f32.mrb[0].mxu0
      %4867 = vmatprep.mubr.f32.mxu0 0.0
      %4868 = vmatmul.mubr.f32.gmra.mrb[0].mxu0 %v4321
      %v4869 = vpop.f32.mrb[0].mxu0
      %v4870 = vadd.f32 %v4556, %v4869
      %v4871 = vpop.f32.mrb[0].mxu0
      %4872 = vmatprep.mubr.f32.mxu0 0.0
      %4873 = vmatmul.mubr.f32.gmra.mrb[0].mxu0 %v4324
      %v4874 = vpop.f32.mrb[0].mxu0
      %v4875 = vadd.f32 %v4561, %v4874
      %v4876 = vpop.f32.mrb[0].mxu0
      %4877 = vmatprep.mubr.f32.mxu0 0.0
      %4878 = vmatmul.mubr.f32.gmra.mrb[0].mxu0 %v4327
      %v4879 = vpop.f32.mrb[0].mxu0
      %v4880 = vadd.f32 %v4566, %v4879
      %v4881 = vpop.f32.mrb[0].mxu0
      %4882 = vmatprep.mubr.f32.mxu0 0.0
      %4883 = vmatmul.mubr.f32.gmra.mrb[0].mxu0 %v4330
      %v4884 = vpop.f32.mrb[0].mxu0
      %v4885 = vadd.f32 %v4571, %v4884
      %v4886 = vpop.f32.mrb[0].mxu0
      %4887 = vmatprep.mubr.f32.mxu0 0.0
      %4888 = vmatmul.mubr.f32.gmra.mrb[0].mxu0 %v4333
      %v4889 = vpop.f32.mrb[0].mxu0
      %v4890 = vadd.f32 %v4576, %v4889
      %v4891 = vpop.f32.mrb[0].mxu0
      %4892 = vmatprep.mubr.f32.mxu0 0.0
      %4893 = vmatmul.mubr.f32.gmra.mrb[0].mxu0 %v4336
      %v4894 = vpop.f32.mrb[0].mxu0
      %v4895 = vadd.f32 %v4581, %v4894
      %v4896 = vpop.f32.mrb[0].mxu0
      %4897 = vmatprep.mubr.f32.mxu0 0.0
      %4898 = vmatmul.mubr.f32.gmra.mrb[0].mxu0 %v4339
      %v4899 = vpop.f32.mrb[0].mxu0
      %v4900 = vadd.f32 %v4586, %v4899
      %v4901 = vpop.f32.mrb[0].mxu0
      %4902 = vmatprep.mubr.f32.mxu0 0.0
      %4903 = vmatmul.mubr.f32.gmra.mrb[0].mxu0 %v4342
      %v4904 = vpop.f32.mrb[0].mxu0
      %v4905 = vadd.f32 %v4591, %v4904
      %v4906 = vpop.f32.mrb[0].mxu0
      %4907 = vmatprep.mubr.f32.mxu0 0.0
      %4908 = vmatmul.mubr.f32.gmra.mrb[0].mxu0 %v4345
      %v4909 = vpop.f32.mrb[0].mxu0
      %v4910 = vadd.f32 %v4596, %v4909
      %v4911 = vpop.f32.mrb[0].mxu0
      %4912 = vmatprep.mubr.f32.mxu0 0.0
      %4913 = vmatmul.mubr.f32.gmra.mrb[0].mxu0 %v4348
      %v4914 = vpop.f32.mrb[0].mxu0
      %v4915 = vadd.f32 %v4601, %v4914
      %v4916 = vpop.f32.mrb[0].mxu0
      %4917 = vmatprep.mubr.f32.mxu0 0.0
      %4918 = vmatmul.mubr.f32.gmra.mrb[0].mxu0 %v4351
      %v4919 = vpop.f32.mrb[0].mxu0
      %v4920 = vadd.f32 %v4606, %v4919
      %v4921 = vpop.f32.mrb[0].mxu0
      %4922 = vmatprep.mubr.f32.mxu0 0.0
      %4923 = vmatmul.mubr.f32.gmra.mrb[0].mxu0 %v4354
      %v4924 = vpop.f32.mrb[0].mxu0
      %v4925 = vadd.f32 %v4611, %v4924
      %v4926 = vpop.f32.mrb[0].mxu0
      %4927 = vmatprep.mubr.f32.mxu0 0.0
      %4928 = vmatmul.mubr.f32.gmra.mrb[0].mxu0 %v4357
      %v4929 = vpop.f32.mrb[0].mxu0
      %v4930 = vadd.f32 %v4616, %v4929
      %v4931 = vpop.f32.mrb[0].mxu0
      %4932 = vmatprep.mubr.f32.mxu0 0.0
      %4933 = vmatmul.mubr.f32.gmra.mrb[0].mxu0 %v4360
      %v4934 = vpop.f32.mrb[0].mxu0
      %v4935 = vadd.f32 %v4621, %v4934
      %v4936 = vpop.f32.mrb[0].mxu0
      %4937 = vmatprep.mubr.f32.mxu0 0.0
      %4938 = vmatmul.mubr.f32.gmra.mrb[0].mxu0 %v4363
      %v4939 = vpop.f32.mrb[0].mxu0
      %v4940 = vadd.f32 %v4626, %v4939
      %v4941 = vpop.f32.mrb[0].mxu0
      %4942 = vmatprep.mubr.f32.mxu0 0.0
      %4943 = vmatmul.mubr.f32.gmra.mrb[0].mxu0 %v4366
      %v4944 = vpop.f32.mrb[0].mxu0
      %v4945 = vadd.f32 %v4631, %v4944
      %v4946 = vpop.f32.mrb[0].mxu0
      %4947 = vmatprep.mubr.f32.mxu0 0.0
      %4948 = vmatmul.mubr.f32.gmra.mrb[0].mxu0 %v4369
      %v4949 = vpop.f32.mrb[0].mxu0
      %v4950 = vadd.f32 %v4636, %v4949
      %v4951 = vpop.f32.mrb[0].mxu0
      %4952 = vmatprep.mubr.f32.mxu0 0.0
      %4953 = vmatmul.mubr.f32.gmra.mrb[0].mxu0 %v4372
      %v4954 = vpop.f32.mrb[0].mxu0
      %v4955 = vadd.f32 %v4641, %v4954
      %v4956 = vpop.f32.mrb[0].mxu0
      %4957 = vmatprep.mubr.f32.mxu0 0.0
      %4958 = vmatmul.mubr.f32.gmra.mrb[0].mxu0 %v4375
      %v4959 = vpop.f32.mrb[0].mxu0
      %v4960 = vadd.f32 %v4646, %v4959
      %v4961 = vpop.f32.mrb[0].mxu0
      %4962 = vmatprep.mubr.f32.mxu0 0.0
      %4963 = vmatmul.mubr.f32.gmra.mrb[0].mxu0 %v4378
      %v4964 = vpop.f32.mrb[0].mxu0
      %v4965 = vadd.f32 %v4651, %v4964
      %v4966 = vpop.f32.mrb[0].mxu0
      %4967 = vmatprep.mubr.f32.mxu0 0.0
      %4968 = vmatmul.mubr.f32.gmra.mrb[0].mxu0 %v4381
      %v4969 = vpop.f32.mrb[0].mxu0
      %v4970 = vadd.f32 %v4656, %v4969
      %v4971 = vpop.f32.mrb[0].mxu0
      %4972 = vmatprep.mubr.f32.mxu0 0.0
      %4973 = vmatmul.mubr.f32.gmra.mrb[0].mxu0 %v4384
      %v4974 = vpop.f32.mrb[0].mxu0
      %v4975 = vadd.f32 %v4661, %v4974
      %v4976 = vpop.f32.mrb[0].mxu0
      %4977 = vmatprep.mubr.f32.mxu0 0.0
      %4978 = vmatmul.mubr.f32.gmra.mrb[0].mxu0 %v4387
      %v4979 = vpop.f32.mrb[0].mxu0
      %v4980 = vadd.f32 %v4666, %v4979
      %v4981 = vpop.f32.mrb[0].mxu0
      %4982 = vmatprep.mubr.f32.mxu0 0.0
      %4983 = vmatmul.mubr.f32.gmra.mrb[0].mxu0 %v4390
      %v4984 = vpop.f32.mrb[0].mxu0
      %v4985 = vadd.f32 %v4671, %v4984
      %v4986 = vpop.f32.mrb[0].mxu0
      %4987 = vmatprep.mubr.f32.mxu0 0.0
      %4988 = vmatmul.mubr.f32.gmra.mrb[0].mxu0 %v4393
      %v4989 = vpop.f32.mrb[0].mxu0
      %v4990 = vadd.f32 %v4676, %v4989
      %v4991 = vpop.f32.mrb[0].mxu0
      %4992 = vmatprep.mubr.f32.mxu0 0.0
      %4993 = vmatmul.mubr.f32.gmra.mrb[0].mxu0 %v4396
      %v4994 = vpop.f32.mrb[0].mxu0
      %v4995 = vadd.f32 %v4681, %v4994
      %v4996 = vpop.f32.mrb[0].mxu0
      %4997 = vmatprep.mubr.f32.mxu0 0.0
      %4998 = vmatmul.mubr.f32.gmra.mrb[0].mxu0 %v4399
      %v4999 = vpop.f32.mrb[0].mxu0
      %v5000 = vadd.f32 %v4686, %v4999
      %v5001 = vpop.f32.mrb[0].mxu0
      %5002 = vmatprep.mubr.f32.mxu0 0.0
      %5003 = vmatmul.mubr.f32.gmra.mrb[0].mxu0 %v4402
      %v5004 = vpop.f32.mrb[0].mxu0
      %v5005 = vadd.f32 %v4691, %v5004
      %v5006 = vpop.f32.mrb[0].mxu0
      %5007 = vmatprep.mubr.f32.mxu0 0.0
      %5008 = vmatmul.mubr.f32.gmra.mrb[0].mxu0 %v4405
      %v5009 = vpop.f32.mrb[0].mxu0
      %v5010 = vadd.f32 %v4696, %v5009
      %v5011 = vpop.f32.mrb[0].mxu0
      %5012 = vmatprep.mubr.f32.mxu0 0.0
      %5013 = vmatmul.mubr.f32.gmra.mrb[0].mxu0 %v4408
      %v5014 = vpop.f32.mrb[0].mxu0
      %v5015 = vadd.f32 %v4701, %v5014
      %v5016 = vpop.f32.mrb[0].mxu0
      %5017 = vmatprep.mubr.f32.mxu0 0.0
      %5018 = vmatmul.mubr.f32.gmra.mrb[0].mxu0 %v4411
      %v5019 = vpop.f32.mrb[0].mxu0
      %v5020 = vadd.f32 %v4706, %v5019
      %v5021 = vpop.f32.mrb[0].mxu0
      %5022 = vmatprep.mubr.f32.mxu0 0.0
      %5023 = vmatmul.mubr.f32.gmra.mrb[0].mxu0 %v4414
      %v5024 = vpop.f32.mrb[0].mxu0
      %v5025 = vadd.f32 %v4711, %v5024
      %v5026 = vpop.f32.mrb[0].mxu0
      %5027 = vmatprep.mubr.f32.mxu0 0.0
      %5028 = vmatmul.mubr.f32.gmra.mrb[0].mxu0 %v4417
      %v5029 = vpop.f32.mrb[0].mxu0
      %v5030 = vadd.f32 %v4716, %v5029
      %v5031 = vpop.f32.mrb[0].mxu0
      %5032 = vmatprep.mubr.f32.mxu0 0.0
      %5033 = vmatmul.mubr.f32.gmra.mrb[0].mxu0 %v4420
      %v5034 = vpop.f32.mrb[0].mxu0
      %v5035 = vadd.f32 %v4721, %v5034
      %v5036 = vpop.f32.mrb[0].mxu0
      %5037 = vmatprep.mubr.f32.mxu0 0.0
      %5038 = vmatmul.mubr.f32.gmra.mrb[0].mxu0 %v4423
      %v5039 = vpop.f32.mrb[0].mxu0
      %v5040 = vadd.f32 %v4726, %v5039
      %v5041 = vpop.f32.mrb[0].mxu0
      %5042 = vmatprep.mubr.f32.mxu0 0.0
      %5043 = vmatmul.mubr.f32.gmra.mrb[0].mxu0 %v4426
      %v5044 = vpop.f32.mrb[0].mxu0
      %v5045 = vadd.f32 %v4731, %v5044
      %v5046 = vpop.f32.mrb[0].mxu0
      %5047 = vmatprep.mubr.f32.mxu0 0.0
      %5048 = vmatmul.mubr.f32.gmra.mrb[0].mxu0 %v4429
      %v5049 = vpop.f32.mrb[0].mxu0
      %v5050 = vadd.f32 %v4736, %v5049
      %v5051 = vpop.f32.mrb[0].mxu0
      %5052 = vmatprep.mubr.f32.mxu0 0.0
      %5053 = vmatmul.mubr.f32.gmra.mrb[0].mxu0 %v4432
      %v5054 = vpop.f32.mrb[0].mxu0
      %v5055 = vadd.f32 %v4741, %v5054
      %v5056 = vpop.f32.mrb[0].mxu0
      %5057 = vmatprep.mubr.f32.mxu0 0.0
      %5058 = vmatmul.mubr.f32.gmra.mrb[0].mxu0 %v4435
      %v5059 = vpop.f32.mrb[0].mxu0
      %v5060 = vadd.f32 %v4746, %v5059
      %v5061 = vpop.f32.mrb[0].mxu0
      %5062 = vmatprep.mubr.f32.mxu0 0.0
      %5063 = vmatmul.mubr.f32.gmra.mrb[0].mxu0 %v4438
      %v5064 = vpop.f32.mrb[0].mxu0
      %v5065 = vadd.f32 %v4751, %v5064
      %v5066 = vpop.f32.mrb[0].mxu0
      %5067 = vdwg.mxu0
      %v5068 = vld [vmem:[#allocation3 + $0x30] sm:$0xff]
      %v5069 = vld [vmem:[#allocation3 + $0x38] sm:$0xff]
      %v5070 = vld [vmem:[#allocation3 + $0x40] sm:$0xff]
      %v5071 = vld [vmem:[#allocation3 + $0x48] sm:$0xff]
      %v5072 = vld [vmem:[#allocation3 + $0x50] sm:$0xff]
      %v5073 = vld [vmem:[#allocation3 + $0x58] sm:$0xff]
      %v5074 = vld [vmem:[#allocation3 + $0x60] sm:$0xff]
      %v5075 = vld [vmem:[#allocation3 + $0x68] sm:$0xff]
      %v5076 = vld [vmem:[#allocation3 + $0x70] sm:$0xff]
      %v5077 = vld [vmem:[#allocation3 + $0x78] sm:$0xff]
      %v5078 = vld [vmem:[#allocation3 + $0x80] sm:$0xff]
      %v5079 = vld [vmem:[#allocation3 + $0x88] sm:$0xff]
      %v5080 = vld [vmem:[#allocation3 + $0x90] sm:$0xff]
      %v5081 = vld [vmem:[#allocation3 + $0x98] sm:$0xff]
      %v5082 = vld [vmem:[#allocation3 + $0xa0] sm:$0xff]
      %v5083 = vld [vmem:[#allocation3 + $0xa8] sm:$0xff]
      %v5084 = vld [vmem:[#allocation3 + $0xb0] sm:$0xff]
      %v5085 = vld [vmem:[#allocation3 + $0xb8] sm:$0xff]
      %v5086 = vld [vmem:[#allocation3 + $0xc0] sm:$0xff]
      %v5087 = vld [vmem:[#allocation3 + $0xc8] sm:$0xff]
      %v5088 = vld [vmem:[#allocation3 + $0xd0] sm:$0xff]
      %v5089 = vld [vmem:[#allocation3 + $0xd8] sm:$0xff]
      %v5090 = vld [vmem:[#allocation3 + $0xe0] sm:$0xff]
      %v5091 = vld [vmem:[#allocation3 + $0xe8] sm:$0xff]
      %v5092 = vld [vmem:[#allocation3 + $0xf0] sm:$0xff]
      %v5093 = vld [vmem:[#allocation3 + $0xf8] sm:$0xff]
      %v5094 = vld [vmem:[#allocation3 + $0x100] sm:$0xff]
      %v5095 = vld [vmem:[#allocation3 + $0x108] sm:$0xff]
      %v5096 = vld [vmem:[#allocation3 + $0x110] sm:$0xff]
      %v5097 = vld [vmem:[#allocation3 + $0x118] sm:$0xff]
      %v5098 = vld [vmem:[#allocation3 + $0x120] sm:$0xff]
      %v5099 = vld [vmem:[#allocation3 + $0x128] sm:$0xff]
      %v5100 = vld [vmem:[#allocation3 + $0x130] sm:$0xff]
      %v5101 = vld [vmem:[#allocation3 + $0x138] sm:$0xff]
      %v5102 = vld [vmem:[#allocation3 + $0x140] sm:$0xff]
      %v5103 = vld [vmem:[#allocation3 + $0x148] sm:$0xff]
      %v5104 = vld [vmem:[#allocation3 + $0x150] sm:$0xff]
      %v5105 = vld [vmem:[#allocation3 + $0x158] sm:$0xff]
      %v5106 = vld [vmem:[#allocation3 + $0x160] sm:$0xff]
      %v5107 = vld [vmem:[#allocation3 + $0x168] sm:$0xff]
      %v5108 = vld [vmem:[#allocation3 + $0x170] sm:$0xff]
      %v5109 = vld [vmem:[#allocation3 + $0x178] sm:$0xff]
      %v5110 = vld [vmem:[#allocation3 + $0x180] sm:$0xff]
      %v5111 = vld [vmem:[#allocation3 + $0x188] sm:$0xff]
      %v5112 = vld [vmem:[#allocation3 + $0x190] sm:$0xff]
      %v5113 = vld [vmem:[#allocation3 + $0x198] sm:$0xff]
      %v5114 = vld [vmem:[#allocation3 + $0x1a0] sm:$0xff]
      %v5115 = vld [vmem:[#allocation3 + $0x1a8] sm:$0xff]
      %v5116 = vld [vmem:[#allocation3 + $0x31] sm:$0xff]
      %v5117 = vld [vmem:[#allocation3 + $0x39] sm:$0xff]
      %v5118 = vld [vmem:[#allocation3 + $0x41] sm:$0xff]
      %v5119 = vld [vmem:[#allocation3 + $0x49] sm:$0xff]
      %v5120 = vld [vmem:[#allocation3 + $0x51] sm:$0xff]
      %v5121 = vld [vmem:[#allocation3 + $0x59] sm:$0xff]
      %v5122 = vld [vmem:[#allocation3 + $0x61] sm:$0xff]
      %v5123 = vld [vmem:[#allocation3 + $0x69] sm:$0xff]
      %v5124 = vld [vmem:[#allocation3 + $0x71] sm:$0xff]
      %v5125 = vld [vmem:[#allocation3 + $0x79] sm:$0xff]
      %v5126 = vld [vmem:[#allocation3 + $0x81] sm:$0xff]
      %v5127 = vld [vmem:[#allocation3 + $0x89] sm:$0xff]
      %v5128 = vld [vmem:[#allocation3 + $0x91] sm:$0xff]
      %v5129 = vld [vmem:[#allocation3 + $0x99] sm:$0xff]
      %v5130 = vld [vmem:[#allocation3 + $0xa1] sm:$0xff]
      %v5131 = vld [vmem:[#allocation3 + $0xa9] sm:$0xff]
      %v5132 = vld [vmem:[#allocation3 + $0xb1] sm:$0xff]
      %v5133 = vld [vmem:[#allocation3 + $0xb9] sm:$0xff]
      %v5134 = vld [vmem:[#allocation3 + $0xc1] sm:$0xff]
      %v5135 = vld [vmem:[#allocation3 + $0xc9] sm:$0xff]
      %v5136 = vld [vmem:[#allocation3 + $0xd1] sm:$0xff]
      %v5137 = vld [vmem:[#allocation3 + $0xd9] sm:$0xff]
      %v5138 = vld [vmem:[#allocation3 + $0xe1] sm:$0xff]
      %v5139 = vld [vmem:[#allocation3 + $0xe9] sm:$0xff]
      %v5140 = vld [vmem:[#allocation3 + $0xf1] sm:$0xff]
      %v5141 = vld [vmem:[#allocation3 + $0xf9] sm:$0xff]
      %v5142 = vld [vmem:[#allocation3 + $0x101] sm:$0xff]
      %v5143 = vld [vmem:[#allocation3 + $0x109] sm:$0xff]
      %v5144 = vld [vmem:[#allocation3 + $0x111] sm:$0xff]
      %v5145 = vld [vmem:[#allocation3 + $0x119] sm:$0xff]
      %v5146 = vld [vmem:[#allocation3 + $0x121] sm:$0xff]
      %v5147 = vld [vmem:[#allocation3 + $0x129] sm:$0xff]
      %v5148 = vld [vmem:[#allocation3 + $0x131] sm:$0xff]
      %v5149 = vld [vmem:[#allocation3 + $0x139] sm:$0xff]
      %v5150 = vld [vmem:[#allocation3 + $0x141] sm:$0xff]
      %v5151 = vld [vmem:[#allocation3 + $0x149] sm:$0xff]
      %v5152 = vld [vmem:[#allocation3 + $0x151] sm:$0xff]
      %v5153 = vld [vmem:[#allocation3 + $0x159] sm:$0xff]
      %v5154 = vld [vmem:[#allocation3 + $0x161] sm:$0xff]
      %v5155 = vld [vmem:[#allocation3 + $0x169] sm:$0xff]
      %v5156 = vld [vmem:[#allocation3 + $0x171] sm:$0xff]
      %v5157 = vld [vmem:[#allocation3 + $0x179] sm:$0xff]
      %v5158 = vld [vmem:[#allocation3 + $0x181] sm:$0xff]
      %v5159 = vld [vmem:[#allocation3 + $0x189] sm:$0xff]
      %v5160 = vld [vmem:[#allocation3 + $0x191] sm:$0xff]
      %v5161 = vld [vmem:[#allocation3 + $0x199] sm:$0xff]
      %v5162 = vld [vmem:[#allocation3 + $0x1a1] sm:$0xff]
      %v5163 = vld [vmem:[#allocation3 + $0x1a9] sm:$0xff]
      %v5164 = vld [vmem:[#allocation3 + $0x32] sm:$0xff]
      %v5165 = vld [vmem:[#allocation3 + $0x3a] sm:$0xff]
      %v5166 = vld [vmem:[#allocation3 + $0x42] sm:$0xff]
      %v5167 = vld [vmem:[#allocation3 + $0x4a] sm:$0xff]
      %v5168 = vld [vmem:[#allocation3 + $0x52] sm:$0xff]
      %v5169 = vld [vmem:[#allocation3 + $0x5a] sm:$0xff]
      %v5170 = vld [vmem:[#allocation3 + $0x62] sm:$0xff]
      %v5171 = vld [vmem:[#allocation3 + $0x6a] sm:$0xff]
      %v5172 = vld [vmem:[#allocation3 + $0x72] sm:$0xff]
      %v5173 = vld [vmem:[#allocation3 + $0x7a] sm:$0xff]
      %v5174 = vld [vmem:[#allocation3 + $0x82] sm:$0xff]
      %v5175 = vld [vmem:[#allocation3 + $0x8a] sm:$0xff]
      %v5176 = vld [vmem:[#allocation3 + $0x92] sm:$0xff]
      %v5177 = vld [vmem:[#allocation3 + $0x9a] sm:$0xff]
      %v5178 = vld [vmem:[#allocation3 + $0xa2] sm:$0xff]
      %v5179 = vld [vmem:[#allocation3 + $0xaa] sm:$0xff]
      %v5180 = vld [vmem:[#allocation3 + $0xb2] sm:$0xff]
      %v5181 = vld [vmem:[#allocation3 + $0xba] sm:$0xff]
      %v5182 = vld [vmem:[#allocation3 + $0xc2] sm:$0xff]
      %v5183 = vld [vmem:[#allocation3 + $0xca] sm:$0xff]
      %v5184 = vld [vmem:[#allocation3 + $0xd2] sm:$0xff]
      %v5185 = vld [vmem:[#allocation3 + $0xda] sm:$0xff]
      %v5186 = vld [vmem:[#allocation3 + $0xe2] sm:$0xff]
      %v5187 = vld [vmem:[#allocation3 + $0xea] sm:$0xff]
      %v5188 = vld [vmem:[#allocation3 + $0xf2] sm:$0xff]
      %v5189 = vld [vmem:[#allocation3 + $0xfa] sm:$0xff]
      %v5190 = vld [vmem:[#allocation3 + $0x102] sm:$0xff]
      %v5191 = vld [vmem:[#allocation3 + $0x10a] sm:$0xff]
      %v5192 = vld [vmem:[#allocation3 + $0x112] sm:$0xff]
      %v5193 = vld [vmem:[#allocation3 + $0x11a] sm:$0xff]
      %v5194 = vld [vmem:[#allocation3 + $0x122] sm:$0xff]
      %v5195 = vld [vmem:[#allocation3 + $0x12a] sm:$0xff]
      %v5196 = vld [vmem:[#allocation3 + $0x132] sm:$0xff]
      %v5197 = vld [vmem:[#allocation3 + $0x13a] sm:$0xff]
      %v5198 = vld [vmem:[#allocation3 + $0x142] sm:$0xff]
      %v5199 = vld [vmem:[#allocation3 + $0x14a] sm:$0xff]
      %v5200 = vld [vmem:[#allocation3 + $0x152] sm:$0xff]
      %v5201 = vld [vmem:[#allocation3 + $0x15a] sm:$0xff]
      %v5202 = vld [vmem:[#allocation3 + $0x162] sm:$0xff]
      %v5203 = vld [vmem:[#allocation3 + $0x16a] sm:$0xff]
      %v5204 = vld [vmem:[#allocation3 + $0x172] sm:$0xff]
      %v5205 = vld [vmem:[#allocation3 + $0x17a] sm:$0xff]
      %v5206 = vld [vmem:[#allocation3 + $0x182] sm:$0xff]
      %v5207 = vld [vmem:[#allocation3 + $0x18a] sm:$0xff]
      %v5208 = vld [vmem:[#allocation3 + $0x192] sm:$0xff]
      %v5209 = vld [vmem:[#allocation3 + $0x19a] sm:$0xff]
      %v5210 = vld [vmem:[#allocation3 + $0x1a2] sm:$0xff]
      %v5211 = vld [vmem:[#allocation3 + $0x1aa] sm:$0xff]
      %5260 = vrot.lane.b32.xlu0 %v5116, 8
      %v5261 = vpop.permute.xlu0 %5260
      %5262 = vrot.lane.b32.xlu0 %v5117, 8
      %v5263 = vpop.permute.xlu0 %5262
      %5264 = vrot.lane.b32.xlu0 %v5118, 8
      %v5265 = vpop.permute.xlu0 %5264
      %5266 = vrot.lane.b32.xlu0 %v5119, 8
      %v5267 = vpop.permute.xlu0 %5266
      %5268 = vrot.lane.b32.xlu0 %v5120, 8
      %v5269 = vpop.permute.xlu0 %5268
      %5270 = vrot.lane.b32.xlu0 %v5121, 8
      %v5271 = vpop.permute.xlu0 %5270
      %5272 = vrot.lane.b32.xlu0 %v5122, 8
      %v5273 = vpop.permute.xlu0 %5272
      %5274 = vrot.lane.b32.xlu0 %v5123, 8
      %v5275 = vpop.permute.xlu0 %5274
      %5276 = vrot.lane.b32.xlu0 %v5124, 8
      %v5277 = vpop.permute.xlu0 %5276
      %5278 = vrot.lane.b32.xlu0 %v5125, 8
      %v5279 = vpop.permute.xlu0 %5278
      %5280 = vrot.lane.b32.xlu0 %v5126, 8
      %v5281 = vpop.permute.xlu0 %5280
      %5282 = vrot.lane.b32.xlu0 %v5127, 8
      %v5283 = vpop.permute.xlu0 %5282
      %5284 = vrot.lane.b32.xlu0 %v5128, 8
      %v5285 = vpop.permute.xlu0 %5284
      %5286 = vrot.lane.b32.xlu0 %v5129, 8
      %v5287 = vpop.permute.xlu0 %5286
      %5288 = vrot.lane.b32.xlu0 %v5130, 8
      %v5289 = vpop.permute.xlu0 %5288
      %5290 = vrot.lane.b32.xlu0 %v5131, 8
      %v5291 = vpop.permute.xlu0 %5290
      %5292 = vrot.lane.b32.xlu0 %v5132, 8
      %v5293 = vpop.permute.xlu0 %5292
      %5294 = vrot.lane.b32.xlu0 %v5133, 8
      %v5295 = vpop.permute.xlu0 %5294
      %5296 = vrot.lane.b32.xlu0 %v5134, 8
      %v5297 = vpop.permute.xlu0 %5296
      %5298 = vrot.lane.b32.xlu0 %v5135, 8
      %v5299 = vpop.permute.xlu0 %5298
      %5300 = vrot.lane.b32.xlu0 %v5136, 8
      %v5301 = vpop.permute.xlu0 %5300
      %5302 = vrot.lane.b32.xlu0 %v5137, 8
      %v5303 = vpop.permute.xlu0 %5302
      %5304 = vrot.lane.b32.xlu0 %v5138, 8
      %v5305 = vpop.permute.xlu0 %5304
      %5306 = vrot.lane.b32.xlu0 %v5139, 8
      %v5307 = vpop.permute.xlu0 %5306
      %5308 = vrot.lane.b32.xlu0 %v5140, 8
      %v5309 = vpop.permute.xlu0 %5308
      %5310 = vrot.lane.b32.xlu0 %v5141, 8
      %v5311 = vpop.permute.xlu0 %5310
      %5312 = vrot.lane.b32.xlu0 %v5142, 8
      %v5313 = vpop.permute.xlu0 %5312
      %5314 = vrot.lane.b32.xlu0 %v5143, 8
      %v5315 = vpop.permute.xlu0 %5314
      %5316 = vrot.lane.b32.xlu0 %v5144, 8
      %v5317 = vpop.permute.xlu0 %5316
      %5318 = vrot.lane.b32.xlu0 %v5145, 8
      %v5319 = vpop.permute.xlu0 %5318
      %5320 = vrot.lane.b32.xlu0 %v5146, 8
      %v5321 = vpop.permute.xlu0 %5320
      %5322 = vrot.lane.b32.xlu0 %v5147, 8
      %v5323 = vpop.permute.xlu0 %5322
      %5324 = vrot.lane.b32.xlu0 %v5148, 8
      %v5325 = vpop.permute.xlu0 %5324
      %5326 = vrot.lane.b32.xlu0 %v5149, 8
      %v5327 = vpop.permute.xlu0 %5326
      %5328 = vrot.lane.b32.xlu0 %v5150, 8
      %v5329 = vpop.permute.xlu0 %5328
      %5330 = vrot.lane.b32.xlu0 %v5151, 8
      %v5331 = vpop.permute.xlu0 %5330
      %5332 = vrot.lane.b32.xlu0 %v5152, 8
      %v5333 = vpop.permute.xlu0 %5332
      %5334 = vrot.lane.b32.xlu0 %v5153, 8
      %v5335 = vpop.permute.xlu0 %5334
      %5336 = vrot.lane.b32.xlu0 %v5154, 8
      %v5337 = vpop.permute.xlu0 %5336
      %5338 = vrot.lane.b32.xlu0 %v5155, 8
      %v5339 = vpop.permute.xlu0 %5338
      %5340 = vrot.lane.b32.xlu0 %v5156, 8
      %v5341 = vpop.permute.xlu0 %5340
      %5342 = vrot.lane.b32.xlu0 %v5157, 8
      %v5343 = vpop.permute.xlu0 %5342
      %5344 = vrot.lane.b32.xlu0 %v5158, 8
      %v5345 = vpop.permute.xlu0 %5344
      %5346 = vrot.lane.b32.xlu0 %v5159, 8
      %v5347 = vpop.permute.xlu0 %5346
      %5348 = vrot.lane.b32.xlu0 %v5160, 8
      %v5349 = vpop.permute.xlu0 %5348
      %5350 = vrot.lane.b32.xlu0 %v5161, 8
      %v5351 = vpop.permute.xlu0 %5350
      %5352 = vrot.lane.b32.xlu0 %v5162, 8
      %v5353 = vpop.permute.xlu0 %5352
      %5354 = vrot.lane.b32.xlu0 %v5163, 8
      %v5355 = vpop.permute.xlu0 %5354
      %5452 = vrot.lane.b32.xlu0 %v5164, 16
      %v5453 = vpop.permute.xlu0 %5452
      %5454 = vrot.lane.b32.xlu0 %v5165, 16
      %v5455 = vpop.permute.xlu0 %5454
      %5456 = vrot.lane.b32.xlu0 %v5166, 16
      %v5457 = vpop.permute.xlu0 %5456
      %5458 = vrot.lane.b32.xlu0 %v5167, 16
      %v5459 = vpop.permute.xlu0 %5458
      %5460 = vrot.lane.b32.xlu0 %v5168, 16
      %v5461 = vpop.permute.xlu0 %5460
      %5462 = vrot.lane.b32.xlu0 %v5169, 16
      %v5463 = vpop.permute.xlu0 %5462
      %5464 = vrot.lane.b32.xlu0 %v5170, 16
      %v5465 = vpop.permute.xlu0 %5464
      %5466 = vrot.lane.b32.xlu0 %v5171, 16
      %v5467 = vpop.permute.xlu0 %5466
      %5468 = vrot.lane.b32.xlu0 %v5172, 16
      %v5469 = vpop.permute.xlu0 %5468
      %5470 = vrot.lane.b32.xlu0 %v5173, 16
      %v5471 = vpop.permute.xlu0 %5470
      %5472 = vrot.lane.b32.xlu0 %v5174, 16
      %v5473 = vpop.permute.xlu0 %5472
      %5474 = vrot.lane.b32.xlu0 %v5175, 16
      %v5475 = vpop.permute.xlu0 %5474
      %5476 = vrot.lane.b32.xlu0 %v5176, 16
      %v5477 = vpop.permute.xlu0 %5476
      %5478 = vrot.lane.b32.xlu0 %v5177, 16
      %v5479 = vpop.permute.xlu0 %5478
      %5480 = vrot.lane.b32.xlu0 %v5178, 16
      %v5481 = vpop.permute.xlu0 %5480
      %5482 = vrot.lane.b32.xlu0 %v5179, 16
      %v5483 = vpop.permute.xlu0 %5482
      %5484 = vrot.lane.b32.xlu0 %v5180, 16
      %v5485 = vpop.permute.xlu0 %5484
      %5486 = vrot.lane.b32.xlu0 %v5181, 16
      %v5487 = vpop.permute.xlu0 %5486
      %5488 = vrot.lane.b32.xlu0 %v5182, 16
      %v5489 = vpop.permute.xlu0 %5488
      %5490 = vrot.lane.b32.xlu0 %v5183, 16
      %v5491 = vpop.permute.xlu0 %5490
      %5492 = vrot.lane.b32.xlu0 %v5184, 16
      %v5493 = vpop.permute.xlu0 %5492
      %5494 = vrot.lane.b32.xlu0 %v5185, 16
      %v5495 = vpop.permute.xlu0 %5494
      %5496 = vrot.lane.b32.xlu0 %v5186, 16
      %v5497 = vpop.permute.xlu0 %5496
      %5498 = vrot.lane.b32.xlu0 %v5187, 16
      %v5499 = vpop.permute.xlu0 %5498
      %5500 = vrot.lane.b32.xlu0 %v5188, 16
      %v5501 = vpop.permute.xlu0 %5500
      %5502 = vrot.lane.b32.xlu0 %v5189, 16
      %v5503 = vpop.permute.xlu0 %5502
      %5504 = vrot.lane.b32.xlu0 %v5190, 16
      %v5505 = vpop.permute.xlu0 %5504
      %5506 = vrot.lane.b32.xlu0 %v5191, 16
      %v5507 = vpop.permute.xlu0 %5506
      %5508 = vrot.lane.b32.xlu0 %v5192, 16
      %v5509 = vpop.permute.xlu0 %5508
      %5510 = vrot.lane.b32.xlu0 %v5193, 16
      %v5511 = vpop.permute.xlu0 %5510
      %5512 = vrot.lane.b32.xlu0 %v5194, 16
      %v5513 = vpop.permute.xlu0 %5512
      %5514 = vrot.lane.b32.xlu0 %v5195, 16
      %v5515 = vpop.permute.xlu0 %5514
      %5516 = vrot.lane.b32.xlu0 %v5196, 16
      %v5517 = vpop.permute.xlu0 %5516
      %5518 = vrot.lane.b32.xlu0 %v5197, 16
      %v5519 = vpop.permute.xlu0 %5518
      %5520 = vrot.lane.b32.xlu0 %v5198, 16
      %v5521 = vpop.permute.xlu0 %5520
      %5522 = vrot.lane.b32.xlu0 %v5199, 16
      %v5523 = vpop.permute.xlu0 %5522
      %5524 = vrot.lane.b32.xlu0 %v5200, 16
      %v5525 = vpop.permute.xlu0 %5524
      %5526 = vrot.lane.b32.xlu0 %v5201, 16
      %v5527 = vpop.permute.xlu0 %5526
      %5528 = vrot.lane.b32.xlu0 %v5202, 16
      %v5529 = vpop.permute.xlu0 %5528
      %5530 = vrot.lane.b32.xlu0 %v5203, 16
      %v5531 = vpop.permute.xlu0 %5530
      %5532 = vrot.lane.b32.xlu0 %v5204, 16
      %v5533 = vpop.permute.xlu0 %5532
      %5534 = vrot.lane.b32.xlu0 %v5205, 16
      %v5535 = vpop.permute.xlu0 %5534
      %5536 = vrot.lane.b32.xlu0 %v5206, 16
      %v5537 = vpop.permute.xlu0 %5536
      %5538 = vrot.lane.b32.xlu0 %v5207, 16
      %v5539 = vpop.permute.xlu0 %5538
      %5540 = vrot.lane.b32.xlu0 %v5208, 16
      %v5541 = vpop.permute.xlu0 %5540
      %5542 = vrot.lane.b32.xlu0 %v5209, 16
      %v5543 = vpop.permute.xlu0 %5542
      %5544 = vrot.lane.b32.xlu0 %v5210, 16
      %v5545 = vpop.permute.xlu0 %5544
      %5546 = vrot.lane.b32.xlu0 %v5211, 16
      %v5547 = vpop.permute.xlu0 %5546
      %v5596 = vsel %vm368, %v5068, %v5261
      %v5597 = vsel %vm368, %v5069, %v5263
      %v5598 = vsel %vm368, %v5070, %v5265
      %v5599 = vsel %vm368, %v5071, %v5267
      %v5600 = vsel %vm368, %v5072, %v5269
      %v5601 = vsel %vm368, %v5073, %v5271
      %v5602 = vsel %vm368, %v5074, %v5273
      %v5603 = vsel %vm368, %v5075, %v5275
      %v5604 = vsel %vm368, %v5076, %v5277
      %v5605 = vsel %vm368, %v5077, %v5279
      %v5606 = vsel %vm368, %v5078, %v5281
      %v5607 = vsel %vm368, %v5079, %v5283
      %v5608 = vsel %vm368, %v5080, %v5285
      %v5609 = vsel %vm368, %v5081, %v5287
      %v5610 = vsel %vm368, %v5082, %v5289
      %v5611 = vsel %vm368, %v5083, %v5291
      %v5612 = vsel %vm368, %v5084, %v5293
      %v5613 = vsel %vm368, %v5085, %v5295
      %v5614 = vsel %vm368, %v5086, %v5297
      %v5615 = vsel %vm368, %v5087, %v5299
      %v5616 = vsel %vm368, %v5088, %v5301
      %v5617 = vsel %vm368, %v5089, %v5303
      %v5618 = vsel %vm368, %v5090, %v5305
      %v5619 = vsel %vm368, %v5091, %v5307
      %v5620 = vsel %vm368, %v5092, %v5309
      %v5621 = vsel %vm368, %v5093, %v5311
      %v5622 = vsel %vm368, %v5094, %v5313
      %v5623 = vsel %vm368, %v5095, %v5315
      %v5624 = vsel %vm368, %v5096, %v5317
      %v5625 = vsel %vm368, %v5097, %v5319
      %v5626 = vsel %vm368, %v5098, %v5321
      %v5627 = vsel %vm368, %v5099, %v5323
      %v5628 = vsel %vm368, %v5100, %v5325
      %v5629 = vsel %vm368, %v5101, %v5327
      %v5630 = vsel %vm368, %v5102, %v5329
      %v5631 = vsel %vm368, %v5103, %v5331
      %v5632 = vsel %vm368, %v5104, %v5333
      %v5633 = vsel %vm368, %v5105, %v5335
      %v5634 = vsel %vm368, %v5106, %v5337
      %v5635 = vsel %vm368, %v5107, %v5339
      %v5636 = vsel %vm368, %v5108, %v5341
      %v5637 = vsel %vm368, %v5109, %v5343
      %v5638 = vsel %vm368, %v5110, %v5345
      %v5639 = vsel %vm368, %v5111, %v5347
      %v5640 = vsel %vm368, %v5112, %v5349
      %v5641 = vsel %vm368, %v5113, %v5351
      %v5642 = vsel %vm368, %v5114, %v5353
      %v5643 = vsel %vm368, %v5115, %v5355
      %v5644 = vsel %vm326, %v5596, %v5453
      %v5645 = vsel %vm326, %v5597, %v5455
      %v5646 = vsel %vm326, %v5598, %v5457
      %v5647 = vsel %vm326, %v5599, %v5459
      %v5648 = vsel %vm326, %v5600, %v5461
      %v5649 = vsel %vm326, %v5601, %v5463
      %v5650 = vsel %vm326, %v5602, %v5465
      %v5651 = vsel %vm326, %v5603, %v5467
      %v5652 = vsel %vm326, %v5604, %v5469
      %v5653 = vsel %vm326, %v5605, %v5471
      %v5654 = vsel %vm326, %v5606, %v5473
      %v5655 = vsel %vm326, %v5607, %v5475
      %v5656 = vsel %vm326, %v5608, %v5477
      %v5657 = vsel %vm326, %v5609, %v5479
      %v5658 = vsel %vm326, %v5610, %v5481
      %v5659 = vsel %vm326, %v5611, %v5483
      %v5660 = vsel %vm326, %v5612, %v5485
      %v5661 = vsel %vm326, %v5613, %v5487
      %v5662 = vsel %vm326, %v5614, %v5489
      %v5663 = vsel %vm326, %v5615, %v5491
      %v5664 = vsel %vm326, %v5616, %v5493
      %v5665 = vsel %vm326, %v5617, %v5495
      %v5666 = vsel %vm326, %v5618, %v5497
      %v5667 = vsel %vm326, %v5619, %v5499
      %v5668 = vsel %vm326, %v5620, %v5501
      %v5669 = vsel %vm326, %v5621, %v5503
      %v5670 = vsel %vm326, %v5622, %v5505
      %v5671 = vsel %vm326, %v5623, %v5507
      %v5672 = vsel %vm326, %v5624, %v5509
      %v5673 = vsel %vm326, %v5625, %v5511
      %v5674 = vsel %vm326, %v5626, %v5513
      %v5675 = vsel %vm326, %v5627, %v5515
      %v5676 = vsel %vm326, %v5628, %v5517
      %v5677 = vsel %vm326, %v5629, %v5519
      %v5678 = vsel %vm326, %v5630, %v5521
      %v5679 = vsel %vm326, %v5631, %v5523
      %v5680 = vsel %vm326, %v5632, %v5525
      %v5681 = vsel %vm326, %v5633, %v5527
      %v5682 = vsel %vm326, %v5634, %v5529
      %v5683 = vsel %vm326, %v5635, %v5531
      %v5684 = vsel %vm326, %v5636, %v5533
      %v5685 = vsel %vm326, %v5637, %v5535
      %v5686 = vsel %vm326, %v5638, %v5537
      %v5687 = vsel %vm326, %v5639, %v5539
      %v5688 = vsel %vm326, %v5640, %v5541
      %v5689 = vsel %vm326, %v5641, %v5543
      %v5690 = vsel %vm326, %v5642, %v5545
      %v5691 = vsel %vm326, %v5643, %v5547
      %s5692 = scalar_lea.vmem %s3, 48
      %v5693 = vld [vmem:[%s5692] sm:$0xff]
      %v5694 = vld [vmem:[%s5692 + $0x8] sm:$0xff]
      %v5695 = vld [vmem:[%s5692 + $0x10] sm:$0xff]
      %v5697 = vsel %vm4304, %v5644, 0
      %v5700 = vsel %vm4304, %v5645, 0
      %v5703 = vsel %vm4304, %v5646, 0
      %v5706 = vsel %vm4304, %v5647, 0
      %v5709 = vsel %vm4304, %v5648, 0
      %v5712 = vsel %vm4304, %v5649, 0
      %v5715 = vsel %vm4304, %v5650, 0
      %v5718 = vsel %vm4304, %v5651, 0
      %v5721 = vsel %vm4304, %v5652, 0
      %v5724 = vsel %vm4304, %v5653, 0
      %v5727 = vsel %vm4304, %v5654, 0
      %v5730 = vsel %vm4304, %v5655, 0
      %v5733 = vsel %vm4304, %v5656, 0
      %v5736 = vsel %vm4304, %v5657, 0
      %v5739 = vsel %vm4304, %v5658, 0
      %v5742 = vsel %vm4304, %v5659, 0
      %v5745 = vsel %vm4304, %v5660, 0
      %v5748 = vsel %vm4304, %v5661, 0
      %v5751 = vsel %vm4304, %v5662, 0
      %v5754 = vsel %vm4304, %v5663, 0
      %v5757 = vsel %vm4304, %v5664, 0
      %v5760 = vsel %vm4304, %v5665, 0
      %v5763 = vsel %vm4304, %v5666, 0
      %v5766 = vsel %vm4304, %v5667, 0
      %v5769 = vsel %vm4304, %v5668, 0
      %v5772 = vsel %vm4304, %v5669, 0
      %v5775 = vsel %vm4304, %v5670, 0
      %v5778 = vsel %vm4304, %v5671, 0
      %v5781 = vsel %vm4304, %v5672, 0
      %v5784 = vsel %vm4304, %v5673, 0
      %v5787 = vsel %vm4304, %v5674, 0
      %v5790 = vsel %vm4304, %v5675, 0
      %v5793 = vsel %vm4304, %v5676, 0
      %v5796 = vsel %vm4304, %v5677, 0
      %v5799 = vsel %vm4304, %v5678, 0
      %v5802 = vsel %vm4304, %v5679, 0
      %v5805 = vsel %vm4304, %v5680, 0
      %v5808 = vsel %vm4304, %v5681, 0
      %v5811 = vsel %vm4304, %v5682, 0
      %v5814 = vsel %vm4304, %v5683, 0
      %v5817 = vsel %vm4304, %v5684, 0
      %v5820 = vsel %vm4304, %v5685, 0
      %v5823 = vsel %vm4304, %v5686, 0
      %v5826 = vsel %vm4304, %v5687, 0
      %v5829 = vsel %vm4304, %v5688, 0
      %v5832 = vsel %vm4304, %v5689, 0
      %v5835 = vsel %vm4304, %v5690, 0
      %v5838 = vsel %vm4304, %v5691, 0
      %5840 = vmatprep.subr.mxu0 0.0
      %5841 = vmatpush1.msra.mxu0 %v5693
      %5842 = vmatprep.subr.mxu0 0.0
      %5843 = vmatpush1.msra.mxu0 %v5694
      %5844 = vmatprep.subr.mxu0 0.0
      %5845 = vmatpush1.msra.mxu0 %v5695
      %5846 = vmatprep.subr.mxu0 0.0
      %5847 = vmatpush1.msra.mxu0 0.0
      %5848 = vmatprep.subr.mxu0 0.0
      %5849 = vmatpush1.msra.mxu0 0.0
      %5850 = vmatprep.subr.mxu0 0.0
      %5851 = vmatpush1.msra.mxu0 0.0
      %5852 = vmatprep.subr.mxu0 0.0
      %5853 = vmatpush1.msra.mxu0 0.0
      %5854 = vmatprep.subr.mxu0 0.0
      %5855 = vmatpush1.msra.mxu0 0.0
      %5856 = vmatprep.subr.mxu0 0.0
      %5857 = vmatpush1.msra.mxu0 0.0
      %5858 = vmatprep.subr.mxu0 0.0
      %5859 = vmatpush1.msra.mxu0 0.0
      %5860 = vmatprep.subr.mxu0 0.0
      %5861 = vmatpush1.msra.mxu0 0.0
      %5862 = vmatprep.subr.mxu0 0.0
      %5863 = vmatpush1.msra.mxu0 0.0
      %5864 = vmatprep.subr.mxu0 0.0
      %5865 = vmatpush1.msra.mxu0 0.0
      %5866 = vmatprep.subr.mxu0 0.0
      %5867 = vmatpush1.msra.mxu0 0.0
      %5868 = vmatprep.subr.mxu0 0.0
      %5869 = vmatpush1.msra.mxu0 0.0
      %5870 = vmatprep.subr.mxu0 0.0
      %5871 = vmatpush1.msra.mxu0 0.0
      %5872 = vmatprep.subr.mxu0 0.0
      %5873 = vmatpush1.msra.mxu0 0.0
      %5874 = vmatprep.subr.mxu0 0.0
      %5875 = vmatpush1.msra.mxu0 0.0
      %5876 = vmatprep.subr.mxu0 0.0
      %5877 = vmatpush1.msra.mxu0 0.0
      %5878 = vmatprep.subr.mxu0 0.0
      %5879 = vmatpush1.msra.mxu0 0.0
      %5880 = vmatprep.subr.mxu0 0.0
      %5881 = vmatpush1.msra.mxu0 0.0
      %5882 = vmatprep.subr.mxu0 0.0
      %5883 = vmatpush1.msra.mxu0 0.0
      %5884 = vmatprep.subr.mxu0 0.0
      %5885 = vmatpush1.msra.mxu0 0.0
      %5886 = vmatprep.subr.mxu0 0.0
      %5887 = vmatpush1.msra.mxu0 0.0
      %5888 = vmatprep.subr.mxu0 0.0
      %5889 = vmatpush1.msra.mxu0 0.0
      %5890 = vmatprep.subr.mxu0 0.0
      %5891 = vmatpush1.msra.mxu0 0.0
      %5892 = vmatprep.subr.mxu0 0.0
      %5893 = vmatpush1.msra.mxu0 0.0
      %5894 = vmatprep.subr.mxu0 0.0
      %5895 = vmatpush1.msra.mxu0 0.0
      %5896 = vmatprep.subr.mxu0 0.0
      %5897 = vmatpush1.msra.mxu0 0.0
      %5898 = vmatprep.subr.mxu0 0.0
      %5899 = vmatpush1.msra.mxu0 0.0
      %5900 = vmatprep.subr.mxu0 0.0
      %5901 = vmatpush1.msra.mxu0 0.0
      %5902 = vmatprep.subr.mxu0 0.0
      %5903 = vmatpush1.msra.mxu0 0.0
      %5904 = vmatprep.mubr.f32.mxu0 0.0
      %5905 = vmatmul.mubr.f32.gmra.mrb[0].mxu0 %v5697
      %v5906 = vpop.f32.mrb[0].mxu0
      %v5907 = vadd.f32 0.0, %v5906
      %v5908 = vpop.f32.mrb[0].mxu0
      %5909 = vmatprep.mubr.f32.mxu0 0.0
      %5910 = vmatmul.mubr.f32.gmra.mrb[0].mxu0 %v5700
      %v5911 = vpop.f32.mrb[0].mxu0
      %v5912 = vadd.f32 0.0, %v5911
      %v5913 = vpop.f32.mrb[0].mxu0
      %5914 = vmatprep.mubr.f32.mxu0 0.0
      %5915 = vmatmul.mubr.f32.gmra.mrb[0].mxu0 %v5703
      %v5916 = vpop.f32.mrb[0].mxu0
      %v5917 = vadd.f32 0.0, %v5916
      %v5918 = vpop.f32.mrb[0].mxu0
      %5919 = vmatprep.mubr.f32.mxu0 0.0
      %5920 = vmatmul.mubr.f32.gmra.mrb[0].mxu0 %v5706
      %v5921 = vpop.f32.mrb[0].mxu0
      %v5922 = vadd.f32 0.0, %v5921
      %v5923 = vpop.f32.mrb[0].mxu0
      %5924 = vmatprep.mubr.f32.mxu0 0.0
      %5925 = vmatmul.mubr.f32.gmra.mrb[0].mxu0 %v5709
      %v5926 = vpop.f32.mrb[0].mxu0
      %v5927 = vadd.f32 0.0, %v5926
      %v5928 = vpop.f32.mrb[0].mxu0
      %5929 = vmatprep.mubr.f32.mxu0 0.0
      %5930 = vmatmul.mubr.f32.gmra.mrb[0].mxu0 %v5712
      %v5931 = vpop.f32.mrb[0].mxu0
      %v5932 = vadd.f32 0.0, %v5931
      %v5933 = vpop.f32.mrb[0].mxu0
      %5934 = vmatprep.mubr.f32.mxu0 0.0
      %5935 = vmatmul.mubr.f32.gmra.mrb[0].mxu0 %v5715
      %v5936 = vpop.f32.mrb[0].mxu0
      %v5937 = vadd.f32 0.0, %v5936
      %v5938 = vpop.f32.mrb[0].mxu0
      %5939 = vmatprep.mubr.f32.mxu0 0.0
      %5940 = vmatmul.mubr.f32.gmra.mrb[0].mxu0 %v5718
      %v5941 = vpop.f32.mrb[0].mxu0
      %v5942 = vadd.f32 0.0, %v5941
      %v5943 = vpop.f32.mrb[0].mxu0
      %5944 = vmatprep.mubr.f32.mxu0 0.0
      %5945 = vmatmul.mubr.f32.gmra.mrb[0].mxu0 %v5721
      %v5946 = vpop.f32.mrb[0].mxu0
      %v5947 = vadd.f32 0.0, %v5946
      %v5948 = vpop.f32.mrb[0].mxu0
      %5949 = vmatprep.mubr.f32.mxu0 0.0
      %5950 = vmatmul.mubr.f32.gmra.mrb[0].mxu0 %v5724
      %v5951 = vpop.f32.mrb[0].mxu0
      %v5952 = vadd.f32 0.0, %v5951
      %v5953 = vpop.f32.mrb[0].mxu0
      %5954 = vmatprep.mubr.f32.mxu0 0.0
      %5955 = vmatmul.mubr.f32.gmra.mrb[0].mxu0 %v5727
      %v5956 = vpop.f32.mrb[0].mxu0
      %v5957 = vadd.f32 0.0, %v5956
      %v5958 = vpop.f32.mrb[0].mxu0
      %5959 = vmatprep.mubr.f32.mxu0 0.0
      %5960 = vmatmul.mubr.f32.gmra.mrb[0].mxu0 %v5730
      %v5961 = vpop.f32.mrb[0].mxu0
      %v5962 = vadd.f32 0.0, %v5961
      %v5963 = vpop.f32.mrb[0].mxu0
      %5964 = vmatprep.mubr.f32.mxu0 0.0
      %5965 = vmatmul.mubr.f32.gmra.mrb[0].mxu0 %v5733
      %v5966 = vpop.f32.mrb[0].mxu0
      %v5967 = vadd.f32 0.0, %v5966
      %v5968 = vpop.f32.mrb[0].mxu0
      %5969 = vmatprep.mubr.f32.mxu0 0.0
      %5970 = vmatmul.mubr.f32.gmra.mrb[0].mxu0 %v5736
      %v5971 = vpop.f32.mrb[0].mxu0
      %v5972 = vadd.f32 0.0, %v5971
      %v5973 = vpop.f32.mrb[0].mxu0
      %5974 = vmatprep.mubr.f32.mxu0 0.0
      %5975 = vmatmul.mubr.f32.gmra.mrb[0].mxu0 %v5739
      %v5976 = vpop.f32.mrb[0].mxu0
      %v5977 = vadd.f32 0.0, %v5976
      %v5978 = vpop.f32.mrb[0].mxu0
      %5979 = vmatprep.mubr.f32.mxu0 0.0
      %5980 = vmatmul.mubr.f32.gmra.mrb[0].mxu0 %v5742
      %v5981 = vpop.f32.mrb[0].mxu0
      %v5982 = vadd.f32 0.0, %v5981
      %v5983 = vpop.f32.mrb[0].mxu0
      %5984 = vmatprep.mubr.f32.mxu0 0.0
      %5985 = vmatmul.mubr.f32.gmra.mrb[0].mxu0 %v5745
      %v5986 = vpop.f32.mrb[0].mxu0
      %v5987 = vadd.f32 0.0, %v5986
      %v5988 = vpop.f32.mrb[0].mxu0
      %5989 = vmatprep.mubr.f32.mxu0 0.0
      %5990 = vmatmul.mubr.f32.gmra.mrb[0].mxu0 %v5748
      %v5991 = vpop.f32.mrb[0].mxu0
      %v5992 = vadd.f32 0.0, %v5991
      %v5993 = vpop.f32.mrb[0].mxu0
      %5994 = vmatprep.mubr.f32.mxu0 0.0
      %5995 = vmatmul.mubr.f32.gmra.mrb[0].mxu0 %v5751
      %v5996 = vpop.f32.mrb[0].mxu0
      %v5997 = vadd.f32 0.0, %v5996
      %v5998 = vpop.f32.mrb[0].mxu0
      %5999 = vmatprep.mubr.f32.mxu0 0.0
      %6000 = vmatmul.mubr.f32.gmra.mrb[0].mxu0 %v5754
      %v6001 = vpop.f32.mrb[0].mxu0
      %v6002 = vadd.f32 0.0, %v6001
      %v6003 = vpop.f32.mrb[0].mxu0
      %6004 = vmatprep.mubr.f32.mxu0 0.0
      %6005 = vmatmul.mubr.f32.gmra.mrb[0].mxu0 %v5757
      %v6006 = vpop.f32.mrb[0].mxu0
      %v6007 = vadd.f32 0.0, %v6006
      %v6008 = vpop.f32.mrb[0].mxu0
      %6009 = vmatprep.mubr.f32.mxu0 0.0
      %6010 = vmatmul.mubr.f32.gmra.mrb[0].mxu0 %v5760
      %v6011 = vpop.f32.mrb[0].mxu0
      %v6012 = vadd.f32 0.0, %v6011
      %v6013 = vpop.f32.mrb[0].mxu0
      %6014 = vmatprep.mubr.f32.mxu0 0.0
      %6015 = vmatmul.mubr.f32.gmra.mrb[0].mxu0 %v5763
      %v6016 = vpop.f32.mrb[0].mxu0
      %v6017 = vadd.f32 0.0, %v6016
      %v6018 = vpop.f32.mrb[0].mxu0
      %6019 = vmatprep.mubr.f32.mxu0 0.0
      %6020 = vmatmul.mubr.f32.gmra.mrb[0].mxu0 %v5766
      %v6021 = vpop.f32.mrb[0].mxu0
      %v6022 = vadd.f32 0.0, %v6021
      %v6023 = vpop.f32.mrb[0].mxu0
      %6024 = vmatprep.mubr.f32.mxu0 0.0
      %6025 = vmatmul.mubr.f32.gmra.mrb[0].mxu0 %v5769
      %v6026 = vpop.f32.mrb[0].mxu0
      %v6027 = vadd.f32 0.0, %v6026
      %v6028 = vpop.f32.mrb[0].mxu0
      %6029 = vmatprep.mubr.f32.mxu0 0.0
      %6030 = vmatmul.mubr.f32.gmra.mrb[0].mxu0 %v5772
      %v6031 = vpop.f32.mrb[0].mxu0
      %v6032 = vadd.f32 0.0, %v6031
      %v6033 = vpop.f32.mrb[0].mxu0
      %6034 = vmatprep.mubr.f32.mxu0 0.0
      %6035 = vmatmul.mubr.f32.gmra.mrb[0].mxu0 %v5775
      %v6036 = vpop.f32.mrb[0].mxu0
      %v6037 = vadd.f32 0.0, %v6036
      %v6038 = vpop.f32.mrb[0].mxu0
      %6039 = vmatprep.mubr.f32.mxu0 0.0
      %6040 = vmatmul.mubr.f32.gmra.mrb[0].mxu0 %v5778
      %v6041 = vpop.f32.mrb[0].mxu0
      %v6042 = vadd.f32 0.0, %v6041
      %v6043 = vpop.f32.mrb[0].mxu0
      %6044 = vmatprep.mubr.f32.mxu0 0.0
      %6045 = vmatmul.mubr.f32.gmra.mrb[0].mxu0 %v5781
      %v6046 = vpop.f32.mrb[0].mxu0
      %v6047 = vadd.f32 0.0, %v6046
      %v6048 = vpop.f32.mrb[0].mxu0
      %6049 = vmatprep.mubr.f32.mxu0 0.0
      %6050 = vmatmul.mubr.f32.gmra.mrb[0].mxu0 %v5784
      %v6051 = vpop.f32.mrb[0].mxu0
      %v6052 = vadd.f32 0.0, %v6051
      %v6053 = vpop.f32.mrb[0].mxu0
      %6054 = vmatprep.mubr.f32.mxu0 0.0
      %6055 = vmatmul.mubr.f32.gmra.mrb[0].mxu0 %v5787
      %v6056 = vpop.f32.mrb[0].mxu0
      %v6057 = vadd.f32 0.0, %v6056
      %v6058 = vpop.f32.mrb[0].mxu0
      %6059 = vmatprep.mubr.f32.mxu0 0.0
      %6060 = vmatmul.mubr.f32.gmra.mrb[0].mxu0 %v5790
      %v6061 = vpop.f32.mrb[0].mxu0
      %v6062 = vadd.f32 0.0, %v6061
      %v6063 = vpop.f32.mrb[0].mxu0
      %6064 = vmatprep.mubr.f32.mxu0 0.0
      %6065 = vmatmul.mubr.f32.gmra.mrb[0].mxu0 %v5793
      %v6066 = vpop.f32.mrb[0].mxu0
      %v6067 = vadd.f32 0.0, %v6066
      %v6068 = vpop.f32.mrb[0].mxu0
      %6069 = vmatprep.mubr.f32.mxu0 0.0
      %6070 = vmatmul.mubr.f32.gmra.mrb[0].mxu0 %v5796
      %v6071 = vpop.f32.mrb[0].mxu0
      %v6072 = vadd.f32 0.0, %v6071
      %v6073 = vpop.f32.mrb[0].mxu0
      %6074 = vmatprep.mubr.f32.mxu0 0.0
      %6075 = vmatmul.mubr.f32.gmra.mrb[0].mxu0 %v5799
      %v6076 = vpop.f32.mrb[0].mxu0
      %v6077 = vadd.f32 0.0, %v6076
      %v6078 = vpop.f32.mrb[0].mxu0
      %6079 = vmatprep.mubr.f32.mxu0 0.0
      %6080 = vmatmul.mubr.f32.gmra.mrb[0].mxu0 %v5802
      %v6081 = vpop.f32.mrb[0].mxu0
      %v6082 = vadd.f32 0.0, %v6081
      %v6083 = vpop.f32.mrb[0].mxu0
      %6084 = vmatprep.mubr.f32.mxu0 0.0
      %6085 = vmatmul.mubr.f32.gmra.mrb[0].mxu0 %v5805
      %v6086 = vpop.f32.mrb[0].mxu0
      %v6087 = vadd.f32 0.0, %v6086
      %v6088 = vpop.f32.mrb[0].mxu0
      %6089 = vmatprep.mubr.f32.mxu0 0.0
      %6090 = vmatmul.mubr.f32.gmra.mrb[0].mxu0 %v5808
      %v6091 = vpop.f32.mrb[0].mxu0
      %v6092 = vadd.f32 0.0, %v6091
      %v6093 = vpop.f32.mrb[0].mxu0
      %6094 = vmatprep.mubr.f32.mxu0 0.0
      %6095 = vmatmul.mubr.f32.gmra.mrb[0].mxu0 %v5811
      %v6096 = vpop.f32.mrb[0].mxu0
      %v6097 = vadd.f32 0.0, %v6096
      %v6098 = vpop.f32.mrb[0].mxu0
      %6099 = vmatprep.mubr.f32.mxu0 0.0
      %6100 = vmatmul.mubr.f32.gmra.mrb[0].mxu0 %v5814
      %v6101 = vpop.f32.mrb[0].mxu0
      %v6102 = vadd.f32 0.0, %v6101
      %v6103 = vpop.f32.mrb[0].mxu0
      %6104 = vmatprep.mubr.f32.mxu0 0.0
      %6105 = vmatmul.mubr.f32.gmra.mrb[0].mxu0 %v5817
      %v6106 = vpop.f32.mrb[0].mxu0
      %v6107 = vadd.f32 0.0, %v6106
      %v6108 = vpop.f32.mrb[0].mxu0
      %6109 = vmatprep.mubr.f32.mxu0 0.0
      %6110 = vmatmul.mubr.f32.gmra.mrb[0].mxu0 %v5820
      %v6111 = vpop.f32.mrb[0].mxu0
      %v6112 = vadd.f32 0.0, %v6111
      %v6113 = vpop.f32.mrb[0].mxu0
      %6114 = vmatprep.mubr.f32.mxu0 0.0
      %6115 = vmatmul.mubr.f32.gmra.mrb[0].mxu0 %v5823
      %v6116 = vpop.f32.mrb[0].mxu0
      %v6117 = vadd.f32 0.0, %v6116
      %v6118 = vpop.f32.mrb[0].mxu0
      %6119 = vmatprep.mubr.f32.mxu0 0.0
      %6120 = vmatmul.mubr.f32.gmra.mrb[0].mxu0 %v5826
      %v6121 = vpop.f32.mrb[0].mxu0
      %v6122 = vadd.f32 0.0, %v6121
      %v6123 = vpop.f32.mrb[0].mxu0
      %6124 = vmatprep.mubr.f32.mxu0 0.0
      %6125 = vmatmul.mubr.f32.gmra.mrb[0].mxu0 %v5829
      %v6126 = vpop.f32.mrb[0].mxu0
      %v6127 = vadd.f32 0.0, %v6126
      %v6128 = vpop.f32.mrb[0].mxu0
      %6129 = vmatprep.mubr.f32.mxu0 0.0
      %6130 = vmatmul.mubr.f32.gmra.mrb[0].mxu0 %v5832
      %v6131 = vpop.f32.mrb[0].mxu0
      %v6132 = vadd.f32 0.0, %v6131
      %v6133 = vpop.f32.mrb[0].mxu0
      %6134 = vmatprep.mubr.f32.mxu0 0.0
      %6135 = vmatmul.mubr.f32.gmra.mrb[0].mxu0 %v5835
      %v6136 = vpop.f32.mrb[0].mxu0
      %v6137 = vadd.f32 0.0, %v6136
      %v6138 = vpop.f32.mrb[0].mxu0
      %6139 = vmatprep.mubr.f32.mxu0 0.0
      %6140 = vmatmul.mubr.f32.gmra.mrb[0].mxu0 %v5838
      %v6141 = vpop.f32.mrb[0].mxu0
      %v6142 = vadd.f32 0.0, %v6141
      %v6143 = vpop.f32.mrb[0].mxu0
      %6144 = vdwg.mxu0
      %v6145 = vadd.f32 %v4830, %v5907
      %v6146 = vadd.f32 %v4835, %v5912
      %v6147 = vadd.f32 %v4840, %v5917
      %v6148 = vadd.f32 %v4845, %v5922
      %v6149 = vadd.f32 %v4850, %v5927
      %v6150 = vadd.f32 %v4855, %v5932
      %v6151 = vadd.f32 %v4860, %v5937
      %v6152 = vadd.f32 %v4865, %v5942
      %v6153 = vadd.f32 %v4870, %v5947
      %v6154 = vadd.f32 %v4875, %v5952
      %v6155 = vadd.f32 %v4880, %v5957
      %v6156 = vadd.f32 %v4885, %v5962
      %v6157 = vadd.f32 %v4890, %v5967
      %v6158 = vadd.f32 %v4895, %v5972
      %v6159 = vadd.f32 %v4900, %v5977
      %v6160 = vadd.f32 %v4905, %v5982
      %v6161 = vadd.f32 %v4910, %v5987
      %v6162 = vadd.f32 %v4915, %v5992
      %v6163 = vadd.f32 %v4920, %v5997
      %v6164 = vadd.f32 %v4925, %v6002
      %v6165 = vadd.f32 %v4930, %v6007
      %v6166 = vadd.f32 %v4935, %v6012
      %v6167 = vadd.f32 %v4940, %v6017
      %v6168 = vadd.f32 %v4945, %v6022
      %v6169 = vadd.f32 %v4950, %v6027
      %v6170 = vadd.f32 %v4955, %v6032
      %v6171 = vadd.f32 %v4960, %v6037
      %v6172 = vadd.f32 %v4965, %v6042
      %v6173 = vadd.f32 %v4970, %v6047
      %v6174 = vadd.f32 %v4975, %v6052
      %v6175 = vadd.f32 %v4980, %v6057
      %v6176 = vadd.f32 %v4985, %v6062
      %v6177 = vadd.f32 %v4990, %v6067
      %v6178 = vadd.f32 %v4995, %v6072
      %v6179 = vadd.f32 %v5000, %v6077
      %v6180 = vadd.f32 %v5005, %v6082
      %v6181 = vadd.f32 %v5010, %v6087
      %v6182 = vadd.f32 %v5015, %v6092
      %v6183 = vadd.f32 %v5020, %v6097
      %v6184 = vadd.f32 %v5025, %v6102
      %v6185 = vadd.f32 %v5030, %v6107
      %v6186 = vadd.f32 %v5035, %v6112
      %v6187 = vadd.f32 %v5040, %v6117
      %v6188 = vadd.f32 %v5045, %v6122
      %v6189 = vadd.f32 %v5050, %v6127
      %v6190 = vadd.f32 %v5055, %v6132
      %v6191 = vadd.f32 %v5060, %v6137
      %v6192 = vadd.f32 %v5065, %v6142
      %v6193 = vld [vmem:[%s6] sm:$0x1]
      %v6195 = vlaneseq
      %v6196 = vshrl.u32 %v6195, 7
      %v6197 = vsub.s32 0, %v6196
      %v6198 = vrot.slane %v6193, %v6197
      %v6200 = vmul.f32 %v6145, %v6198
      %v6201 = vmul.f32 %v6146, %v6198
      %v6202 = vmul.f32 %v6147, %v6198
      %v6203 = vmul.f32 %v6148, %v6198
      %v6204 = vmul.f32 %v6149, %v6198
      %v6205 = vmul.f32 %v6150, %v6198
      %v6206 = vmul.f32 %v6151, %v6198
      %v6207 = vmul.f32 %v6152, %v6198
      %v6208 = vmul.f32 %v6153, %v6198
      %v6209 = vmul.f32 %v6154, %v6198
      %v6210 = vmul.f32 %v6155, %v6198
      %v6211 = vmul.f32 %v6156, %v6198
      %v6212 = vmul.f32 %v6157, %v6198
      %v6213 = vmul.f32 %v6158, %v6198
      %v6214 = vmul.f32 %v6159, %v6198
      %v6215 = vmul.f32 %v6160, %v6198
      %v6216 = vmul.f32 %v6161, %v6198
      %v6217 = vmul.f32 %v6162, %v6198
      %v6218 = vmul.f32 %v6163, %v6198
      %v6219 = vmul.f32 %v6164, %v6198
      %v6220 = vmul.f32 %v6165, %v6198
      %v6221 = vmul.f32 %v6166, %v6198
      %v6222 = vmul.f32 %v6167, %v6198
      %v6223 = vmul.f32 %v6168, %v6198
      %v6224 = vmul.f32 %v6169, %v6198
      %v6225 = vmul.f32 %v6170, %v6198
      %v6226 = vmul.f32 %v6171, %v6198
      %v6227 = vmul.f32 %v6172, %v6198
      %v6228 = vmul.f32 %v6173, %v6198
      %v6229 = vmul.f32 %v6174, %v6198
      %v6230 = vmul.f32 %v6175, %v6198
      %v6231 = vmul.f32 %v6176, %v6198
      %v6232 = vmul.f32 %v6177, %v6198
      %v6233 = vmul.f32 %v6178, %v6198
      %v6234 = vmul.f32 %v6179, %v6198
      %v6235 = vmul.f32 %v6180, %v6198
      %v6236 = vmul.f32 %v6181, %v6198
      %v6237 = vmul.f32 %v6182, %v6198
      %v6238 = vmul.f32 %v6183, %v6198
      %v6239 = vmul.f32 %v6184, %v6198
      %v6240 = vmul.f32 %v6185, %v6198
      %v6241 = vmul.f32 %v6186, %v6198
      %v6242 = vmul.f32 %v6187, %v6198
      %v6243 = vmul.f32 %v6188, %v6198
      %v6244 = vmul.f32 %v6189, %v6198
      %v6245 = vmul.f32 %v6190, %v6198
      %v6246 = vmul.f32 %v6191, %v6198
      %v6247 = vmul.f32 %v6192, %v6198
      %v6248 = vld [vmem:[%s7] sm:$0x1]
      %v6250 = vlaneseq
      %v6251 = vshrl.u32 %v6250, 7
      %v6252 = vsub.s32 0, %v6251
      %v6253 = vrot.slane %v6248, %v6252
      %v6255 = vadd.f32 %v6200, %v6253
      %v6256 = vadd.f32 %v6201, %v6253
      %v6257 = vadd.f32 %v6202, %v6253
      %v6258 = vadd.f32 %v6203, %v6253
      %v6259 = vadd.f32 %v6204, %v6253
      %v6260 = vadd.f32 %v6205, %v6253
      %v6261 = vadd.f32 %v6206, %v6253
      %v6262 = vadd.f32 %v6207, %v6253
      %v6263 = vadd.f32 %v6208, %v6253
      %v6264 = vadd.f32 %v6209, %v6253
      %v6265 = vadd.f32 %v6210, %v6253
      %v6266 = vadd.f32 %v6211, %v6253
      %v6267 = vadd.f32 %v6212, %v6253
      %v6268 = vadd.f32 %v6213, %v6253
      %v6269 = vadd.f32 %v6214, %v6253
      %v6270 = vadd.f32 %v6215, %v6253
      %v6271 = vadd.f32 %v6216, %v6253
      %v6272 = vadd.f32 %v6217, %v6253
      %v6273 = vadd.f32 %v6218, %v6253
      %v6274 = vadd.f32 %v6219, %v6253
      %v6275 = vadd.f32 %v6220, %v6253
      %v6276 = vadd.f32 %v6221, %v6253
      %v6277 = vadd.f32 %v6222, %v6253
      %v6278 = vadd.f32 %v6223, %v6253
      %v6279 = vadd.f32 %v6224, %v6253
      %v6280 = vadd.f32 %v6225, %v6253
      %v6281 = vadd.f32 %v6226, %v6253
      %v6282 = vadd.f32 %v6227, %v6253
      %v6283 = vadd.f32 %v6228, %v6253
      %v6284 = vadd.f32 %v6229, %v6253
      %v6285 = vadd.f32 %v6230, %v6253
      %v6286 = vadd.f32 %v6231, %v6253
      %v6287 = vadd.f32 %v6232, %v6253
      %v6288 = vadd.f32 %v6233, %v6253
      %v6289 = vadd.f32 %v6234, %v6253
      %v6290 = vadd.f32 %v6235, %v6253
      %v6291 = vadd.f32 %v6236, %v6253
      %v6292 = vadd.f32 %v6237, %v6253
      %v6293 = vadd.f32 %v6238, %v6253
      %v6294 = vadd.f32 %v6239, %v6253
      %v6295 = vadd.f32 %v6240, %v6253
      %v6296 = vadd.f32 %v6241, %v6253
      %v6297 = vadd.f32 %v6242, %v6253
      %v6298 = vadd.f32 %v6243, %v6253
      %v6299 = vadd.f32 %v6244, %v6253
      %v6300 = vadd.f32 %v6245, %v6253
      %v6301 = vadd.f32 %v6246, %v6253
      %v6302 = vadd.f32 %v6247, %v6253
      %v6303 = vmax.f32 %v6255, 0.0
      %v6304 = vmax.f32 %v6256, 0.0
      %v6305 = vmax.f32 %v6257, 0.0
      %v6306 = vmax.f32 %v6258, 0.0
      %v6307 = vmax.f32 %v6259, 0.0
      %v6308 = vmax.f32 %v6260, 0.0
      %v6309 = vmax.f32 %v6261, 0.0
      %v6310 = vmax.f32 %v6262, 0.0
      %v6311 = vmax.f32 %v6263, 0.0
      %v6312 = vmax.f32 %v6264, 0.0
      %v6313 = vmax.f32 %v6265, 0.0
      %v6314 = vmax.f32 %v6266, 0.0
      %v6315 = vmax.f32 %v6267, 0.0
      %v6316 = vmax.f32 %v6268, 0.0
      %v6317 = vmax.f32 %v6269, 0.0
      %v6318 = vmax.f32 %v6270, 0.0
      %v6319 = vmax.f32 %v6271, 0.0
      %v6320 = vmax.f32 %v6272, 0.0
      %v6321 = vmax.f32 %v6273, 0.0
      %v6322 = vmax.f32 %v6274, 0.0
      %v6323 = vmax.f32 %v6275, 0.0
      %v6324 = vmax.f32 %v6276, 0.0
      %v6325 = vmax.f32 %v6277, 0.0
      %v6326 = vmax.f32 %v6278, 0.0
      %v6327 = vmax.f32 %v6279, 0.0
      %v6328 = vmax.f32 %v6280, 0.0
      %v6329 = vmax.f32 %v6281, 0.0
      %v6330 = vmax.f32 %v6282, 0.0
      %v6331 = vmax.f32 %v6283, 0.0
      %v6332 = vmax.f32 %v6284, 0.0
      %v6333 = vmax.f32 %v6285, 0.0
      %v6334 = vmax.f32 %v6286, 0.0
      %v6335 = vmax.f32 %v6287, 0.0
      %v6336 = vmax.f32 %v6288, 0.0
      %v6337 = vmax.f32 %v6289, 0.0
      %v6338 = vmax.f32 %v6290, 0.0
      %v6339 = vmax.f32 %v6291, 0.0
      %v6340 = vmax.f32 %v6292, 0.0
      %v6341 = vmax.f32 %v6293, 0.0
      %v6342 = vmax.f32 %v6294, 0.0
      %v6343 = vmax.f32 %v6295, 0.0
      %v6344 = vmax.f32 %v6296, 0.0
      %v6345 = vmax.f32 %v6297, 0.0
      %v6346 = vmax.f32 %v6298, 0.0
      %v6347 = vmax.f32 %v6299, 0.0
      %v6348 = vmax.f32 %v6300, 0.0
      %v6349 = vmax.f32 %v6301, 0.0
      %v6350 = vmax.f32 %v6302, 0.0
      %v6351 = vsel %vm3535, %v6303, 0.0
      %v6352 = vsel %vm3536, %v6304, 0.0
      %v6353 = vsel %vm3537, %v6305, 0.0
      %v6354 = vsel %vm3535, %v6306, 0.0
      %v6355 = vsel %vm3536, %v6307, 0.0
      %v6356 = vsel %vm3537, %v6308, 0.0
      %v6357 = vsel %vm3535, %v6309, 0.0
      %v6358 = vsel %vm3536, %v6310, 0.0
      %v6359 = vsel %vm3537, %v6311, 0.0
      %v6360 = vsel %vm3535, %v6312, 0.0
      %v6361 = vsel %vm3536, %v6313, 0.0
      %v6362 = vsel %vm3537, %v6314, 0.0
      %v6363 = vsel %vm3535, %v6315, 0.0
      %v6364 = vsel %vm3536, %v6316, 0.0
      %v6365 = vsel %vm3537, %v6317, 0.0
      %v6366 = vsel %vm3535, %v6318, 0.0
      %v6367 = vsel %vm3536, %v6319, 0.0
      %v6368 = vsel %vm3537, %v6320, 0.0
      %v6369 = vsel %vm3535, %v6321, 0.0
      %v6370 = vsel %vm3536, %v6322, 0.0
      %v6371 = vsel %vm3537, %v6323, 0.0
      %v6372 = vsel %vm3535, %v6324, 0.0
      %v6373 = vsel %vm3536, %v6325, 0.0
      %v6374 = vsel %vm3537, %v6326, 0.0
      %v6375 = vsel %vm3535, %v6327, 0.0
      %v6376 = vsel %vm3536, %v6328, 0.0
      %v6377 = vsel %vm3537, %v6329, 0.0
      %v6378 = vsel %vm3535, %v6330, 0.0
      %v6379 = vsel %vm3536, %v6331, 0.0
      %v6380 = vsel %vm3537, %v6332, 0.0
      %v6381 = vsel %vm3535, %v6333, 0.0
      %v6382 = vsel %vm3536, %v6334, 0.0
      %v6383 = vsel %vm3537, %v6335, 0.0
      %v6384 = vsel %vm3535, %v6336, 0.0
      %v6385 = vsel %vm3536, %v6337, 0.0
      %v6386 = vsel %vm3537, %v6338, 0.0
      %v6387 = vsel %vm3535, %v6339, 0.0
      %v6388 = vsel %vm3536, %v6340, 0.0
      %v6389 = vsel %vm3537, %v6341, 0.0
      %v6390 = vsel %vm3535, %v6342, 0.0
      %v6391 = vsel %vm3536, %v6343, 0.0
      %v6392 = vsel %vm3537, %v6344, 0.0
      %v6393 = vsel %vm3535, %v6345, 0.0
      %v6394 = vsel %vm3536, %v6346, 0.0
      %v6395 = vsel %vm3537, %v6347, 0.0
      %v6396 = vsel %vm3535, %v6348, 0.0
      %v6397 = vsel %vm3536, %v6349, 0.0
      %v6398 = vsel %vm3537, %v6350, 0.0
      %6399 = vst.msk [vmem:[%s325] sm:$0xff] %vm368, %v6351
      %6400 = vst.msk [vmem:[%s325 + $0x8] sm:$0xff] %vm368, %v6352
      %6401 = vst.msk [vmem:[%s325 + $0x10] sm:$0xff] %vm368, %v6353
      %6402 = vst.msk [vmem:[%s325 + $0x18] sm:$0xff] %vm368, %v6354
      %6403 = vst.msk [vmem:[%s325 + $0x20] sm:$0xff] %vm368, %v6355
      %6404 = vst.msk [vmem:[%s325 + $0x28] sm:$0xff] %vm368, %v6356
      %6405 = vst.msk [vmem:[%s325 + $0x30] sm:$0xff] %vm368, %v6357
      %6406 = vst.msk [vmem:[%s325 + $0x38] sm:$0xff] %vm368, %v6358
      %6407 = vst.msk [vmem:[%s325 + $0x40] sm:$0xff] %vm368, %v6359
      %6408 = vst.msk [vmem:[%s325 + $0x48] sm:$0xff] %vm368, %v6360
      %6409 = vst.msk [vmem:[%s325 + $0x50] sm:$0xff] %vm368, %v6361
      %6410 = vst.msk [vmem:[%s325 + $0x58] sm:$0xff] %vm368, %v6362
      %6411 = vst.msk [vmem:[%s325 + $0x60] sm:$0xff] %vm368, %v6363
      %6412 = vst.msk [vmem:[%s325 + $0x68] sm:$0xff] %vm368, %v6364
      %6413 = vst.msk [vmem:[%s325 + $0x70] sm:$0xff] %vm368, %v6365
      %6414 = vst.msk [vmem:[%s325 + $0x78] sm:$0xff] %vm368, %v6366
      %6415 = vst.msk [vmem:[%s325 + $0x80] sm:$0xff] %vm368, %v6367
      %6416 = vst.msk [vmem:[%s325 + $0x88] sm:$0xff] %vm368, %v6368
      %6417 = vst.msk [vmem:[%s325 + $0x90] sm:$0xff] %vm368, %v6369
      %6418 = vst.msk [vmem:[%s325 + $0x98] sm:$0xff] %vm368, %v6370
      %6419 = vst.msk [vmem:[%s325 + $0xa0] sm:$0xff] %vm368, %v6371
      %6420 = vst.msk [vmem:[%s325 + $0xa8] sm:$0xff] %vm368, %v6372
      %6421 = vst.msk [vmem:[%s325 + $0xb0] sm:$0xff] %vm368, %v6373
      %6422 = vst.msk [vmem:[%s325 + $0xb8] sm:$0xff] %vm368, %v6374
      %6423 = vst.msk [vmem:[%s325 + $0xc0] sm:$0xff] %vm368, %v6375
      %6424 = vst.msk [vmem:[%s325 + $0xc8] sm:$0xff] %vm368, %v6376
      %6425 = vst.msk [vmem:[%s325 + $0xd0] sm:$0xff] %vm368, %v6377
      %6426 = vst.msk [vmem:[%s325 + $0xd8] sm:$0xff] %vm368, %v6378
      %6427 = vst.msk [vmem:[%s325 + $0xe0] sm:$0xff] %vm368, %v6379
      %6428 = vst.msk [vmem:[%s325 + $0xe8] sm:$0xff] %vm368, %v6380
      %6429 = vst.msk [vmem:[%s325 + $0xf0] sm:$0xff] %vm368, %v6381
      %6430 = vst.msk [vmem:[%s325 + $0xf8] sm:$0xff] %vm368, %v6382
      %6431 = vst.msk [vmem:[%s325 + $0x100] sm:$0xff] %vm368, %v6383
      %6432 = vst.msk [vmem:[%s325 + $0x108] sm:$0xff] %vm368, %v6384
      %6433 = vst.msk [vmem:[%s325 + $0x110] sm:$0xff] %vm368, %v6385
      %6434 = vst.msk [vmem:[%s325 + $0x118] sm:$0xff] %vm368, %v6386
      %6435 = vst.msk [vmem:[%s325 + $0x120] sm:$0xff] %vm368, %v6387
      %6436 = vst.msk [vmem:[%s325 + $0x128] sm:$0xff] %vm368, %v6388
      %6437 = vst.msk [vmem:[%s325 + $0x130] sm:$0xff] %vm368, %v6389
      %6438 = vst.msk [vmem:[%s325 + $0x138] sm:$0xff] %vm368, %v6390
      %6439 = vst.msk [vmem:[%s325 + $0x140] sm:$0xff] %vm368, %v6391
      %6440 = vst.msk [vmem:[%s325 + $0x148] sm:$0xff] %vm368, %v6392
      %6441 = vst.msk [vmem:[%s325 + $0x150] sm:$0xff] %vm368, %v6393
      %6442 = vst.msk [vmem:[%s325 + $0x158] sm:$0xff] %vm368, %v6394
      %6443 = vst.msk [vmem:[%s325 + $0x160] sm:$0xff] %vm368, %v6395
      %6444 = vst.msk [vmem:[%s325 + $0x168] sm:$0xff] %vm368, %v6396
      %6445 = vst.msk [vmem:[%s325 + $0x170] sm:$0xff] %vm368, %v6397
      %6446 = vst.msk [vmem:[%s325 + $0x178] sm:$0xff] %vm368, %v6398
      %p6447 = scmp.lt.s32.totalorder %s19, 1
      %s6448 = scalar_select %p6447, %s19, 1
      %s6449 = smul.addr %s6448, 48
      %s6450 = smul.addr %s6449, 8
      %s6451 = scalar_lea.vmem %s8, %s6450
      // Predicated region
      $region53: #{tpu_custom_call.1} parent=51 // pred_check
        %p6452 = pneg %p215
      $region54: #{tpu_custom_call.1} parent=51 // pred_check_branch
        %6454 = sbr.rel (%p6452) target = $region56
      $region55: #{tpu_custom_call.1} parent=51 // pred_region
        _
      $region56: #{tpu_custom_call.1} parent=51 // pred_fallthru
        _
    $region52: #{tpu_custom_call.1} parent=5 // pred_fallthru
      _
    %p6455 = scmp.le.s32.totalorder 2, %s14
    // Predicated region
    $region57: #{tpu_custom_call.1} parent=5 // pred_check
      %p6456 = pneg %p6455
    $region58: #{tpu_custom_call.1} parent=5 // pred_check_branch
      %6458 = sbr.rel (%p6456) target = $region60
    $region59: #{tpu_custom_call.1} parent=5 // pred_region
      %s6459 = ssub.s32 %s14, 2
      // Predicated region
      $region61: #{tpu_custom_call.1} parent=59 // pred_check
        %p6460 = pneg %p221
      $region62: #{tpu_custom_call.1} parent=59 // pred_check_branch
        %6462 = sbr.rel (%p6460) target = $region64
      $region63: #{tpu_custom_call.1} parent=59 // pred_region
        %p6463 = scmp.lt.s32.totalorder %s20, 1
        %s6464 = scalar_select %p6463, %s20, 1
        %s6465 = smul.addr %s6464, 48
        %s6466 = smul.addr %s6465, 8
        %s6467 = scalar_lea.vmem %s8, %s6466
      $region64: #{tpu_custom_call.1} parent=59 // pred_fallthru
        _
    $region60: #{tpu_custom_call.1} parent=5 // pred_fallthru
      _
  $region6: #{tpu_custom_call.1} parent=0 // loop_footer
    %s18 = sadd.s32 1, %s14
  $region7: #{tpu_custom_call.1} parent=0 // loop_footer_branch
    %13 = sbr.rel target = $region3
  $region8: #{tpu_custom_call.1} parent=0 // loop_exit
    _

</llo_original>
